<compile_context>
chip_gen: v7x
topology: tpu7x:2x2x1
jax: 0.10.0
libtpu: 0.0.40
codegen_flags: <defaults>
</compile_context>

<pallas_src>
import functools

import jax
import jax.numpy as jnp
from jax.experimental import pallas as pl
from jax.experimental.pallas import tpu as pltpu

EXPANSION = 4
_LANE = 128
_VMEM_LIMIT = 48 * 1024 * 1024


def _rup(c, m=_LANE):
    return ((c + m - 1) // m) * m


def _pad2d(a, rows, cols):
    r, c = a.shape
    return jnp.pad(a, ((0, rows - r), (0, cols - c)))


# ---------------------------------------------------------------------------
# One-time parameter preprocessing (outside the hot path)
# ---------------------------------------------------------------------------
def prepare_params(p):
    """Transpose, zero-pad channel axes to 128 lanes, cast matmul operands to
    bf16, and stack the 3x3 weights as a single (9*Pp, Pp) im2col operand."""
    f32, bf16 = jnp.float32, jnp.bfloat16
    planes, in_planes = p["w1"].shape[0], p["w1"].shape[1]
    out_c = p["w3"].shape[0]
    Cp, Pp, Op = _rup(in_planes), _rup(planes), _rup(out_c)

    def bn_pair(g, b, width):
        return (jnp.pad(g, (0, width - g.shape[0])).reshape(1, width).astype(f32),
                jnp.pad(b, (0, width - b.shape[0])).reshape(1, width).astype(f32))

    prep = {}
    prep["w1"] = _pad2d(p["w1"][:, :, 0, 0].T, Cp, Pp).astype(bf16)        # (Cp, Pp)
    w2 = jnp.transpose(p["w2"], (2, 3, 1, 0)).reshape(9, planes, planes)   # (tap, cin, cout)
    w2 = jnp.pad(w2, ((0, 0), (0, Pp - planes), (0, Pp - planes)))
    prep["w2col"] = w2.reshape(9 * Pp, Pp).astype(bf16)                    # (9*Pp, Pp)
    prep["w3"] = _pad2d(p["w3"][:, :, 0, 0].T, Pp, Op).astype(bf16)        # (Pp, Op)
    prep["g1"], prep["b1"] = bn_pair(p["g1"], p["b1"], Pp)
    prep["g2"], prep["b2"] = bn_pair(p["g2"], p["b2"], Pp)
    prep["g3"], prep["b3"] = bn_pair(p["g3"], p["b3"], Op)
    if "ws" in p:
        prep["ws"] = _pad2d(p["ws"][:, :, 0, 0].T, Cp, Op).astype(bf16)    # (Cp, Op)
        prep["gs"], prep["bs"] = bn_pair(p["gs"], p["bs"], Op)
    return prep


# ---------------------------------------------------------------------------
# Stage 1: 1x1 conv (+ optional strided shortcut 1x1 conv), per-channel stats
# ---------------------------------------------------------------------------
def _make_stage1_kernel(has_projection, H, W, Ho, Wo, stride):
    def kernel(x_ref, w1_ref, *rest):
        if has_projection:
            ws_ref, y1_ref, s1_ref, q1_ref, ys_ref, ss_ref, qs_ref = rest
        else:
            y1_ref, s1_ref, q1_ref = rest
        n = pl.program_id(0)
        f32 = jnp.float32

        x_img = x_ref[0]                                     # (H, W, Cp) bf16
        Cp = x_img.shape[-1]
        x2 = x_img.reshape(H * W, Cp)
        y1 = jnp.dot(x2, w1_ref[...], preferred_element_type=f32)   # (H*W, Pp)

        @pl.when(n == 0)
        def _():
            s1_ref[...] = jnp.zeros_like(s1_ref)
            q1_ref[...] = jnp.zeros_like(q1_ref)
            if has_projection:
                ss_ref[...] = jnp.zeros_like(ss_ref)
                qs_ref[...] = jnp.zeros_like(qs_ref)

        s1_ref[...] += jnp.sum(y1, axis=0, keepdims=True)
        q1_ref[...] += jnp.sum(y1 * y1, axis=0, keepdims=True)
        y1_ref[0] = y1.reshape(H, W, y1.shape[-1])

        if has_projection:
            if stride == 1:
                xs = x2
            else:
                xr = x_img.reshape(Ho, stride, W, Cp)[:, 0]
                xs = xr.reshape(Ho, Wo, stride, Cp)[:, :, 0].reshape(Ho * Wo, Cp)
            ys = jnp.dot(xs, ws_ref[...], preferred_element_type=f32)  # (Ho*Wo, Op)
            ss_ref[...] += jnp.sum(ys, axis=0, keepdims=True)
            qs_ref[...] += jnp.sum(ys * ys, axis=0, keepdims=True)
            ys_ref[0] = ys.reshape(Ho, Wo, ys.shape[-1])

    return kernel


# ---------------------------------------------------------------------------
# Stage 2: BN1+ReLU fused into in-VMEM im2col + one K=9*Pp MXU matmul (+stats)
# ---------------------------------------------------------------------------
def _make_stage2_kernel(H, W, Ho, Wo, Pp, stride):
    def kernel(y1_ref, sc1_ref, sh1_ref, w2_ref, y2_ref, s2_ref, q2_ref,
               col_ref):
        n = pl.program_id(0)
        f32, bf16 = jnp.float32, jnp.bfloat16

        y1 = y1_ref[0]                                       # (H, W, Pp) f32
        o1 = jnp.maximum(y1 * sc1_ref[0] + sh1_ref[0], 0.0)  # BN1 fold + ReLU

        # Build the im2col slab: zero (handles the pad=1 border), then nine
        # shifted static-slice writes.  No gathers, no selection matmuls.
        col_ref[...] = jnp.zeros_like(col_ref)
        for dh in range(3):
            h0, h1 = max(0, 1 - dh), min(H, H + 1 - dh)
            for dw in range(3):
                w0, w1 = max(0, 1 - dw), min(W, W + 1 - dw)
                t = dh * 3 + dw
                col_ref[h0:h1, w0:w1, t * Pp:(t + 1) * Pp] = (
                    o1[h0 + dh - 1:h1 + dh - 1, w0 + dw - 1:w1 + dw - 1, :])

        col = col_ref[...].reshape(H * W, 9 * Pp).astype(bf16)
        y2f = jnp.dot(col, w2_ref[...], preferred_element_type=f32)  # (H*W, Pp)

        if stride != 1:
            # Full-resolution conv then static subsample (even H, W required).
            y2f = y2f.reshape(H, W, Pp)
            y2f = y2f.reshape(Ho, stride, W, Pp)[:, 0]
            y2f = y2f.reshape(Ho, Wo, stride, Pp)[:, :, 0]
            y2f = y2f.reshape(Ho * Wo, Pp)

        @pl.when(n == 0)
        def _():
            s2_ref[...] = jnp.zeros_like(s2_ref)
            q2_ref[...] = jnp.zeros_like(q2_ref)

        s2_ref[...] += jnp.sum(y2f, axis=0, keepdims=True)
        q2_ref[...] += jnp.sum(y2f * y2f, axis=0, keepdims=True)
        y2_ref[0] = y2f.reshape(Ho, Wo, Pp)

    return kernel


# ---------------------------------------------------------------------------
# Stage 3: BN2+ReLU fused with the 1x1 conv3 (+ stats for BN3)
# ---------------------------------------------------------------------------
def _make_stage3_kernel(Ho, Wo, Pp, Op):
    def kernel(y2_ref, sc2_ref, sh2_ref, w3_ref, y3_ref, s3_ref, q3_ref):
        n = pl.program_id(0)
        f32, bf16 = jnp.float32, jnp.bfloat16

        y2 = y2_ref[0]                                       # (Ho, Wo, Pp) f32
        o2 = jnp.maximum(y2 * sc2_ref[0] + sh2_ref[0], 0.0).astype(bf16)
        o2 = o2.reshape(Ho * Wo, Pp)
        y3 = jnp.dot(o2, w3_ref[...], preferred_element_type=f32)   # (Ho*Wo, Op)

        @pl.when(n == 0)
        def _():
            s3_ref[...] = jnp.zeros_like(s3_ref)
            q3_ref[...] = jnp.zeros_like(q3_ref)

        s3_ref[...] += jnp.sum(y3, axis=0, keepdims=True)
        q3_ref[...] += jnp.sum(y3 * y3, axis=0, keepdims=True)
        y3_ref[0] = y3.reshape(Ho, Wo, Op)

    return kernel


# ---------------------------------------------------------------------------
# Stage 4: BN3 + shortcut-BN (or identity) + residual add + ReLU (elementwise)
# ---------------------------------------------------------------------------
def _make_stage4_kernel():
    def kernel(y3_ref, sc_ref, sc3_ref, sh3_ref, scs_ref, shs_ref, o_ref):
        f32 = jnp.float32
        y3 = y3_ref[0].astype(f32)
        sc = sc_ref[0].astype(f32)
        out = (y3 * sc3_ref[0] + sh3_ref[0]) + (sc * scs_ref[0] + shs_ref[0])
        o_ref[0] = jnp.maximum(out, 0.0).astype(o_ref.dtype)
    return kernel


# ---------------------------------------------------------------------------
# Forward pass (PyTorch-facing NCHW interface)
# ---------------------------------------------------------------------------
@functools.partial(jax.jit, static_argnames=("stride", "out_c", "eps"))
def bottleneck_forward(x_nchw, prep, *, stride, out_c, eps=1e-5):
    f32, bf16 = jnp.float32, jnp.bfloat16
    N, Cin, H, W = x_nchw.shape
    Cp, Pp = prep["w1"].shape
    Op = prep["w3"].shape[1]
    has_projection = "ws" in prep
    if stride != 1:
        assert H % stride == 0 and W % stride == 0, "even spatial dims required"
    Ho = (H + 2 - 3) // stride + 1
    Wo = (W + 2 - 3) // stride + 1
    M1, M2 = N * H * W, N * Ho * Wo

    # NCHW -> NHWC, channel pad to 128 lanes, bf16 matmul operand (one XLA op).
    x4 = jnp.transpose(x_nchw, (0, 2, 3, 1))
    x4 = jnp.pad(x4, ((0, 0), (0, 0), (0, 0), (0, Cp - Cin))).astype(bf16)

    acc_params = pltpu.CompilerParams(
        dimension_semantics=("arbitrary",), vmem_limit_bytes=_VMEM_LIMIT)
    par_params = pltpu.CompilerParams(
        dimension_semantics=("parallel",), vmem_limit_bytes=_VMEM_LIMIT)

    def img_spec(h, w, c):
        return pl.BlockSpec((1, h, w, c), lambda n: (n, 0, 0, 0))

    def const_spec(a):
        nd = a.ndim
        return pl.BlockSpec(a.shape, lambda n, _nd=nd: (0,) * _nd)

    def acc_spec(c):
        return pl.BlockSpec((1, c), lambda n: (0, 0))

    def bn_fold(s, q, count, g, b):
        mean = s / count
        var = jnp.maximum(q / count - mean * mean, 0.0)
        scale = g * jax.lax.rsqrt(var + eps)
        shift = b - mean * scale
        return scale, shift

    # ---------------- stage 1 -------------------------------------------------
    st1 = _make_stage1_kernel(has_projection, H, W, Ho, Wo, stride)
    if has_projection:
        out_shape1 = (jax.ShapeDtypeStruct((N, H, W, Pp), f32),
                      jax.ShapeDtypeStruct((1, Pp), f32),
                      jax.ShapeDtypeStruct((1, Pp), f32),
                      jax.ShapeDtypeStruct((N, Ho, Wo, Op), f32),
                      jax.ShapeDtypeStruct((1, Op), f32),
                      jax.ShapeDtypeStruct((1, Op), f32))
        out_specs1 = (img_spec(H, W, Pp), acc_spec(Pp), acc_spec(Pp),
                      img_spec(Ho, Wo, Op), acc_spec(Op), acc_spec(Op))
        in1 = (x4, prep["w1"], prep["ws"])
    else:
        out_shape1 = (jax.ShapeDtypeStruct((N, H, W, Pp), f32),
                      jax.ShapeDtypeStruct((1, Pp), f32),
                      jax.ShapeDtypeStruct((1, Pp), f32))
        out_specs1 = (img_spec(H, W, Pp), acc_spec(Pp), acc_spec(Pp))
        in1 = (x4, prep["w1"])

    res1 = pl.pallas_call(
        st1, out_shape=out_shape1, grid=(N,),
        in_specs=[img_spec(H, W, Cp)] + [const_spec(a) for a in in1[1:]],
        out_specs=out_specs1, compiler_params=acc_params)(*in1)
    if has_projection:
        y1, s1, q1, ys, ss, qs = res1
    else:
        y1, s1, q1 = res1
    sc1, sh1 = bn_fold(s1, q1, M1, prep["g1"], prep["b1"])

    # ---------------- stage 2 -------------------------------------------------
    st2 = _make_stage2_kernel(H, W, Ho, Wo, Pp, stride)
    y2, s2, q2 = pl.pallas_call(
        st2,
        out_shape=(jax.ShapeDtypeStruct((N, Ho, Wo, Pp), f32),
                   jax.ShapeDtypeStruct((1, Pp), f32),
                   jax.ShapeDtypeStruct((1, Pp), f32)),
        grid=(N,),
        in_specs=[img_spec(H, W, Pp), const_spec(sc1), const_spec(sh1),
                  const_spec(prep["w2col"])],
        out_specs=(img_spec(Ho, Wo, Pp), acc_spec(Pp), acc_spec(Pp)),
        scratch_shapes=[pltpu.VMEM((H, W, 9 * Pp), f32)],
        compiler_params=acc_params,
    )(y1, sc1, sh1, prep["w2col"])
    sc2, sh2 = bn_fold(s2, q2, M2, prep["g2"], prep["b2"])

    # ---------------- stage 3 -------------------------------------------------
    st3 = _make_stage3_kernel(Ho, Wo, Pp, Op)
    y3, s3, q3 = pl.pallas_call(
        st3,
        out_shape=(jax.ShapeDtypeStruct((N, Ho, Wo, Op), f32),
                   jax.ShapeDtypeStruct((1, Op), f32),
                   jax.ShapeDtypeStruct((1, Op), f32)),
        grid=(N,),
        in_specs=[img_spec(Ho, Wo, Pp), const_spec(sc2), const_spec(sh2),
                  const_spec(prep["w3"])],
        out_specs=(img_spec(Ho, Wo, Op), acc_spec(Op), acc_spec(Op)),
        compiler_params=acc_params,
    )(y2, sc2, sh2, prep["w3"])
    sc3, sh3 = bn_fold(s3, q3, M2, prep["g3"], prep["b3"])

    # ---------------- stage 4 -------------------------------------------------
    if has_projection:
        scs, shs = bn_fold(ss, qs, M2, prep["gs"], prep["bs"])
        shortcut = ys
    else:
        scs = jnp.ones((1, Op), f32)
        shs = jnp.zeros((1, Op), f32)
        shortcut = x4  # identity: Cp == Op, Ho == H, Wo == W; padded lanes are 0

    st4 = _make_stage4_kernel()
    out4 = pl.pallas_call(
        st4,
        out_shape=jax.ShapeDtypeStruct((N, Ho, Wo, Op), bf16),
        grid=(N,),
        in_specs=[img_spec(Ho, Wo, Op), img_spec(Ho, Wo, Op),
                  const_spec(sc3), const_spec(sh3),
                  const_spec(scs), const_spec(shs)],
        out_specs=img_spec(Ho, Wo, Op),
        compiler_params=par_params,
    )(y3, shortcut, sc3, sh3, scs, shs)

    out = out4[:, :, :, :out_c].astype(f32)
    return jnp.transpose(out, (0, 3, 1, 2))                  # NHWC -> NCHW


# ---------------------------------------------------------------------------
# Pure-JAX (XLA conv) reference for a numerical sanity check
# ---------------------------------------------------------------------------
def _ref_bn(y, g, b, eps=1e-5):
    mean = y.mean(axis=(0, 2, 3), keepdims=True)
    var = jnp.square(y - mean).mean(axis=(0, 2, 3), keepdims=True)
    return g[None, :, None, None] * (y - mean) / jnp.sqrt(var + eps) + b[None, :, None, None]


def _ref_forward(x, p, stride):
    conv = lambda a, w, s, pad: jax.lax.conv_general_dilated(
        a, w, (s, s), pad, dimension_numbers=("NCHW", "OIHW", "NCHW"))
    o = jax.nn.relu(_ref_bn(conv(x, p["w1"], 1, "VALID"), p["g1"], p["b1"]))
    o = jax.nn.relu(_ref_bn(conv(o, p["w2"], stride, ((1, 1), (1, 1))), p["g2"], p["b2"]))
    o = _ref_bn(conv(o, p["w3"], 1, "VALID"), p["g3"], p["b3"])
    if "ws" in p:
        sc = _ref_bn(conv(x, p["ws"], stride, "VALID"), p["gs"], p["bs"])
    else:
        sc = x
    return jax.nn.relu(o + sc)


def _make_params(key, in_planes, planes, stride):
    out_c = EXPANSION * planes
    f32 = jnp.float32
    ks = jax.random.split(key, 12)

    def bn(i, c):
        return (1.0 + 0.1 * jax.random.normal(ks[i], (c,), f32),
                0.05 * jax.random.normal(ks[i + 1], (c,), f32))

    p = {"w1": jax.random.normal(ks[0], (planes, in_planes, 1, 1), f32) * 0.1,
         "w2": jax.random.normal(ks[1], (planes, planes, 3, 3), f32) * 0.1,
         "w3": jax.random.normal(ks[2], (out_c, planes, 1, 1), f32) * 0.1}
    p["g1"], p["b1"] = bn(3, planes)
    p["g2"], p["b2"] = bn(5, planes)
    p["g3"], p["b3"] = bn(7, out_c)
    if stride != 1 or in_planes != out_c:
        p["ws"] = jax.random.normal(ks[9], (out_c, in_planes, 1, 1), f32) * 0.1
        p["gs"], p["bs"] = bn(10, out_c)
    return p


# ---------------------------------------------------------------------------
if __name__ == "__main__":
    key = jax.random.PRNGKey(0)

    def run_case(case_key, batch, in_planes, planes, stride, H, W):
        kp, kx = jax.random.split(case_key)
        p = _make_params(kp, in_planes, planes, stride)
        x = jax.random.normal(kx, (batch, in_planes, H, W), jnp.float32)
        prep = prepare_params(p)
        out = jax.block_until_ready(
            bottleneck_forward(x, prep, stride=stride, out_c=EXPANSION * planes))
        ref = jax.block_until_ready(_ref_forward(x, p, stride))
        assert out.shape == ref.shape, (out.shape, ref.shape)
        err = float(jnp.max(jnp.abs(out - ref)))
        # bf16 MXU operands + bf16 final output (f32 accumulation / BN stats).
        assert jnp.allclose(out, ref, atol=5e-2, rtol=5e-2), err
        return err

    k1, k2 = jax.random.split(key)
    # projection shortcut: stride 2, channel expansion 16 -> 32
    run_case(k1, batch=2, in_planes=16, planes=8, stride=2, H=8, W=8)
    # identity shortcut: stride 1, in_planes == expansion * planes
    run_case(k2, batch=2, in_planes=32, planes=8, stride=1, H=8, W=8)
    print("KERNEL_OK")
</pallas_src>

<mosaic_0001>
module attributes {stable_mosaic.version = 11 : i64} {
  func.func @kernel(%arg0: i32, %arg1: memref<1x8x8x128xbf16, #tpu.memory_space<vmem>>, %arg2: memref<128x128xbf16, #tpu.memory_space<vmem>>, %arg3: memref<128x128xbf16, #tpu.memory_space<vmem>>, %arg4: memref<1x8x8x128xf32, #tpu.memory_space<vmem>>, %arg5: memref<1x128xf32, #tpu.memory_space<vmem>>, %arg6: memref<1x128xf32, #tpu.memory_space<vmem>>, %arg7: memref<1x4x4x128xf32, #tpu.memory_space<vmem>>, %arg8: memref<1x128xf32, #tpu.memory_space<vmem>>, %arg9: memref<1x128xf32, #tpu.memory_space<vmem>>) attributes {dimension_semantics = [#tpu.dimension_semantics<arbitrary>], iteration_bounds = array<i64: 2>, scalar_prefetch = 0 : i64, scratch_operands = 0 : i64, tpu.core_type = #tpu.core_type<tc>, window_params = [{transform_indices = @transform_0, window_bounds = array<i64: 1, 8, 8, 128>}, {pipeline_mode = #tpu.pipeline_mode<synchronous>, transform_indices = @transform_1, window_bounds = array<i64: 128, 128>}, {pipeline_mode = #tpu.pipeline_mode<synchronous>, transform_indices = @transform_2, window_bounds = array<i64: 128, 128>}, {transform_indices = @transform_3, window_bounds = array<i64: 1, 8, 8, 128>}, {pipeline_mode = #tpu.pipeline_mode<synchronous>, transform_indices = @transform_4, window_bounds = array<i64: 1, 128>}, {pipeline_mode = #tpu.pipeline_mode<synchronous>, transform_indices = @transform_5, window_bounds = array<i64: 1, 128>}, {transform_indices = @transform_6, window_bounds = array<i64: 1, 4, 4, 128>}, {pipeline_mode = #tpu.pipeline_mode<synchronous>, transform_indices = @transform_7, window_bounds = array<i64: 1, 128>}, {pipeline_mode = #tpu.pipeline_mode<synchronous>, transform_indices = @transform_8, window_bounds = array<i64: 1, 128>}]} {
    %c0 = arith.constant 0 : index
    %c0_0 = arith.constant 0 : index
    %c0_1 = arith.constant 0 : index
    %c0_2 = arith.constant 0 : index
    %0 = vector.load %arg1[%c0, %c0_0, %c0_1, %c0_2] : memref<1x8x8x128xbf16, #tpu.memory_space<vmem>>, vector<1x8x8x128xbf16>
    %1 = vector.shape_cast %0 : vector<1x8x8x128xbf16> to vector<8x8x128xbf16>
    %2 = vector.shape_cast %1 : vector<8x8x128xbf16> to vector<64x128xbf16>
    %c0_3 = arith.constant 0 : index
    %c0_4 = arith.constant 0 : index
    %3 = vector.load %arg2[%c0_3, %c0_4] : memref<128x128xbf16, #tpu.memory_space<vmem>>, vector<128x128xbf16>
    %cst = arith.constant dense<0.000000e+00> : vector<64x128xf32>
    %4 = tpu.matmul %2, %3, %cst {dimension_numbers = #tpu.dot_dimension_numbers<[1], [0], [0], [1], [0, 0, 1, 1], [], []>} : vector<64x128xbf16>, vector<128x128xbf16>, vector<64x128xf32> -> vector<64x128xf32>
    %c0_i32 = arith.constant 0 : i32
    %5 = arith.cmpi eq, %arg0, %c0_i32 : i32
    %6 = arith.extui %5 : i1 to i32
    %c0_i32_5 = arith.constant 0 : i32
    %7 = arith.cmpi ne, %6, %c0_i32_5 : i32
    scf.if %7 {
      %cst_37 = arith.constant 0.000000e+00 : f32
      %47 = vector.broadcast %cst_37 : f32 to vector<1x128xf32>
      %c0_38 = arith.constant 0 : index
      %c0_39 = arith.constant 0 : index
      %48 = vector.load %arg5[%c0_38, %c0_39] : memref<1x128xf32, #tpu.memory_space<vmem>>, vector<1x128xf32>
      tpu.vector_store %arg5[%c0_38, %c0_39], %47 {strides = array<i32>} : memref<1x128xf32, #tpu.memory_space<vmem>>, vector<1x128xf32>,
      %cst_40 = arith.constant 0.000000e+00 : f32
      %49 = vector.broadcast %cst_40 : f32 to vector<1x128xf32>
      %c0_41 = arith.constant 0 : index
      %c0_42 = arith.constant 0 : index
      %50 = vector.load %arg6[%c0_41, %c0_42] : memref<1x128xf32, #tpu.memory_space<vmem>>, vector<1x128xf32>
      tpu.vector_store %arg6[%c0_41, %c0_42], %49 {strides = array<i32>} : memref<1x128xf32, #tpu.memory_space<vmem>>, vector<1x128xf32>,
      %cst_43 = arith.constant 0.000000e+00 : f32
      %51 = vector.broadcast %cst_43 : f32 to vector<1x128xf32>
      %c0_44 = arith.constant 0 : index
      %c0_45 = arith.constant 0 : index
      %52 = vector.load %arg8[%c0_44, %c0_45] : memref<1x128xf32, #tpu.memory_space<vmem>>, vector<1x128xf32>
      tpu.vector_store %arg8[%c0_44, %c0_45], %51 {strides = array<i32>} : memref<1x128xf32, #tpu.memory_space<vmem>>, vector<1x128xf32>,
      %cst_46 = arith.constant 0.000000e+00 : f32
      %53 = vector.broadcast %cst_46 : f32 to vector<1x128xf32>
      %c0_47 = arith.constant 0 : index
      %c0_48 = arith.constant 0 : index
      %54 = vector.load %arg9[%c0_47, %c0_48] : memref<1x128xf32, #tpu.memory_space<vmem>>, vector<1x128xf32>
      tpu.vector_store %arg9[%c0_47, %c0_48], %53 {strides = array<i32>} : memref<1x128xf32, #tpu.memory_space<vmem>>, vector<1x128xf32>,
    } else {
    }
    %c0_6 = arith.constant 0 : index
    %c0_7 = arith.constant 0 : index
    %8 = vector.load %arg5[%c0_6, %c0_7] : memref<1x128xf32, #tpu.memory_space<vmem>>, vector<1x128xf32>
    %cst_8 = arith.constant dense<0.000000e+00> : vector<128xf32>
    %9 = vector.multi_reduction <add>, %4, %cst_8 [0] : vector<64x128xf32> to vector<128xf32>
    %10 = vector.shape_cast %9 : vector<128xf32> to vector<1x128xf32>
    %11 = arith.addf %8, %10 : vector<1x128xf32>
    %c0_9 = arith.constant 0 : index
    %c0_10 = arith.constant 0 : index
    %12 = vector.load %arg5[%c0_9, %c0_10] : memref<1x128xf32, #tpu.memory_space<vmem>>, vector<1x128xf32>
    tpu.vector_store %arg5[%c0_9, %c0_10], %11 {strides = array<i32>} : memref<1x128xf32, #tpu.memory_space<vmem>>, vector<1x128xf32>,
    %c0_11 = arith.constant 0 : index
    %c0_12 = arith.constant 0 : index
    %13 = vector.load %arg6[%c0_11, %c0_12] : memref<1x128xf32, #tpu.memory_space<vmem>>, vector<1x128xf32>
    %14 = arith.mulf %4, %4 : vector<64x128xf32>
    %cst_13 = arith.constant dense<0.000000e+00> : vector<128xf32>
    %15 = vector.multi_reduction <add>, %14, %cst_13 [0] : vector<64x128xf32> to vector<128xf32>
    %16 = vector.shape_cast %15 : vector<128xf32> to vector<1x128xf32>
    %17 = arith.addf %13, %16 : vector<1x128xf32>
    %c0_14 = arith.constant 0 : index
    %c0_15 = arith.constant 0 : index
    %18 = vector.load %arg6[%c0_14, %c0_15] : memref<1x128xf32, #tpu.memory_space<vmem>>, vector<1x128xf32>
    tpu.vector_store %arg6[%c0_14, %c0_15], %17 {strides = array<i32>} : memref<1x128xf32, #tpu.memory_space<vmem>>, vector<1x128xf32>,
    %19 = vector.shape_cast %4 : vector<64x128xf32> to vector<8x8x128xf32>
    %c0_16 = arith.constant 0 : index
    %c0_17 = arith.constant 0 : index
    %c0_18 = arith.constant 0 : index
    %c0_19 = arith.constant 0 : index
    %20 = vector.load %arg4[%c0_16, %c0_17, %c0_18, %c0_19] : memref<1x8x8x128xf32, #tpu.memory_space<vmem>>, vector<1x8x8x128xf32>
    %21 = vector.shape_cast %20 : vector<1x8x8x128xf32> to vector<8x8x128xf32>
    %22 = vector.shape_cast %19 : vector<8x8x128xf32> to vector<1x8x8x128xf32>
    tpu.vector_store %arg4[%c0_16, %c0_17, %c0_18, %c0_19], %22 {strides = array<i32>} : memref<1x8x8x128xf32, #tpu.memory_space<vmem>>, vector<1x8x8x128xf32>,
    %23 = vector.shape_cast %1 : vector<8x8x128xbf16> to vector<4x2x8x128xbf16>
    %24 = vector.extract_strided_slice %23 {offsets = [0, 0, 0, 0], sizes = [4, 1, 8, 128], strides = [1, 1, 1, 1]} : vector<4x2x8x128xbf16> to vector<4x1x8x128xbf16>
    %25 = vector.shape_cast %24 : vector<4x1x8x128xbf16> to vector<4x8x128xbf16>
    %26 = vector.shape_cast %25 : vector<4x8x128xbf16> to vector<4x4x2x128xbf16>
    %27 = vector.extract_strided_slice %26 {offsets = [0, 0, 0, 0], sizes = [4, 4, 1, 128], strides = [1, 1, 1, 1]} : vector<4x4x2x128xbf16> to vector<4x4x1x128xbf16>
    %28 = vector.shape_cast %27 : vector<4x4x1x128xbf16> to vector<4x4x128xbf16>
    %29 = vector.shape_cast %28 : vector<4x4x128xbf16> to vector<16x128xbf16>
    %c0_20 = arith.constant 0 : index
    %c0_21 = arith.constant 0 : index
    %30 = vector.load %arg3[%c0_20, %c0_21] : memref<128x128xbf16, #tpu.memory_space<vmem>>, vector<128x128xbf16>
    %cst_22 = arith.constant dense<0.000000e+00> : vector<16x128xf32>
    %31 = tpu.matmul %29, %30, %cst_22 {dimension_numbers = #tpu.dot_dimension_numbers<[1], [0], [0], [1], [0, 0, 1, 1], [], []>} : vector<16x128xbf16>, vector<128x128xbf16>, vector<16x128xf32> -> vector<16x128xf32>
    %c0_23 = arith.constant 0 : index
    %c0_24 = arith.constant 0 : index
    %32 = vector.load %arg8[%c0_23, %c0_24] : memref<1x128xf32, #tpu.memory_space<vmem>>, vector<1x128xf32>
    %cst_25 = arith.constant dense<0.000000e+00> : vector<128xf32>
    %33 = vector.multi_reduction <add>, %31, %cst_25 [0] : vector<16x128xf32> to vector<128xf32>
    %34 = vector.shape_cast %33 : vector<128xf32> to vector<1x128xf32>
    %35 = arith.addf %32, %34 : vector<1x128xf32>
    %c0_26 = arith.constant 0 : index
    %c0_27 = arith.constant 0 : index
    %36 = vector.load %arg8[%c0_26, %c0_27] : memref<1x128xf32, #tpu.memory_space<vmem>>, vector<1x128xf32>
    tpu.vector_store %arg8[%c0_26, %c0_27], %35 {strides = array<i32>} : memref<1x128xf32, #tpu.memory_space<vmem>>, vector<1x128xf32>,
    %c0_28 = arith.constant 0 : index
    %c0_29 = arith.constant 0 : index
    %37 = vector.load %arg9[%c0_28, %c0_29] : memref<1x128xf32, #tpu.memory_space<vmem>>, vector<1x128xf32>
    %38 = arith.mulf %31, %31 : vector<16x128xf32>
    %cst_30 = arith.constant dense<0.000000e+00> : vector<128xf32>
    %39 = vector.multi_reduction <add>, %38, %cst_30 [0] : vector<16x128xf32> to vector<128xf32>
    %40 = vector.shape_cast %39 : vector<128xf32> to vector<1x128xf32>
    %41 = arith.addf %37, %40 : vector<1x128xf32>
    %c0_31 = arith.constant 0 : index
    %c0_32 = arith.constant 0 : index
    %42 = vector.load %arg9[%c0_31, %c0_32] : memref<1x128xf32, #tpu.memory_space<vmem>>, vector<1x128xf32>
    tpu.vector_store %arg9[%c0_31, %c0_32], %41 {strides = array<i32>} : memref<1x128xf32, #tpu.memory_space<vmem>>, vector<1x128xf32>,
    %43 = vector.shape_cast %31 : vector<16x128xf32> to vector<4x4x128xf32>
    %c0_33 = arith.constant 0 : index
    %c0_34 = arith.constant 0 : index
    %c0_35 = arith.constant 0 : index
    %c0_36 = arith.constant 0 : index
    %44 = vector.load %arg7[%c0_33, %c0_34, %c0_35, %c0_36] : memref<1x4x4x128xf32, #tpu.memory_space<vmem>>, vector<1x4x4x128xf32>
    %45 = vector.shape_cast %44 : vector<1x4x4x128xf32> to vector<4x4x128xf32>
    %46 = vector.shape_cast %43 : vector<4x4x128xf32> to vector<1x4x4x128xf32>
    tpu.vector_store %arg7[%c0_33, %c0_34, %c0_35, %c0_36], %46 {strides = array<i32>} : memref<1x4x4x128xf32, #tpu.memory_space<vmem>>, vector<1x4x4x128xf32>,
    return
  }
  func.func @transform_0(%arg0: i32) -> (i32, i32, i32, i32) {
    %c0_i32 = arith.constant 0 : i32
    %c0_i32_0 = arith.constant 0 : i32
    %c0_i32_1 = arith.constant 0 : i32
    %c0_i32_2 = arith.constant 0 : i32
    return %arg0, %c0_i32, %c0_i32_0, %c0_i32_1 : i32, i32, i32, i32
  }
  func.func @transform_1(%arg0: i32) -> (i32, i32) {
    %c0_i32 = arith.constant 0 : i32
    %c0_i32_0 = arith.constant 0 : i32
    %c0_i32_1 = arith.constant 0 : i32
    return %c0_i32, %c0_i32_0 : i32, i32
  }
  func.func @transform_2(%arg0: i32) -> (i32, i32) {
    %c0_i32 = arith.constant 0 : i32
    %c0_i32_0 = arith.constant 0 : i32
    %c0_i32_1 = arith.constant 0 : i32
    return %c0_i32, %c0_i32_0 : i32, i32
  }
  func.func @transform_3(%arg0: i32) -> (i32, i32, i32, i32) {
    %c0_i32 = arith.constant 0 : i32
    %c0_i32_0 = arith.constant 0 : i32
    %c0_i32_1 = arith.constant 0 : i32
    %c0_i32_2 = arith.constant 0 : i32
    return %arg0, %c0_i32, %c0_i32_0, %c0_i32_1 : i32, i32, i32, i32
  }
  func.func @transform_4(%arg0: i32) -> (i32, i32) {
    %c0_i32 = arith.constant 0 : i32
    %c0_i32_0 = arith.constant 0 : i32
    %c0_i32_1 = arith.constant 0 : i32
    return %c0_i32, %c0_i32_0 : i32, i32
  }
  func.func @transform_5(%arg0: i32) -> (i32, i32) {
    %c0_i32 = arith.constant 0 : i32
    %c0_i32_0 = arith.constant 0 : i32
    %c0_i32_1 = arith.constant 0 : i32
    return %c0_i32, %c0_i32_0 : i32, i32
  }
  func.func @transform_6(%arg0: i32) -> (i32, i32, i32, i32) {
    %c0_i32 = arith.constant 0 : i32
    %c0_i32_0 = arith.constant 0 : i32
    %c0_i32_1 = arith.constant 0 : i32
    %c0_i32_2 = arith.constant 0 : i32
    return %arg0, %c0_i32, %c0_i32_0, %c0_i32_1 : i32, i32, i32, i32
  }
  func.func @transform_7(%arg0: i32) -> (i32, i32) {
    %c0_i32 = arith.constant 0 : i32
    %c0_i32_0 = arith.constant 0 : i32
    %c0_i32_1 = arith.constant 0 : i32
    return %c0_i32, %c0_i32_0 : i32, i32
  }
  func.func @transform_8(%arg0: i32) -> (i32, i32) {
    %c0_i32 = arith.constant 0 : i32
    %c0_i32_0 = arith.constant 0 : i32
    %c0_i32_1 = arith.constant 0 : i32
    return %c0_i32, %c0_i32_0 : i32, i32
  }
}

module attributes {stable_mosaic.version = 11 : i64} {
  func.func @kernel(%arg0: i32, %arg1: memref<1x8x8x128xf32, #tpu.memory_space<vmem>>, %arg2: memref<1x128xf32, #tpu.memory_space<vmem>>, %arg3: memref<1x128xf32, #tpu.memory_space<vmem>>, %arg4: memref<1152x128xbf16, #tpu.memory_space<vmem>>, %arg5: memref<1x4x4x128xf32, #tpu.memory_space<vmem>>, %arg6: memref<1x128xf32, #tpu.memory_space<vmem>>, %arg7: memref<1x128xf32, #tpu.memory_space<vmem>>, %arg8: memref<8x8x1152xf32, #tpu.memory_space<vmem>>) attributes {dimension_semantics = [#tpu.dimension_semantics<arbitrary>], iteration_bounds = array<i64: 2>, scalar_prefetch = 0 : i64, scratch_operands = 1 : i64, tpu.core_type = #tpu.core_type<tc>, window_params = [{transform_indices = @transform_0, window_bounds = array<i64: 1, 8, 8, 128>}, {pipeline_mode = #tpu.pipeline_mode<synchronous>, transform_indices = @transform_1, window_bounds = array<i64: 1, 128>}, {pipeline_mode = #tpu.pipeline_mode<synchronous>, transform_indices = @transform_2, window_bounds = array<i64: 1, 128>}, {pipeline_mode = #tpu.pipeline_mode<synchronous>, transform_indices = @transform_3, window_bounds = array<i64: 1152, 128>}, {transform_indices = @transform_4, window_bounds = array<i64: 1, 4, 4, 128>}, {pipeline_mode = #tpu.pipeline_mode<synchronous>, transform_indices = @transform_5, window_bounds = array<i64: 1, 128>}, {pipeline_mode = #tpu.pipeline_mode<synchronous>, transform_indices = @transform_6, window_bounds = array<i64: 1, 128>}]} {
    %c0 = arith.constant 0 : index
    %c0_0 = arith.constant 0 : index
    %c0_1 = arith.constant 0 : index
    %c0_2 = arith.constant 0 : index
    %0 = vector.load %arg1[%c0, %c0_0, %c0_1, %c0_2] : memref<1x8x8x128xf32, #tpu.memory_space<vmem>>, vector<1x8x8x128xf32>
    %1 = vector.shape_cast %0 : vector<1x8x8x128xf32> to vector<8x8x128xf32>
    %c0_3 = arith.constant 0 : index
    %c0_4 = arith.constant 0 : index
    %2 = vector.load %arg2[%c0_3, %c0_4] : memref<1x128xf32, #tpu.memory_space<vmem>>, vector<1x128xf32>
    %3 = vector.shape_cast %2 : vector<1x128xf32> to vector<128xf32>
    %4 = vector.shape_cast %3 : vector<128xf32> to vector<1x1x128xf32>
    %5 = vector.broadcast %4 : vector<1x1x128xf32> to vector<8x8x128xf32>
    %6 = arith.mulf %1, %5 : vector<8x8x128xf32>
    %c0_5 = arith.constant 0 : index
    %c0_6 = arith.constant 0 : index
    %7 = vector.load %arg3[%c0_5, %c0_6] : memref<1x128xf32, #tpu.memory_space<vmem>>, vector<1x128xf32>
    %8 = vector.shape_cast %7 : vector<1x128xf32> to vector<128xf32>
    %9 = vector.shape_cast %8 : vector<128xf32> to vector<1x1x128xf32>
    %10 = vector.broadcast %9 : vector<1x1x128xf32> to vector<8x8x128xf32>
    %11 = arith.addf %6, %10 : vector<8x8x128xf32>
    %cst = arith.constant 0.000000e+00 : f32
    %12 = vector.broadcast %cst : f32 to vector<8x8x128xf32>
    %13 = arith.maximumf %11, %12 : vector<8x8x128xf32>
    %cst_7 = arith.constant 0.000000e+00 : f32
    %14 = vector.broadcast %cst_7 : f32 to vector<8x8x1152xf32>
    %c0_8 = arith.constant 0 : index
    %c0_9 = arith.constant 0 : index
    %c0_10 = arith.constant 0 : index
    %15 = vector.load %arg8[%c0_8, %c0_9, %c0_10] : memref<8x8x1152xf32, #tpu.memory_space<vmem>>, vector<8x8x1152xf32>
    tpu.vector_store %arg8[%c0_8, %c0_9, %c0_10], %14 {strides = array<i32>} : memref<8x8x1152xf32, #tpu.memory_space<vmem>>, vector<8x8x1152xf32>,
    %16 = vector.extract_strided_slice %13 {offsets = [0, 0, 0], sizes = [7, 7, 128], strides = [1, 1, 1]} : vector<8x8x128xf32> to vector<7x7x128xf32>
    %c1 = arith.constant 1 : index
    %c1_11 = arith.constant 1 : index
    %c0_12 = arith.constant 0 : index
    %17 = vector.load %arg8[%c1, %c1_11, %c0_12] : memref<8x8x1152xf32, #tpu.memory_space<vmem>>, vector<7x7x128xf32>
    tpu.vector_store %arg8[%c1, %c1_11, %c0_12], %16 {strides = array<i32>} : memref<8x8x1152xf32, #tpu.memory_space<vmem>>, vector<7x7x128xf32>,
    %18 = vector.extract_strided_slice %13 {offsets = [0, 0, 0], sizes = [7, 8, 128], strides = [1, 1, 1]} : vector<8x8x128xf32> to vector<7x8x128xf32>
    %c1_13 = arith.constant 1 : index
    %c0_14 = arith.constant 0 : index
    %c128 = arith.constant 128 : index
    %19 = vector.load %arg8[%c1_13, %c0_14, %c128] : memref<8x8x1152xf32, #tpu.memory_space<vmem>>, vector<7x8x128xf32>
    tpu.vector_store %arg8[%c1_13, %c0_14, %c128], %18 {strides = array<i32>} : memref<8x8x1152xf32, #tpu.memory_space<vmem>>, vector<7x8x128xf32>,
    %20 = vector.extract_strided_slice %13 {offsets = [0, 1, 0], sizes = [7, 7, 128], strides = [1, 1, 1]} : vector<8x8x128xf32> to vector<7x7x128xf32>
    %c1_15 = arith.constant 1 : index
    %c0_16 = arith.constant 0 : index
    %c256 = arith.constant 256 : index
    %21 = vector.load %arg8[%c1_15, %c0_16, %c256] : memref<8x8x1152xf32, #tpu.memory_space<vmem>>, vector<7x7x128xf32>
    tpu.vector_store %arg8[%c1_15, %c0_16, %c256], %20 {strides = array<i32>} : memref<8x8x1152xf32, #tpu.memory_space<vmem>>, vector<7x7x128xf32>,
    %22 = vector.extract_strided_slice %13 {offsets = [0, 0, 0], sizes = [8, 7, 128], strides = [1, 1, 1]} : vector<8x8x128xf32> to vector<8x7x128xf32>
    %c0_17 = arith.constant 0 : index
    %c1_18 = arith.constant 1 : index
    %c384 = arith.constant 384 : index
    %23 = vector.load %arg8[%c0_17, %c1_18, %c384] : memref<8x8x1152xf32, #tpu.memory_space<vmem>>, vector<8x7x128xf32>
    tpu.vector_store %arg8[%c0_17, %c1_18, %c384], %22 {strides = array<i32>} : memref<8x8x1152xf32, #tpu.memory_space<vmem>>, vector<8x7x128xf32>,
    %c0_19 = arith.constant 0 : index
    %c0_20 = arith.constant 0 : index
    %c512 = arith.constant 512 : index
    %24 = vector.load %arg8[%c0_19, %c0_20, %c512] : memref<8x8x1152xf32, #tpu.memory_space<vmem>>, vector<8x8x128xf32>
    tpu.vector_store %arg8[%c0_19, %c0_20, %c512], %13 {strides = array<i32>} : memref<8x8x1152xf32, #tpu.memory_space<vmem>>, vector<8x8x128xf32>,
    %25 = vector.extract_strided_slice %13 {offsets = [0, 1, 0], sizes = [8, 7, 128], strides = [1, 1, 1]} : vector<8x8x128xf32> to vector<8x7x128xf32>
    %c0_21 = arith.constant 0 : index
    %c0_22 = arith.constant 0 : index
    %c640 = arith.constant 640 : index
    %26 = vector.load %arg8[%c0_21, %c0_22, %c640] : memref<8x8x1152xf32, #tpu.memory_space<vmem>>, vector<8x7x128xf32>
    tpu.vector_store %arg8[%c0_21, %c0_22, %c640], %25 {strides = array<i32>} : memref<8x8x1152xf32, #tpu.memory_space<vmem>>, vector<8x7x128xf32>,
    %27 = vector.extract_strided_slice %13 {offsets = [1, 0, 0], sizes = [7, 7, 128], strides = [1, 1, 1]} : vector<8x8x128xf32> to vector<7x7x128xf32>
    %c0_23 = arith.constant 0 : index
    %c1_24 = arith.constant 1 : index
    %c768 = arith.constant 768 : index
    %28 = vector.load %arg8[%c0_23, %c1_24, %c768] : memref<8x8x1152xf32, #tpu.memory_space<vmem>>, vector<7x7x128xf32>
    tpu.vector_store %arg8[%c0_23, %c1_24, %c768], %27 {strides = array<i32>} : memref<8x8x1152xf32, #tpu.memory_space<vmem>>, vector<7x7x128xf32>,
    %29 = vector.extract_strided_slice %13 {offsets = [1, 0, 0], sizes = [7, 8, 128], strides = [1, 1, 1]} : vector<8x8x128xf32> to vector<7x8x128xf32>
    %c0_25 = arith.constant 0 : index
    %c0_26 = arith.constant 0 : index
    %c896 = arith.constant 896 : index
    %30 = vector.load %arg8[%c0_25, %c0_26, %c896] : memref<8x8x1152xf32, #tpu.memory_space<vmem>>, vector<7x8x128xf32>
    tpu.vector_store %arg8[%c0_25, %c0_26, %c896], %29 {strides = array<i32>} : memref<8x8x1152xf32, #tpu.memory_space<vmem>>, vector<7x8x128xf32>,
    %31 = vector.extract_strided_slice %13 {offsets = [1, 1, 0], sizes = [7, 7, 128], strides = [1, 1, 1]} : vector<8x8x128xf32> to vector<7x7x128xf32>
    %c0_27 = arith.constant 0 : index
    %c0_28 = arith.constant 0 : index
    %c1024 = arith.constant 1024 : index
    %32 = vector.load %arg8[%c0_27, %c0_28, %c1024] : memref<8x8x1152xf32, #tpu.memory_space<vmem>>, vector<7x7x128xf32>
    tpu.vector_store %arg8[%c0_27, %c0_28, %c1024], %31 {strides = array<i32>} : memref<8x8x1152xf32, #tpu.memory_space<vmem>>, vector<7x7x128xf32>,
    %c0_29 = arith.constant 0 : index
    %c0_30 = arith.constant 0 : index
    %c0_31 = arith.constant 0 : index
    %33 = vector.load %arg8[%c0_29, %c0_30, %c0_31] : memref<8x8x1152xf32, #tpu.memory_space<vmem>>, vector<8x8x1152xf32>
    %34 = vector.shape_cast %33 : vector<8x8x1152xf32> to vector<64x1152xf32>
    %35 = arith.truncf %34 : vector<64x1152xf32> to vector<64x1152xbf16>
    %c0_32 = arith.constant 0 : index
    %c0_33 = arith.constant 0 : index
    %36 = vector.load %arg4[%c0_32, %c0_33] : memref<1152x128xbf16, #tpu.memory_space<vmem>>, vector<1152x128xbf16>
    %cst_34 = arith.constant dense<0.000000e+00> : vector<64x128xf32>
    %37 = tpu.matmul %35, %36, %cst_34 {dimension_numbers = #tpu.dot_dimension_numbers<[1], [0], [0], [1], [0, 0, 1, 1], [], []>} : vector<64x1152xbf16>, vector<1152x128xbf16>, vector<64x128xf32> -> vector<64x128xf32>
    %38 = vector.shape_cast %37 : vector<64x128xf32> to vector<8x8x128xf32>
    %39 = vector.shape_cast %38 : vector<8x8x128xf32> to vector<4x2x8x128xf32>
    %40 = vector.extract_strided_slice %39 {offsets = [0, 0, 0, 0], sizes = [4, 1, 8, 128], strides = [1, 1, 1, 1]} : vector<4x2x8x128xf32> to vector<4x1x8x128xf32>
    %41 = vector.shape_cast %40 : vector<4x1x8x128xf32> to vector<4x8x128xf32>
    %42 = vector.shape_cast %41 : vector<4x8x128xf32> to vector<4x4x2x128xf32>
    %43 = vector.extract_strided_slice %42 {offsets = [0, 0, 0, 0], sizes = [4, 4, 1, 128], strides = [1, 1, 1, 1]} : vector<4x4x2x128xf32> to vector<4x4x1x128xf32>
    %44 = vector.shape_cast %43 : vector<4x4x1x128xf32> to vector<4x4x128xf32>
    %45 = vector.shape_cast %44 : vector<4x4x128xf32> to vector<16x128xf32>
    %c0_i32 = arith.constant 0 : i32
    %46 = arith.cmpi eq, %arg0, %c0_i32 : i32
    %47 = arith.extui %46 : i1 to i32
    %c0_i32_35 = arith.constant 0 : i32
    %48 = arith.cmpi ne, %47, %c0_i32_35 : i32
    scf.if %48 {
      %cst_50 = arith.constant 0.000000e+00 : f32
      %64 = vector.broadcast %cst_50 : f32 to vector<1x128xf32>
      %c0_51 = arith.constant 0 : index
      %c0_52 = arith.constant 0 : index
      %65 = vector.load %arg6[%c0_51, %c0_52] : memref<1x128xf32, #tpu.memory_space<vmem>>, vector<1x128xf32>
      tpu.vector_store %arg6[%c0_51, %c0_52], %64 {strides = array<i32>} : memref<1x128xf32, #tpu.memory_space<vmem>>, vector<1x128xf32>,
      %cst_53 = arith.constant 0.000000e+00 : f32
      %66 = vector.broadcast %cst_53 : f32 to vector<1x128xf32>
      %c0_54 = arith.constant 0 : index
      %c0_55 = arith.constant 0 : index
      %67 = vector.load %arg7[%c0_54, %c0_55] : memref<1x128xf32, #tpu.memory_space<vmem>>, vector<1x128xf32>
      tpu.vector_store %arg7[%c0_54, %c0_55], %66 {strides = array<i32>} : memref<1x128xf32, #tpu.memory_space<vmem>>, vector<1x128xf32>,
    } else {
    }
    %c0_36 = arith.constant 0 : index
    %c0_37 = arith.constant 0 : index
    %49 = vector.load %arg6[%c0_36, %c0_37] : memref<1x128xf32, #tpu.memory_space<vmem>>, vector<1x128xf32>
    %cst_38 = arith.constant dense<0.000000e+00> : vector<128xf32>
    %50 = vector.multi_reduction <add>, %45, %cst_38 [0] : vector<16x128xf32> to vector<128xf32>
    %51 = vector.shape_cast %50 : vector<128xf32> to vector<1x128xf32>
    %52 = arith.addf %49, %51 : vector<1x128xf32>
    %c0_39 = arith.constant 0 : index
    %c0_40 = arith.constant 0 : index
    %53 = vector.load %arg6[%c0_39, %c0_40] : memref<1x128xf32, #tpu.memory_space<vmem>>, vector<1x128xf32>
    tpu.vector_store %arg6[%c0_39, %c0_40], %52 {strides = array<i32>} : memref<1x128xf32, #tpu.memory_space<vmem>>, vector<1x128xf32>,
    %c0_41 = arith.constant 0 : index
    %c0_42 = arith.constant 0 : index
    %54 = vector.load %arg7[%c0_41, %c0_42] : memref<1x128xf32, #tpu.memory_space<vmem>>, vector<1x128xf32>
    %55 = arith.mulf %45, %45 : vector<16x128xf32>
    %cst_43 = arith.constant dense<0.000000e+00> : vector<128xf32>
    %56 = vector.multi_reduction <add>, %55, %cst_43 [0] : vector<16x128xf32> to vector<128xf32>
    %57 = vector.shape_cast %56 : vector<128xf32> to vector<1x128xf32>
    %58 = arith.addf %54, %57 : vector<1x128xf32>
    %c0_44 = arith.constant 0 : index
    %c0_45 = arith.constant 0 : index
    %59 = vector.load %arg7[%c0_44, %c0_45] : memref<1x128xf32, #tpu.memory_space<vmem>>, vector<1x128xf32>
    tpu.vector_store %arg7[%c0_44, %c0_45], %58 {strides = array<i32>} : memref<1x128xf32, #tpu.memory_space<vmem>>, vector<1x128xf32>,
    %60 = vector.shape_cast %45 : vector<16x128xf32> to vector<4x4x128xf32>
    %c0_46 = arith.constant 0 : index
    %c0_47 = arith.constant 0 : index
    %c0_48 = arith.constant 0 : index
    %c0_49 = arith.constant 0 : index
    %61 = vector.load %arg5[%c0_46, %c0_47, %c0_48, %c0_49] : memref<1x4x4x128xf32, #tpu.memory_space<vmem>>, vector<1x4x4x128xf32>
    %62 = vector.shape_cast %61 : vector<1x4x4x128xf32> to vector<4x4x128xf32>
    %63 = vector.shape_cast %60 : vector<4x4x128xf32> to vector<1x4x4x128xf32>
    tpu.vector_store %arg5[%c0_46, %c0_47, %c0_48, %c0_49], %63 {strides = array<i32>} : memref<1x4x4x128xf32, #tpu.memory_space<vmem>>, vector<1x4x4x128xf32>,
    return
  }
  func.func @transform_0(%arg0: i32) -> (i32, i32, i32, i32) {
    %c0_i32 = arith.constant 0 : i32
    %c0_i32_0 = arith.constant 0 : i32
    %c0_i32_1 = arith.constant 0 : i32
    %c0_i32_2 = arith.constant 0 : i32
    return %arg0, %c0_i32, %c0_i32_0, %c0_i32_1 : i32, i32, i32, i32
  }
  func.func @transform_1(%arg0: i32) -> (i32, i32) {
    %c0_i32 = arith.constant 0 : i32
    %c0_i32_0 = arith.constant 0 : i32
    %c0_i32_1 = arith.constant 0 : i32
    return %c0_i32, %c0_i32_0 : i32, i32
  }
  func.func @transform_2(%arg0: i32) -> (i32, i32) {
    %c0_i32 = arith.constant 0 : i32
    %c0_i32_0 = arith.constant 0 : i32
    %c0_i32_1 = arith.constant 0 : i32
    return %c0_i32, %c0_i32_0 : i32, i32
  }
  func.func @transform_3(%arg0: i32) -> (i32, i32) {
    %c0_i32 = arith.constant 0 : i32
    %c0_i32_0 = arith.constant 0 : i32
    %c0_i32_1 = arith.constant 0 : i32
    return %c0_i32, %c0_i32_0 : i32, i32
  }
  func.func @transform_4(%arg0: i32) -> (i32, i32, i32, i32) {
    %c0_i32 = arith.constant 0 : i32
    %c0_i32_0 = arith.constant 0 : i32
    %c0_i32_1 = arith.constant 0 : i32
    %c0_i32_2 = arith.constant 0 : i32
    return %arg0, %c0_i32, %c0_i32_0, %c0_i32_1 : i32, i32, i32, i32
  }
  func.func @transform_5(%arg0: i32) -> (i32, i32) {
    %c0_i32 = arith.constant 0 : i32
    %c0_i32_0 = arith.constant 0 : i32
    %c0_i32_1 = arith.constant 0 : i32
    return %c0_i32, %c0_i32_0 : i32, i32
  }
  func.func @transform_6(%arg0: i32) -> (i32, i32) {
    %c0_i32 = arith.constant 0 : i32
    %c0_i32_0 = arith.constant 0 : i32
    %c0_i32_1 = arith.constant 0 : i32
    return %c0_i32, %c0_i32_0 : i32, i32
  }
}

module attributes {stable_mosaic.version = 11 : i64} {
  func.func @kernel(%arg0: i32, %arg1: memref<1x4x4x128xf32, #tpu.memory_space<vmem>>, %arg2: memref<1x128xf32, #tpu.memory_space<vmem>>, %arg3: memref<1x128xf32, #tpu.memory_space<vmem>>, %arg4: memref<128x128xbf16, #tpu.memory_space<vmem>>, %arg5: memref<1x4x4x128xf32, #tpu.memory_space<vmem>>, %arg6: memref<1x128xf32, #tpu.memory_space<vmem>>, %arg7: memref<1x128xf32, #tpu.memory_space<vmem>>) attributes {dimension_semantics = [#tpu.dimension_semantics<arbitrary>], iteration_bounds = array<i64: 2>, scalar_prefetch = 0 : i64, scratch_operands = 0 : i64, tpu.core_type = #tpu.core_type<tc>, window_params = [{transform_indices = @transform_0, window_bounds = array<i64: 1, 4, 4, 128>}, {pipeline_mode = #tpu.pipeline_mode<synchronous>, transform_indices = @transform_1, window_bounds = array<i64: 1, 128>}, {pipeline_mode = #tpu.pipeline_mode<synchronous>, transform_indices = @transform_2, window_bounds = array<i64: 1, 128>}, {pipeline_mode = #tpu.pipeline_mode<synchronous>, transform_indices = @transform_3, window_bounds = array<i64: 128, 128>}, {transform_indices = @transform_4, window_bounds = array<i64: 1, 4, 4, 128>}, {pipeline_mode = #tpu.pipeline_mode<synchronous>, transform_indices = @transform_5, window_bounds = array<i64: 1, 128>}, {pipeline_mode = #tpu.pipeline_mode<synchronous>, transform_indices = @transform_6, window_bounds = array<i64: 1, 128>}]} {
    %c0 = arith.constant 0 : index
    %c0_0 = arith.constant 0 : index
    %c0_1 = arith.constant 0 : index
    %c0_2 = arith.constant 0 : index
    %0 = vector.load %arg1[%c0, %c0_0, %c0_1, %c0_2] : memref<1x4x4x128xf32, #tpu.memory_space<vmem>>, vector<1x4x4x128xf32>
    %1 = vector.shape_cast %0 : vector<1x4x4x128xf32> to vector<4x4x128xf32>
    %c0_3 = arith.constant 0 : index
    %c0_4 = arith.constant 0 : index
    %2 = vector.load %arg2[%c0_3, %c0_4] : memref<1x128xf32, #tpu.memory_space<vmem>>, vector<1x128xf32>
    %3 = vector.shape_cast %2 : vector<1x128xf32> to vector<128xf32>
    %4 = vector.shape_cast %3 : vector<128xf32> to vector<1x1x128xf32>
    %5 = vector.broadcast %4 : vector<1x1x128xf32> to vector<4x4x128xf32>
    %6 = arith.mulf %1, %5 : vector<4x4x128xf32>
    %c0_5 = arith.constant 0 : index
    %c0_6 = arith.constant 0 : index
    %7 = vector.load %arg3[%c0_5, %c0_6] : memref<1x128xf32, #tpu.memory_space<vmem>>, vector<1x128xf32>
    %8 = vector.shape_cast %7 : vector<1x128xf32> to vector<128xf32>
    %9 = vector.shape_cast %8 : vector<128xf32> to vector<1x1x128xf32>
    %10 = vector.broadcast %9 : vector<1x1x128xf32> to vector<4x4x128xf32>
    %11 = arith.addf %6, %10 : vector<4x4x128xf32>
    %cst = arith.constant 0.000000e+00 : f32
    %12 = vector.broadcast %cst : f32 to vector<4x4x128xf32>
    %13 = arith.maximumf %11, %12 : vector<4x4x128xf32>
    %14 = arith.truncf %13 : vector<4x4x128xf32> to vector<4x4x128xbf16>
    %15 = vector.shape_cast %14 : vector<4x4x128xbf16> to vector<16x128xbf16>
    %c0_7 = arith.constant 0 : index
    %c0_8 = arith.constant 0 : index
    %16 = vector.load %arg4[%c0_7, %c0_8] : memref<128x128xbf16, #tpu.memory_space<vmem>>, vector<128x128xbf16>
    %cst_9 = arith.constant dense<0.000000e+00> : vector<16x128xf32>
    %17 = tpu.matmul %15, %16, %cst_9 {dimension_numbers = #tpu.dot_dimension_numbers<[1], [0], [0], [1], [0, 0, 1, 1], [], []>} : vector<16x128xbf16>, vector<128x128xbf16>, vector<16x128xf32> -> vector<16x128xf32>
    %c0_i32 = arith.constant 0 : i32
    %18 = arith.cmpi eq, %arg0, %c0_i32 : i32
    %19 = arith.extui %18 : i1 to i32
    %c0_i32_10 = arith.constant 0 : i32
    %20 = arith.cmpi ne, %19, %c0_i32_10 : i32
    scf.if %20 {
      %cst_25 = arith.constant 0.000000e+00 : f32
      %36 = vector.broadcast %cst_25 : f32 to vector<1x128xf32>
      %c0_26 = arith.constant 0 : index
      %c0_27 = arith.constant 0 : index
      %37 = vector.load %arg6[%c0_26, %c0_27] : memref<1x128xf32, #tpu.memory_space<vmem>>, vector<1x128xf32>
      tpu.vector_store %arg6[%c0_26, %c0_27], %36 {strides = array<i32>} : memref<1x128xf32, #tpu.memory_space<vmem>>, vector<1x128xf32>,
      %cst_28 = arith.constant 0.000000e+00 : f32
      %38 = vector.broadcast %cst_28 : f32 to vector<1x128xf32>
      %c0_29 = arith.constant 0 : index
      %c0_30 = arith.constant 0 : index
      %39 = vector.load %arg7[%c0_29, %c0_30] : memref<1x128xf32, #tpu.memory_space<vmem>>, vector<1x128xf32>
      tpu.vector_store %arg7[%c0_29, %c0_30], %38 {strides = array<i32>} : memref<1x128xf32, #tpu.memory_space<vmem>>, vector<1x128xf32>,
    } else {
    }
    %c0_11 = arith.constant 0 : index
    %c0_12 = arith.constant 0 : index
    %21 = vector.load %arg6[%c0_11, %c0_12] : memref<1x128xf32, #tpu.memory_space<vmem>>, vector<1x128xf32>
    %cst_13 = arith.constant dense<0.000000e+00> : vector<128xf32>
    %22 = vector.multi_reduction <add>, %17, %cst_13 [0] : vector<16x128xf32> to vector<128xf32>
    %23 = vector.shape_cast %22 : vector<128xf32> to vector<1x128xf32>
    %24 = arith.addf %21, %23 : vector<1x128xf32>
    %c0_14 = arith.constant 0 : index
    %c0_15 = arith.constant 0 : index
    %25 = vector.load %arg6[%c0_14, %c0_15] : memref<1x128xf32, #tpu.memory_space<vmem>>, vector<1x128xf32>
    tpu.vector_store %arg6[%c0_14, %c0_15], %24 {strides = array<i32>} : memref<1x128xf32, #tpu.memory_space<vmem>>, vector<1x128xf32>,
    %c0_16 = arith.constant 0 : index
    %c0_17 = arith.constant 0 : index
    %26 = vector.load %arg7[%c0_16, %c0_17] : memref<1x128xf32, #tpu.memory_space<vmem>>, vector<1x128xf32>
    %27 = arith.mulf %17, %17 : vector<16x128xf32>
    %cst_18 = arith.constant dense<0.000000e+00> : vector<128xf32>
    %28 = vector.multi_reduction <add>, %27, %cst_18 [0] : vector<16x128xf32> to vector<128xf32>
    %29 = vector.shape_cast %28 : vector<128xf32> to vector<1x128xf32>
    %30 = arith.addf %26, %29 : vector<1x128xf32>
    %c0_19 = arith.constant 0 : index
    %c0_20 = arith.constant 0 : index
    %31 = vector.load %arg7[%c0_19, %c0_20] : memref<1x128xf32, #tpu.memory_space<vmem>>, vector<1x128xf32>
    tpu.vector_store %arg7[%c0_19, %c0_20], %30 {strides = array<i32>} : memref<1x128xf32, #tpu.memory_space<vmem>>, vector<1x128xf32>,
    %32 = vector.shape_cast %17 : vector<16x128xf32> to vector<4x4x128xf32>
    %c0_21 = arith.constant 0 : index
    %c0_22 = arith.constant 0 : index
    %c0_23 = arith.constant 0 : index
    %c0_24 = arith.constant 0 : index
    %33 = vector.load %arg5[%c0_21, %c0_22, %c0_23, %c0_24] : memref<1x4x4x128xf32, #tpu.memory_space<vmem>>, vector<1x4x4x128xf32>
    %34 = vector.shape_cast %33 : vector<1x4x4x128xf32> to vector<4x4x128xf32>
    %35 = vector.shape_cast %32 : vector<4x4x128xf32> to vector<1x4x4x128xf32>
    tpu.vector_store %arg5[%c0_21, %c0_22, %c0_23, %c0_24], %35 {strides = array<i32>} : memref<1x4x4x128xf32, #tpu.memory_space<vmem>>, vector<1x4x4x128xf32>,
    return
  }
  func.func @transform_0(%arg0: i32) -> (i32, i32, i32, i32) {
    %c0_i32 = arith.constant 0 : i32
    %c0_i32_0 = arith.constant 0 : i32
    %c0_i32_1 = arith.constant 0 : i32
    %c0_i32_2 = arith.constant 0 : i32
    return %arg0, %c0_i32, %c0_i32_0, %c0_i32_1 : i32, i32, i32, i32
  }
  func.func @transform_1(%arg0: i32) -> (i32, i32) {
    %c0_i32 = arith.constant 0 : i32
    %c0_i32_0 = arith.constant 0 : i32
    %c0_i32_1 = arith.constant 0 : i32
    return %c0_i32, %c0_i32_0 : i32, i32
  }
  func.func @transform_2(%arg0: i32) -> (i32, i32) {
    %c0_i32 = arith.constant 0 : i32
    %c0_i32_0 = arith.constant 0 : i32
    %c0_i32_1 = arith.constant 0 : i32
    return %c0_i32, %c0_i32_0 : i32, i32
  }
  func.func @transform_3(%arg0: i32) -> (i32, i32) {
    %c0_i32 = arith.constant 0 : i32
    %c0_i32_0 = arith.constant 0 : i32
    %c0_i32_1 = arith.constant 0 : i32
    return %c0_i32, %c0_i32_0 : i32, i32
  }
  func.func @transform_4(%arg0: i32) -> (i32, i32, i32, i32) {
    %c0_i32 = arith.constant 0 : i32
    %c0_i32_0 = arith.constant 0 : i32
    %c0_i32_1 = arith.constant 0 : i32
    %c0_i32_2 = arith.constant 0 : i32
    return %arg0, %c0_i32, %c0_i32_0, %c0_i32_1 : i32, i32, i32, i32
  }
  func.func @transform_5(%arg0: i32) -> (i32, i32) {
    %c0_i32 = arith.constant 0 : i32
    %c0_i32_0 = arith.constant 0 : i32
    %c0_i32_1 = arith.constant 0 : i32
    return %c0_i32, %c0_i32_0 : i32, i32
  }
  func.func @transform_6(%arg0: i32) -> (i32, i32) {
    %c0_i32 = arith.constant 0 : i32
    %c0_i32_0 = arith.constant 0 : i32
    %c0_i32_1 = arith.constant 0 : i32
    return %c0_i32, %c0_i32_0 : i32, i32
  }
}

module attributes {stable_mosaic.version = 11 : i64} {
  func.func @kernel(%arg0: i32, %arg1: memref<1x4x4x128xf32, #tpu.memory_space<vmem>>, %arg2: memref<1x4x4x128xf32, #tpu.memory_space<vmem>>, %arg3: memref<1x128xf32, #tpu.memory_space<vmem>>, %arg4: memref<1x128xf32, #tpu.memory_space<vmem>>, %arg5: memref<1x128xf32, #tpu.memory_space<vmem>>, %arg6: memref<1x128xf32, #tpu.memory_space<vmem>>, %arg7: memref<1x4x4x128xbf16, #tpu.memory_space<vmem>>) attributes {dimension_semantics = [#tpu.dimension_semantics<parallel>], iteration_bounds = array<i64: 2>, scalar_prefetch = 0 : i64, scratch_operands = 0 : i64, tpu.core_type = #tpu.core_type<tc>, window_params = [{transform_indices = @transform_0, window_bounds = array<i64: 1, 4, 4, 128>}, {transform_indices = @transform_1, window_bounds = array<i64: 1, 4, 4, 128>}, {pipeline_mode = #tpu.pipeline_mode<synchronous>, transform_indices = @transform_2, window_bounds = array<i64: 1, 128>}, {pipeline_mode = #tpu.pipeline_mode<synchronous>, transform_indices = @transform_3, window_bounds = array<i64: 1, 128>}, {pipeline_mode = #tpu.pipeline_mode<synchronous>, transform_indices = @transform_4, window_bounds = array<i64: 1, 128>}, {pipeline_mode = #tpu.pipeline_mode<synchronous>, transform_indices = @transform_5, window_bounds = array<i64: 1, 128>}, {transform_indices = @transform_6, window_bounds = array<i64: 1, 4, 4, 128>}]} {
    %c0 = arith.constant 0 : index
    %c0_0 = arith.constant 0 : index
    %c0_1 = arith.constant 0 : index
    %c0_2 = arith.constant 0 : index
    %0 = vector.load %arg1[%c0, %c0_0, %c0_1, %c0_2] : memref<1x4x4x128xf32, #tpu.memory_space<vmem>>, vector<1x4x4x128xf32>
    %1 = vector.shape_cast %0 : vector<1x4x4x128xf32> to vector<4x4x128xf32>
    %c0_3 = arith.constant 0 : index
    %c0_4 = arith.constant 0 : index
    %c0_5 = arith.constant 0 : index
    %c0_6 = arith.constant 0 : index
    %2 = vector.load %arg2[%c0_3, %c0_4, %c0_5, %c0_6] : memref<1x4x4x128xf32, #tpu.memory_space<vmem>>, vector<1x4x4x128xf32>
    %3 = vector.shape_cast %2 : vector<1x4x4x128xf32> to vector<4x4x128xf32>
    %c0_7 = arith.constant 0 : index
    %c0_8 = arith.constant 0 : index
    %4 = vector.load %arg3[%c0_7, %c0_8] : memref<1x128xf32, #tpu.memory_space<vmem>>, vector<1x128xf32>
    %5 = vector.shape_cast %4 : vector<1x128xf32> to vector<128xf32>
    %6 = vector.shape_cast %5 : vector<128xf32> to vector<1x1x128xf32>
    %7 = vector.broadcast %6 : vector<1x1x128xf32> to vector<4x4x128xf32>
    %8 = arith.mulf %1, %7 : vector<4x4x128xf32>
    %c0_9 = arith.constant 0 : index
    %c0_10 = arith.constant 0 : index
    %9 = vector.load %arg4[%c0_9, %c0_10] : memref<1x128xf32, #tpu.memory_space<vmem>>, vector<1x128xf32>
    %10 = vector.shape_cast %9 : vector<1x128xf32> to vector<128xf32>
    %11 = vector.shape_cast %10 : vector<128xf32> to vector<1x1x128xf32>
    %12 = vector.broadcast %11 : vector<1x1x128xf32> to vector<4x4x128xf32>
    %13 = arith.addf %8, %12 : vector<4x4x128xf32>
    %c0_11 = arith.constant 0 : index
    %c0_12 = arith.constant 0 : index
    %14 = vector.load %arg5[%c0_11, %c0_12] : memref<1x128xf32, #tpu.memory_space<vmem>>, vector<1x128xf32>
    %15 = vector.shape_cast %14 : vector<1x128xf32> to vector<128xf32>
    %16 = vector.shape_cast %15 : vector<128xf32> to vector<1x1x128xf32>
    %17 = vector.broadcast %16 : vector<1x1x128xf32> to vector<4x4x128xf32>
    %18 = arith.mulf %3, %17 : vector<4x4x128xf32>
    %c0_13 = arith.constant 0 : index
    %c0_14 = arith.constant 0 : index
    %19 = vector.load %arg6[%c0_13, %c0_14] : memref<1x128xf32, #tpu.memory_space<vmem>>, vector<1x128xf32>
    %20 = vector.shape_cast %19 : vector<1x128xf32> to vector<128xf32>
    %21 = vector.shape_cast %20 : vector<128xf32> to vector<1x1x128xf32>
    %22 = vector.broadcast %21 : vector<1x1x128xf32> to vector<4x4x128xf32>
    %23 = arith.addf %18, %22 : vector<4x4x128xf32>
    %24 = arith.addf %13, %23 : vector<4x4x128xf32>
    %cst = arith.constant 0.000000e+00 : f32
    %25 = vector.broadcast %cst : f32 to vector<4x4x128xf32>
    %26 = arith.maximumf %24, %25 : vector<4x4x128xf32>
    %27 = arith.truncf %26 : vector<4x4x128xf32> to vector<4x4x128xbf16>
    %c0_15 = arith.constant 0 : index
    %c0_16 = arith.constant 0 : index
    %c0_17 = arith.constant 0 : index
    %c0_18 = arith.constant 0 : index
    %28 = vector.load %arg7[%c0_15, %c0_16, %c0_17, %c0_18] : memref<1x4x4x128xbf16, #tpu.memory_space<vmem>>, vector<1x4x4x128xbf16>
    %29 = vector.shape_cast %28 : vector<1x4x4x128xbf16> to vector<4x4x128xbf16>
    %30 = vector.shape_cast %27 : vector<4x4x128xbf16> to vector<1x4x4x128xbf16>
    tpu.vector_store %arg7[%c0_15, %c0_16, %c0_17, %c0_18], %30 {strides = array<i32>} : memref<1x4x4x128xbf16, #tpu.memory_space<vmem>>, vector<1x4x4x128xbf16>,
    return
  }
  func.func @transform_0(%arg0: i32) -> (i32, i32, i32, i32) {
    %c0_i32 = arith.constant 0 : i32
    %c0_i32_0 = arith.constant 0 : i32
    %c0_i32_1 = arith.constant 0 : i32
    %c0_i32_2 = arith.constant 0 : i32
    return %arg0, %c0_i32, %c0_i32_0, %c0_i32_1 : i32, i32, i32, i32
  }
  func.func @transform_1(%arg0: i32) -> (i32, i32, i32, i32) {
    %c0_i32 = arith.constant 0 : i32
    %c0_i32_0 = arith.constant 0 : i32
    %c0_i32_1 = arith.constant 0 : i32
    %c0_i32_2 = arith.constant 0 : i32
    return %arg0, %c0_i32, %c0_i32_0, %c0_i32_1 : i32, i32, i32, i32
  }
  func.func @transform_2(%arg0: i32) -> (i32, i32) {
    %c0_i32 = arith.constant 0 : i32
    %c0_i32_0 = arith.constant 0 : i32
    %c0_i32_1 = arith.constant 0 : i32
    return %c0_i32, %c0_i32_0 : i32, i32
  }
  func.func @transform_3(%arg0: i32) -> (i32, i32) {
    %c0_i32 = arith.constant 0 : i32
    %c0_i32_0 = arith.constant 0 : i32
    %c0_i32_1 = arith.constant 0 : i32
    return %c0_i32, %c0_i32_0 : i32, i32
  }
  func.func @transform_4(%arg0: i32) -> (i32, i32) {
    %c0_i32 = arith.constant 0 : i32
    %c0_i32_0 = arith.constant 0 : i32
    %c0_i32_1 = arith.constant 0 : i32
    return %c0_i32, %c0_i32_0 : i32, i32
  }
  func.func @transform_5(%arg0: i32) -> (i32, i32) {
    %c0_i32 = arith.constant 0 : i32
    %c0_i32_0 = arith.constant 0 : i32
    %c0_i32_1 = arith.constant 0 : i32
    return %c0_i32, %c0_i32_0 : i32, i32
  }
  func.func @transform_6(%arg0: i32) -> (i32, i32, i32, i32) {
    %c0_i32 = arith.constant 0 : i32
    %c0_i32_0 = arith.constant 0 : i32
    %c0_i32_1 = arith.constant 0 : i32
    %c0_i32_2 = arith.constant 0 : i32
    return %arg0, %c0_i32, %c0_i32_0, %c0_i32_1 : i32, i32, i32, i32
  }
}

</mosaic_0001>

<llo_original>
// kernel: bottleneck_forward.7
$region0: #{bottleneck_forward.7}
  #allocation0 [shape = 'u32[]', space=smem, size = 0x4, offset = 0x4, fixed_abs, tag = 'smem constant byte address 0x4 - core index']
  #allocation1 [shape = 'u32[144,128]{1,0:T(1,128)}', space=vmem, size = 0x12000, scoped, tag = 'internal scratch']
  %s0 = inlined_call_operand.vmem [shape: f32[2,4,4,128], index: 0, kind: input, shape index: {}]
  %s1 = inlined_call_operand.vmem [shape: f32[2,4,4,128], index: 1, kind: input, shape index: {}]
  %s2 = inlined_call_operand.vmem [shape: f32[1,128], index: 2, kind: input, shape index: {}]
  %s3 = inlined_call_operand.vmem [shape: f32[1,128], index: 3, kind: input, shape index: {}]
  %s4 = inlined_call_operand.vmem [shape: f32[1,128], index: 4, kind: input, shape index: {}]
  %s5 = inlined_call_operand.vmem [shape: f32[1,128], index: 5, kind: input, shape index: {}]
  %s6 = inlined_call_operand.vmem [shape: bf16[2,4,4,128], index: 6, kind: output, shape index: {}]
  %s7 = sld [smem:[#allocation0]]
  $region57: #{bottleneck_forward.7} parent=0
    _
  %s9 = ssub.s32 1, %s7
  %s10 = scalar_select 0, %s9, %s7
  loop: start=0, step=1, limit=4
  $region2: #{bottleneck_forward.7} parent=0 // loop_pre_header
    _
  $region3: #{bottleneck_forward.7} parent=0 // loop_header
    %s12 = sphi 0, %s16
    %p13 = scmp.ge.s32.totalorder %s12, 4
    %s22 = sphi 0, %s24
    %s25 = sphi 0, %s22
    %s26 = sphi 0, %s25
    %s42 = sphi 0, %s26
    %s48 = sphi 0, %s50
    %s51 = sphi 0, %s48
    %s52 = sphi 0, %s51
    %s68 = sphi 0, %s52
    %s72 = sphi 0, %s72
    %s74 = sphi 0, %s72
    %s75 = sphi 0, %s74
    %s89 = sphi 0, %s75
    %s93 = sphi 0, %s93
    %s95 = sphi 0, %s93
    %s96 = sphi 0, %s95
    %s110 = sphi 0, %s96
    %s114 = sphi 0, %s114
    %s116 = sphi 0, %s114
    %s117 = sphi 0, %s116
    %s131 = sphi 0, %s117
    %s135 = sphi 0, %s135
    %s137 = sphi 0, %s135
    %s138 = sphi 0, %s137
    %s152 = sphi 0, %s138
    %s158 = sphi 0, %s160
    %s161 = sphi 0, %s158
    %s162 = sphi 0, %s161
    %s178 = sphi 0, %s162
  $region4: #{bottleneck_forward.7} parent=0 // loop_header_branch
    %15 = sbr.rel (%p13) target = $region8
  $region5: #{bottleneck_forward.7} parent=0 // loop_body
    %s17 = ssub.s32 %s12, 1
    %s18 = ssub.s32 %s12, 2
    %s19 = sadd.s32 %s12, 1
    %s20 = ssub.s32 %s12, %s19
    %p21 = scmp.eq.s32.totalorder %s20, 0
    %s23 = sadd.s32 %s22, 1
    %s24 = scalar_select %p21, %s22, %s23
    %p27 = pneg %p21
    %p28 = scmp.eq.s32.totalorder %s12, 1
    %p29 = por %p27, %p28
    %p30 = scmp.ne.s32.totalorder %s22, %s25
    %p31 = scmp.eq.s32.totalorder %s12, 0
    %p32 = por %p30, %p31
    %p33 = scmp.ne.s32.totalorder %s22, %s25
    %p34 = scmp.eq.s32.totalorder %s17, 1
    %p35 = por %p33, %p34
    %p36 = scmp.ne.s32.totalorder %s25, %s26
    %p37 = scmp.eq.s32.totalorder %s17, 0
    %p38 = por %p36, %p37
    %p39 = scmp.ne.s32.totalorder %s25, %s26
    %p40 = scmp.eq.s32.totalorder %s18, 1
    %p41 = por %p39, %p40
    %p43 = scmp.ne.s32.totalorder %s26, %s42
    %p44 = scmp.eq.s32.totalorder %s18, 0
    %p45 = por %p43, %p44
    %s46 = ssub.s32 %s12, %s19
    %p47 = scmp.eq.s32.totalorder %s46, 0
    %s49 = sadd.s32 %s48, 1
    %s50 = scalar_select %p47, %s48, %s49
    %p53 = pneg %p47
    %p54 = scmp.eq.s32.totalorder %s12, 1
    %p55 = por %p53, %p54
    %p56 = scmp.ne.s32.totalorder %s48, %s51
    %p57 = scmp.eq.s32.totalorder %s12, 0
    %p58 = por %p56, %p57
    %p59 = scmp.ne.s32.totalorder %s48, %s51
    %p60 = scmp.eq.s32.totalorder %s17, 1
    %p61 = por %p59, %p60
    %p62 = scmp.ne.s32.totalorder %s51, %s52
    %p63 = scmp.eq.s32.totalorder %s17, 0
    %p64 = por %p62, %p63
    %p65 = scmp.ne.s32.totalorder %s51, %s52
    %p66 = scmp.eq.s32.totalorder %s18, 1
    %p67 = por %p65, %p66
    %p69 = scmp.ne.s32.totalorder %s52, %s68
    %p70 = scmp.eq.s32.totalorder %s18, 0
    %p71 = por %p69, %p70
    %s73 = sadd.s32 %s72, 1
    %p76 = scmp.eq.s32.totalorder %s12, 1
    %p77 = scmp.ne.s32.totalorder %s72, %s74
    %p78 = scmp.eq.s32.totalorder %s12, 0
    %p79 = por %p77, %p78
    %p80 = scmp.ne.s32.totalorder %s72, %s74
    %p81 = scmp.eq.s32.totalorder %s17, 1
    %p82 = por %p80, %p81
    %p83 = scmp.ne.s32.totalorder %s74, %s75
    %p84 = scmp.eq.s32.totalorder %s17, 0
    %p85 = por %p83, %p84
    %p86 = scmp.ne.s32.totalorder %s74, %s75
    %p87 = scmp.eq.s32.totalorder %s18, 1
    %p88 = por %p86, %p87
    %p90 = scmp.ne.s32.totalorder %s75, %s89
    %p91 = scmp.eq.s32.totalorder %s18, 0
    %p92 = por %p90, %p91
    %s94 = sadd.s32 %s93, 1
    %p97 = scmp.eq.s32.totalorder %s12, 1
    %p98 = scmp.ne.s32.totalorder %s93, %s95
    %p99 = scmp.eq.s32.totalorder %s12, 0
    %p100 = por %p98, %p99
    %p101 = scmp.ne.s32.totalorder %s93, %s95
    %p102 = scmp.eq.s32.totalorder %s17, 1
    %p103 = por %p101, %p102
    %p104 = scmp.ne.s32.totalorder %s95, %s96
    %p105 = scmp.eq.s32.totalorder %s17, 0
    %p106 = por %p104, %p105
    %p107 = scmp.ne.s32.totalorder %s95, %s96
    %p108 = scmp.eq.s32.totalorder %s18, 1
    %p109 = por %p107, %p108
    %p111 = scmp.ne.s32.totalorder %s96, %s110
    %p112 = scmp.eq.s32.totalorder %s18, 0
    %p113 = por %p111, %p112
    %s115 = sadd.s32 %s114, 1
    %p118 = scmp.eq.s32.totalorder %s12, 1
    %p119 = scmp.ne.s32.totalorder %s114, %s116
    %p120 = scmp.eq.s32.totalorder %s12, 0
    %p121 = por %p119, %p120
    %p122 = scmp.ne.s32.totalorder %s114, %s116
    %p123 = scmp.eq.s32.totalorder %s17, 1
    %p124 = por %p122, %p123
    %p125 = scmp.ne.s32.totalorder %s116, %s117
    %p126 = scmp.eq.s32.totalorder %s17, 0
    %p127 = por %p125, %p126
    %p128 = scmp.ne.s32.totalorder %s116, %s117
    %p129 = scmp.eq.s32.totalorder %s18, 1
    %p130 = por %p128, %p129
    %p132 = scmp.ne.s32.totalorder %s117, %s131
    %p133 = scmp.eq.s32.totalorder %s18, 0
    %p134 = por %p132, %p133
    %s136 = sadd.s32 %s135, 1
    %p139 = scmp.eq.s32.totalorder %s12, 1
    %p140 = scmp.ne.s32.totalorder %s135, %s137
    %p141 = scmp.eq.s32.totalorder %s12, 0
    %p142 = por %p140, %p141
    %p143 = scmp.ne.s32.totalorder %s135, %s137
    %p144 = scmp.eq.s32.totalorder %s17, 1
    %p145 = por %p143, %p144
    %p146 = scmp.ne.s32.totalorder %s137, %s138
    %p147 = scmp.eq.s32.totalorder %s17, 0
    %p148 = por %p146, %p147
    %p149 = scmp.ne.s32.totalorder %s137, %s138
    %p150 = scmp.eq.s32.totalorder %s18, 1
    %p151 = por %p149, %p150
    %p153 = scmp.ne.s32.totalorder %s138, %s152
    %p154 = scmp.eq.s32.totalorder %s18, 0
    %p155 = por %p153, %p154
    %s156 = ssub.s32 %s12, %s19
    %p157 = scmp.eq.s32.totalorder %s156, 0
    %s159 = sadd.s32 %s158, 1
    %s160 = scalar_select %p157, %s158, %s159
    %p163 = pneg %p157
    %p164 = scmp.eq.s32.totalorder %s12, 1
    %p165 = por %p163, %p164
    %p166 = scmp.ne.s32.totalorder %s158, %s161
    %p167 = scmp.eq.s32.totalorder %s12, 0
    %p168 = por %p166, %p167
    %p169 = scmp.ne.s32.totalorder %s158, %s161
    %p170 = scmp.eq.s32.totalorder %s17, 1
    %p171 = por %p169, %p170
    %p172 = scmp.ne.s32.totalorder %s161, %s162
    %p173 = scmp.eq.s32.totalorder %s17, 0
    %p174 = por %p172, %p173
    %p175 = scmp.ne.s32.totalorder %s161, %s162
    %p176 = scmp.eq.s32.totalorder %s18, 1
    %p177 = por %p175, %p176
    %p179 = scmp.ne.s32.totalorder %s162, %s178
    %p180 = scmp.eq.s32.totalorder %s18, 0
    %p181 = por %p179, %p180
    %p182 = scmp.le.s32.totalorder 1, %s12
    %p183 = scmp.lt.s32.totalorder %s12, 3
    %p184 = pnand %p182, %p183
    %p185 = pneg %p184
    // Predicated region
    $region9: #{bottleneck_forward.7} parent=5 // pred_check
      _
    $region10: #{bottleneck_forward.7} parent=5 // pred_check_branch
      %187 = sbr.rel (%p184) target = $region12
    $region11: #{bottleneck_forward.7} parent=5 // pred_region
      %s188 = ssub.s32 %s12, 1
      // Predicated region
      $region13: #{bottleneck_forward.7} parent=11 // pred_check
        %p189 = pneg %p85
      $region14: #{bottleneck_forward.7} parent=11 // pred_check_branch
        %191 = sbr.rel (%p189) target = $region16
      $region15: #{bottleneck_forward.7} parent=11 // pred_region
        _
      $region16: #{bottleneck_forward.7} parent=11 // pred_fallthru
        _
      // Predicated region
      $region17: #{bottleneck_forward.7} parent=11 // pred_check
        %p192 = pneg %p106
      $region18: #{bottleneck_forward.7} parent=11 // pred_check_branch
        %194 = sbr.rel (%p192) target = $region20
      $region19: #{bottleneck_forward.7} parent=11 // pred_region
        _
      $region20: #{bottleneck_forward.7} parent=11 // pred_fallthru
        _
      // Predicated region
      $region21: #{bottleneck_forward.7} parent=11 // pred_check
        %p195 = pneg %p127
      $region22: #{bottleneck_forward.7} parent=11 // pred_check_branch
        %197 = sbr.rel (%p195) target = $region24
      $region23: #{bottleneck_forward.7} parent=11 // pred_region
        _
      $region24: #{bottleneck_forward.7} parent=11 // pred_fallthru
        _
      // Predicated region
      $region25: #{bottleneck_forward.7} parent=11 // pred_check
        %p198 = pneg %p148
      $region26: #{bottleneck_forward.7} parent=11 // pred_check_branch
        %200 = sbr.rel (%p198) target = $region28
      $region27: #{bottleneck_forward.7} parent=11 // pred_region
        _
      $region28: #{bottleneck_forward.7} parent=11 // pred_fallthru
        _
    $region12: #{bottleneck_forward.7} parent=5 // pred_fallthru
      _
    %p201 = scmp.lt.s32.totalorder %s12, 2
    // Predicated region
    $region29: #{bottleneck_forward.7} parent=5 // pred_check
      %p202 = pneg %p201
    $region30: #{bottleneck_forward.7} parent=5 // pred_check_branch
      %204 = sbr.rel (%p202) target = $region32
    $region31: #{bottleneck_forward.7} parent=5 // pred_region
      // Predicated region
      $region33: #{bottleneck_forward.7} parent=31 // pred_check
        %p205 = pneg %p32
      $region34: #{bottleneck_forward.7} parent=31 // pred_check_branch
        %207 = sbr.rel (%p205) target = $region36
      $region35: #{bottleneck_forward.7} parent=31 // pred_region
        %p208 = scmp.lt.s32.totalorder %s12, 1
        %s209 = scalar_select %p208, %s12, 1
        %s210 = smul.addr %s209, 4
        %s211 = smul.addr %s210, 4
        %s212 = scalar_lea.vmem %s0, %s211
      $region36: #{bottleneck_forward.7} parent=31 // pred_fallthru
        _
      // Predicated region
      $region37: #{bottleneck_forward.7} parent=31 // pred_check
        %p213 = pneg %p58
      $region38: #{bottleneck_forward.7} parent=31 // pred_check_branch
        %215 = sbr.rel (%p213) target = $region40
      $region39: #{bottleneck_forward.7} parent=31 // pred_region
        %p216 = scmp.lt.s32.totalorder %s12, 1
        %s217 = scalar_select %p216, %s12, 1
        %s218 = smul.addr %s217, 4
        %s219 = smul.addr %s218, 4
        %s220 = scalar_lea.vmem %s1, %s219
      $region40: #{bottleneck_forward.7} parent=31 // pred_fallthru
        _
    $region32: #{bottleneck_forward.7} parent=5 // pred_fallthru
      _
    %p221 = scmp.le.s32.totalorder 1, %s12
    %p222 = scmp.lt.s32.totalorder %s12, 3
    %p223 = pnand %p221, %p222
    %p224 = pneg %p223
    // Predicated region
    $region41: #{bottleneck_forward.7} parent=5 // pred_check
      _
    $region42: #{bottleneck_forward.7} parent=5 // pred_check_branch
      %226 = sbr.rel (%p223) target = $region44
    $region43: #{bottleneck_forward.7} parent=5 // pred_region
      %s227 = ssub.s32 %s12, 1
      %p228 = scmp.lt.s32.totalorder %s17, 1
      %s229 = scalar_select %p228, %s17, 1
      %s230 = smul.addr %s229, 4
      %s231 = smul.addr %s230, 4
      %s232 = scalar_lea.vmem %s0, %s231
      %p233 = pneg %p38
      %p234 = pneg %p35
      %p235 = scmp.lt.s32.totalorder %s17, 1
      %s236 = scalar_select %p235, %s17, 1
      %s237 = smul.addr %s236, 4
      %s238 = smul.addr %s237, 4
      %s239 = scalar_lea.vmem %s1, %s238
      %p240 = pneg %p64
      %p241 = pneg %p61
      %p242 = pneg %p85
      %p243 = pneg %p82
      %p244 = pneg %p106
      %p245 = pneg %p103
      %p246 = pneg %p127
      %p247 = pneg %p124
      %p248 = pneg %p148
      %p249 = pneg %p145
      %p250 = pneg %p174
      %p251 = pneg %p171
      %p252 = scmp.lt.s32.totalorder %s17, 1
      %s253 = scalar_select %p252, %s17, 1
      %s254 = smul.addr %s253, 4
      %s255 = smul.addr %s254, 2
      %s256 = scalar_lea.vmem %s6, %s255
      %p257 = scmp.lt.s32.totalorder %s17, 1
      %s258 = scalar_select %p257, %s17, 1
      %s259 = smul.addr %s258, 4
      %s260 = smul.addr %s259, 4
      %s261 = scalar_lea.vmem %s0, %s260
      %p262 = scmp.lt.s32.totalorder %s17, 1
      %s263 = scalar_select %p262, %s17, 1
      %s264 = smul.addr %s263, 4
      %s265 = smul.addr %s264, 4
      %s266 = scalar_lea.vmem %s1, %s265
      %p267 = scmp.lt.s32.totalorder %s17, 1
      %s268 = scalar_select %p267, %s17, 1
      %s269 = smul.addr %s268, 4
      %s270 = smul.addr %s269, 2
      %s271 = scalar_lea.vmem %s6, %s270
      %v272 = vld [vmem:[%s261] sm:$0xf]
      %v273 = vld [vmem:[%s261 + $0x4] sm:$0xf]
      %v274 = vld [vmem:[%s261 + $0x8] sm:$0xf]
      %v275 = vld [vmem:[%s261 + $0xc] sm:$0xf]
      %v276 = vld [vmem:[%s266] sm:$0xf]
      %v277 = vld [vmem:[%s266 + $0x4] sm:$0xf]
      %v278 = vld [vmem:[%s266 + $0x8] sm:$0xf]
      %v279 = vld [vmem:[%s266 + $0xc] sm:$0xf]
      %v280 = vld [vmem:[%s2] sm:$0x1]
      %v282 = vlaneseq
      %v283 = vshrl.u32 %v282, 7
      %v284 = vsub.s32 0, %v283
      %v285 = vrot.slane %v280, %v284
      %v287 = vmul.f32 %v272, %v285
      %v288 = vmul.f32 %v273, %v285
      %v289 = vmul.f32 %v274, %v285
      %v290 = vmul.f32 %v275, %v285
      %v291 = vld [vmem:[%s3] sm:$0x1]
      %v293 = vlaneseq
      %v294 = vshrl.u32 %v293, 7
      %v295 = vsub.s32 0, %v294
      %v296 = vrot.slane %v291, %v295
      %v298 = vadd.f32 %v287, %v296
      %v299 = vadd.f32 %v288, %v296
      %v300 = vadd.f32 %v289, %v296
      %v301 = vadd.f32 %v290, %v296
      %v302 = vld [vmem:[%s4] sm:$0x1]
      %v304 = vlaneseq
      %v305 = vshrl.u32 %v304, 7
      %v306 = vsub.s32 0, %v305
      %v307 = vrot.slane %v302, %v306
      %v309 = vmul.f32 %v276, %v307
      %v310 = vmul.f32 %v277, %v307
      %v311 = vmul.f32 %v278, %v307
      %v312 = vmul.f32 %v279, %v307
      %v313 = vld [vmem:[%s5] sm:$0x1]
      %v315 = vlaneseq
      %v316 = vshrl.u32 %v315, 7
      %v317 = vsub.s32 0, %v316
      %v318 = vrot.slane %v313, %v317
      %v320 = vadd.f32 %v309, %v318
      %v321 = vadd.f32 %v310, %v318
      %v322 = vadd.f32 %v311, %v318
      %v323 = vadd.f32 %v312, %v318
      %v324 = vadd.f32 %v298, %v320
      %v325 = vadd.f32 %v299, %v321
      %v326 = vadd.f32 %v300, %v322
      %v327 = vadd.f32 %v301, %v323
      %v328 = vmax.f32 %v324, 0.0
      %v329 = vmax.f32 %v325, 0.0
      %v330 = vmax.f32 %v326, 0.0
      %v331 = vmax.f32 %v327, 0.0
      %v332 = vpack.c.bf16 %v328, %v328
      %v333 = vpack.c.bf16 %v329, %v329
      %v334 = vpack.c.bf16 %v330, %v330
      %v335 = vpack.c.bf16 %v331, %v331
      %336 = vst [vmem:[%s271] sm:$0x3] %v332
      %337 = vst [vmem:[%s271 + $0x2] sm:$0x3] %v333
      %338 = vst [vmem:[%s271 + $0x4] sm:$0x3] %v334
      %339 = vst [vmem:[%s271 + $0x6] sm:$0x3] %v335
      %p340 = scmp.lt.s32.totalorder %s17, 1
      %s341 = scalar_select %p340, %s17, 1
      %s342 = smul.addr %s341, 4
      %s343 = smul.addr %s342, 2
      %s344 = scalar_lea.vmem %s6, %s343
      // Predicated region
      $region45: #{bottleneck_forward.7} parent=43 // pred_check
        %p345 = pneg %p171
      $region46: #{bottleneck_forward.7} parent=43 // pred_check_branch
        %347 = sbr.rel (%p345) target = $region48
      $region47: #{bottleneck_forward.7} parent=43 // pred_region
        _
      $region48: #{bottleneck_forward.7} parent=43 // pred_fallthru
        _
    $region44: #{bottleneck_forward.7} parent=5 // pred_fallthru
      _
    %p348 = scmp.le.s32.totalorder 2, %s12
    // Predicated region
    $region49: #{bottleneck_forward.7} parent=5 // pred_check
      %p349 = pneg %p348
    $region50: #{bottleneck_forward.7} parent=5 // pred_check_branch
      %351 = sbr.rel (%p349) target = $region52
    $region51: #{bottleneck_forward.7} parent=5 // pred_region
      %s352 = ssub.s32 %s12, 2
      // Predicated region
      $region53: #{bottleneck_forward.7} parent=51 // pred_check
        %p353 = pneg %p177
      $region54: #{bottleneck_forward.7} parent=51 // pred_check_branch
        %355 = sbr.rel (%p353) target = $region56
      $region55: #{bottleneck_forward.7} parent=51 // pred_region
        %p356 = scmp.lt.s32.totalorder %s18, 1
        %s357 = scalar_select %p356, %s18, 1
        %s358 = smul.addr %s357, 4
        %s359 = smul.addr %s358, 2
        %s360 = scalar_lea.vmem %s6, %s359
      $region56: #{bottleneck_forward.7} parent=51 // pred_fallthru
        _
    $region52: #{bottleneck_forward.7} parent=5 // pred_fallthru
      _
  $region6: #{bottleneck_forward.7} parent=0 // loop_footer
    %s16 = sadd.s32 1, %s12
  $region7: #{bottleneck_forward.7} parent=0 // loop_footer_branch
    %11 = sbr.rel target = $region3
  $region8: #{bottleneck_forward.7} parent=0 // loop_exit
    _

// kernel: bottleneck_forward.6
$region0: #{bottleneck_forward.6}
  #allocation0 [shape = 'u32[]', space=smem, size = 0x4, offset = 0x4, fixed_abs, tag = 'smem constant byte address 0x4 - core index']
  #allocation1 [shape = 'u32[144,128]{1,0:T(1,128)}', space=vmem, size = 0x12000, scoped, tag = 'internal scratch']
  %s0 = inlined_call_operand.vmem [shape: f32[2,4,4,128], index: 0, kind: input, shape index: {}]
  %s1 = inlined_call_operand.vmem [shape: f32[1,128], index: 1, kind: input, shape index: {}]
  %s2 = inlined_call_operand.vmem [shape: f32[1,128], index: 2, kind: input, shape index: {}]
  %s3 = inlined_call_operand.vmem [shape: bf16[128,128], index: 3, kind: input, shape index: {}]
  %s4 = inlined_call_operand.vmem [shape: f32[2,4,4,128], index: 4, kind: output, shape index: {0}]
  %s5 = inlined_call_operand.vmem [shape: f32[1,128], index: 5, kind: output, shape index: {1}]
  %s6 = inlined_call_operand.vmem [shape: f32[1,128], index: 6, kind: output, shape index: {2}]
  %7 = xla_tuple %s4, %s5, %s6
  %s8 = sld [smem:[#allocation0]]
  $region69: #{bottleneck_forward.6} parent=0
    _
  %s10 = ssub.s32 1, %s8
  %s11 = scalar_select 0, %s10, %s8
  loop: start=0, step=1, limit=4
  $region2: #{bottleneck_forward.6} parent=0 // loop_pre_header
    _
  $region3: #{bottleneck_forward.6} parent=0 // loop_header
    %s13 = sphi 0, %s17
    %p14 = scmp.ge.s32.totalorder %s13, 4
    %s23 = sphi 0, %s25
    %s26 = sphi 0, %s23
    %s27 = sphi 0, %s26
    %s43 = sphi 0, %s27
    %s47 = sphi 0, %s47
    %s49 = sphi 0, %s47
    %s50 = sphi 0, %s49
    %s64 = sphi 0, %s50
    %s68 = sphi 0, %s68
    %s70 = sphi 0, %s68
    %s71 = sphi 0, %s70
    %s85 = sphi 0, %s71
    %s89 = sphi 0, %s89
    %s91 = sphi 0, %s89
    %s92 = sphi 0, %s91
    %s106 = sphi 0, %s92
    %s112 = sphi 0, %s114
    %s115 = sphi 0, %s112
    %s116 = sphi 0, %s115
    %s132 = sphi 0, %s116
    %s136 = sphi 0, %s136
    %s138 = sphi 0, %s136
    %s139 = sphi 0, %s138
    %s153 = sphi 0, %s139
    %s157 = sphi 0, %s157
    %s159 = sphi 0, %s157
    %s160 = sphi 0, %s159
    %s174 = sphi 0, %s160
  $region4: #{bottleneck_forward.6} parent=0 // loop_header_branch
    %16 = sbr.rel (%p14) target = $region8
  $region5: #{bottleneck_forward.6} parent=0 // loop_body
    %s18 = ssub.s32 %s13, 1
    %s19 = ssub.s32 %s13, 2
    %s20 = sadd.s32 %s13, 1
    %s21 = ssub.s32 %s13, %s20
    %p22 = scmp.eq.s32.totalorder %s21, 0
    %s24 = sadd.s32 %s23, 1
    %s25 = scalar_select %p22, %s23, %s24
    %p28 = pneg %p22
    %p29 = scmp.eq.s32.totalorder %s13, 1
    %p30 = por %p28, %p29
    %p31 = scmp.ne.s32.totalorder %s23, %s26
    %p32 = scmp.eq.s32.totalorder %s13, 0
    %p33 = por %p31, %p32
    %p34 = scmp.ne.s32.totalorder %s23, %s26
    %p35 = scmp.eq.s32.totalorder %s18, 1
    %p36 = por %p34, %p35
    %p37 = scmp.ne.s32.totalorder %s26, %s27
    %p38 = scmp.eq.s32.totalorder %s18, 0
    %p39 = por %p37, %p38
    %p40 = scmp.ne.s32.totalorder %s26, %s27
    %p41 = scmp.eq.s32.totalorder %s19, 1
    %p42 = por %p40, %p41
    %p44 = scmp.ne.s32.totalorder %s27, %s43
    %p45 = scmp.eq.s32.totalorder %s19, 0
    %p46 = por %p44, %p45
    %s48 = sadd.s32 %s47, 1
    %p51 = scmp.eq.s32.totalorder %s13, 1
    %p52 = scmp.ne.s32.totalorder %s47, %s49
    %p53 = scmp.eq.s32.totalorder %s13, 0
    %p54 = por %p52, %p53
    %p55 = scmp.ne.s32.totalorder %s47, %s49
    %p56 = scmp.eq.s32.totalorder %s18, 1
    %p57 = por %p55, %p56
    %p58 = scmp.ne.s32.totalorder %s49, %s50
    %p59 = scmp.eq.s32.totalorder %s18, 0
    %p60 = por %p58, %p59
    %p61 = scmp.ne.s32.totalorder %s49, %s50
    %p62 = scmp.eq.s32.totalorder %s19, 1
    %p63 = por %p61, %p62
    %p65 = scmp.ne.s32.totalorder %s50, %s64
    %p66 = scmp.eq.s32.totalorder %s19, 0
    %p67 = por %p65, %p66
    %s69 = sadd.s32 %s68, 1
    %p72 = scmp.eq.s32.totalorder %s13, 1
    %p73 = scmp.ne.s32.totalorder %s68, %s70
    %p74 = scmp.eq.s32.totalorder %s13, 0
    %p75 = por %p73, %p74
    %p76 = scmp.ne.s32.totalorder %s68, %s70
    %p77 = scmp.eq.s32.totalorder %s18, 1
    %p78 = por %p76, %p77
    %p79 = scmp.ne.s32.totalorder %s70, %s71
    %p80 = scmp.eq.s32.totalorder %s18, 0
    %p81 = por %p79, %p80
    %p82 = scmp.ne.s32.totalorder %s70, %s71
    %p83 = scmp.eq.s32.totalorder %s19, 1
    %p84 = por %p82, %p83
    %p86 = scmp.ne.s32.totalorder %s71, %s85
    %p87 = scmp.eq.s32.totalorder %s19, 0
    %p88 = por %p86, %p87
    %s90 = sadd.s32 %s89, 1
    %p93 = scmp.eq.s32.totalorder %s13, 1
    %p94 = scmp.ne.s32.totalorder %s89, %s91
    %p95 = scmp.eq.s32.totalorder %s13, 0
    %p96 = por %p94, %p95
    %p97 = scmp.ne.s32.totalorder %s89, %s91
    %p98 = scmp.eq.s32.totalorder %s18, 1
    %p99 = por %p97, %p98
    %p100 = scmp.ne.s32.totalorder %s91, %s92
    %p101 = scmp.eq.s32.totalorder %s18, 0
    %p102 = por %p100, %p101
    %p103 = scmp.ne.s32.totalorder %s91, %s92
    %p104 = scmp.eq.s32.totalorder %s19, 1
    %p105 = por %p103, %p104
    %p107 = scmp.ne.s32.totalorder %s92, %s106
    %p108 = scmp.eq.s32.totalorder %s19, 0
    %p109 = por %p107, %p108
    %s110 = ssub.s32 %s13, %s20
    %p111 = scmp.eq.s32.totalorder %s110, 0
    %s113 = sadd.s32 %s112, 1
    %s114 = scalar_select %p111, %s112, %s113
    %p117 = pneg %p111
    %p118 = scmp.eq.s32.totalorder %s13, 1
    %p119 = por %p117, %p118
    %p120 = scmp.ne.s32.totalorder %s112, %s115
    %p121 = scmp.eq.s32.totalorder %s13, 0
    %p122 = por %p120, %p121
    %p123 = scmp.ne.s32.totalorder %s112, %s115
    %p124 = scmp.eq.s32.totalorder %s18, 1
    %p125 = por %p123, %p124
    %p126 = scmp.ne.s32.totalorder %s115, %s116
    %p127 = scmp.eq.s32.totalorder %s18, 0
    %p128 = por %p126, %p127
    %p129 = scmp.ne.s32.totalorder %s115, %s116
    %p130 = scmp.eq.s32.totalorder %s19, 1
    %p131 = por %p129, %p130
    %p133 = scmp.ne.s32.totalorder %s116, %s132
    %p134 = scmp.eq.s32.totalorder %s19, 0
    %p135 = por %p133, %p134
    %s137 = sadd.s32 %s136, 1
    %p140 = scmp.eq.s32.totalorder %s13, 1
    %p141 = scmp.ne.s32.totalorder %s136, %s138
    %p142 = scmp.eq.s32.totalorder %s13, 0
    %p143 = por %p141, %p142
    %p144 = scmp.ne.s32.totalorder %s136, %s138
    %p145 = scmp.eq.s32.totalorder %s18, 1
    %p146 = por %p144, %p145
    %p147 = scmp.ne.s32.totalorder %s138, %s139
    %p148 = scmp.eq.s32.totalorder %s18, 0
    %p149 = por %p147, %p148
    %p150 = scmp.ne.s32.totalorder %s138, %s139
    %p151 = scmp.eq.s32.totalorder %s19, 1
    %p152 = por %p150, %p151
    %p154 = scmp.ne.s32.totalorder %s139, %s153
    %p155 = scmp.eq.s32.totalorder %s19, 0
    %p156 = por %p154, %p155
    %s158 = sadd.s32 %s157, 1
    %p161 = scmp.eq.s32.totalorder %s13, 1
    %p162 = scmp.ne.s32.totalorder %s157, %s159
    %p163 = scmp.eq.s32.totalorder %s13, 0
    %p164 = por %p162, %p163
    %p165 = scmp.ne.s32.totalorder %s157, %s159
    %p166 = scmp.eq.s32.totalorder %s18, 1
    %p167 = por %p165, %p166
    %p168 = scmp.ne.s32.totalorder %s159, %s160
    %p169 = scmp.eq.s32.totalorder %s18, 0
    %p170 = por %p168, %p169
    %p171 = scmp.ne.s32.totalorder %s159, %s160
    %p172 = scmp.eq.s32.totalorder %s19, 1
    %p173 = por %p171, %p172
    %p175 = scmp.ne.s32.totalorder %s160, %s174
    %p176 = scmp.eq.s32.totalorder %s19, 0
    %p177 = por %p175, %p176
    %p178 = scmp.le.s32.totalorder 1, %s13
    %p179 = scmp.lt.s32.totalorder %s13, 3
    %p180 = pnand %p178, %p179
    %p181 = pneg %p180
    // Predicated region
    $region9: #{bottleneck_forward.6} parent=5 // pred_check
      _
    $region10: #{bottleneck_forward.6} parent=5 // pred_check_branch
      %183 = sbr.rel (%p180) target = $region12
    $region11: #{bottleneck_forward.6} parent=5 // pred_region
      %s184 = ssub.s32 %s13, 1
      // Predicated region
      $region13: #{bottleneck_forward.6} parent=11 // pred_check
        %p185 = pneg %p60
      $region14: #{bottleneck_forward.6} parent=11 // pred_check_branch
        %187 = sbr.rel (%p185) target = $region16
      $region15: #{bottleneck_forward.6} parent=11 // pred_region
        _
      $region16: #{bottleneck_forward.6} parent=11 // pred_fallthru
        _
      // Predicated region
      $region17: #{bottleneck_forward.6} parent=11 // pred_check
        %p188 = pneg %p81
      $region18: #{bottleneck_forward.6} parent=11 // pred_check_branch
        %190 = sbr.rel (%p188) target = $region20
      $region19: #{bottleneck_forward.6} parent=11 // pred_region
        _
      $region20: #{bottleneck_forward.6} parent=11 // pred_fallthru
        _
      // Predicated region
      $region21: #{bottleneck_forward.6} parent=11 // pred_check
        %p191 = pneg %p102
      $region22: #{bottleneck_forward.6} parent=11 // pred_check_branch
        %193 = sbr.rel (%p191) target = $region24
      $region23: #{bottleneck_forward.6} parent=11 // pred_region
        _
      $region24: #{bottleneck_forward.6} parent=11 // pred_fallthru
        _
    $region12: #{bottleneck_forward.6} parent=5 // pred_fallthru
      _
    %p194 = scmp.lt.s32.totalorder %s13, 2
    // Predicated region
    $region25: #{bottleneck_forward.6} parent=5 // pred_check
      %p195 = pneg %p194
    $region26: #{bottleneck_forward.6} parent=5 // pred_check_branch
      %197 = sbr.rel (%p195) target = $region28
    $region27: #{bottleneck_forward.6} parent=5 // pred_region
      // Predicated region
      $region29: #{bottleneck_forward.6} parent=27 // pred_check
        %p198 = pneg %p33
      $region30: #{bottleneck_forward.6} parent=27 // pred_check_branch
        %200 = sbr.rel (%p198) target = $region32
      $region31: #{bottleneck_forward.6} parent=27 // pred_region
        %p201 = scmp.lt.s32.totalorder %s13, 1
        %s202 = scalar_select %p201, %s13, 1
        %s203 = smul.addr %s202, 4
        %s204 = smul.addr %s203, 4
        %s205 = scalar_lea.vmem %s0, %s204
      $region32: #{bottleneck_forward.6} parent=27 // pred_fallthru
        _
    $region28: #{bottleneck_forward.6} parent=5 // pred_fallthru
      _
    %p206 = scmp.le.s32.totalorder 1, %s13
    %p207 = scmp.lt.s32.totalorder %s13, 3
    %p208 = pnand %p206, %p207
    %p209 = pneg %p208
    // Predicated region
    $region33: #{bottleneck_forward.6} parent=5 // pred_check
      _
    $region34: #{bottleneck_forward.6} parent=5 // pred_check_branch
      %211 = sbr.rel (%p208) target = $region36
    $region35: #{bottleneck_forward.6} parent=5 // pred_region
      %s212 = ssub.s32 %s13, 1
      %p213 = scmp.lt.s32.totalorder %s18, 1
      %s214 = scalar_select %p213, %s18, 1
      %s215 = smul.addr %s214, 4
      %s216 = smul.addr %s215, 4
      %s217 = scalar_lea.vmem %s0, %s216
      %p218 = pneg %p39
      %p219 = pneg %p36
      %p220 = pneg %p60
      %p221 = pneg %p57
      %p222 = pneg %p81
      %p223 = pneg %p78
      %p224 = pneg %p102
      %p225 = pneg %p99
      %p226 = pneg %p128
      %p227 = pneg %p125
      %p228 = scmp.lt.s32.totalorder %s18, 1
      %s229 = scalar_select %p228, %s18, 1
      %s230 = smul.addr %s229, 4
      %s231 = smul.addr %s230, 4
      %s232 = scalar_lea.vmem %s4, %s231
      %p233 = pneg %p149
      %p234 = pneg %p146
      %p235 = pneg %p170
      %p236 = pneg %p167
      %p237 = scmp.lt.s32.totalorder %s18, 1
      %s238 = scalar_select %p237, %s18, 1
      %s239 = smul.addr %s238, 4
      %s240 = smul.addr %s239, 4
      %s241 = scalar_lea.vmem %s0, %s240
      %p242 = scmp.lt.s32.totalorder %s18, 1
      %s243 = scalar_select %p242, %s18, 1
      %s244 = smul.addr %s243, 4
      %s245 = smul.addr %s244, 4
      %s246 = scalar_lea.vmem %s4, %s245
      %v248 = vld [vmem:[%s241] sm:$0xf]
      %v249 = vld [vmem:[%s241 + $0x4] sm:$0xf]
      %v250 = vld [vmem:[%s241 + $0x8] sm:$0xf]
      %v251 = vld [vmem:[%s241 + $0xc] sm:$0xf]
      %v252 = vld [vmem:[%s1] sm:$0x1]
      %v254 = vlaneseq
      %v255 = vshrl.u32 %v254, 7
      %v256 = vsub.s32 0, %v255
      %v257 = vrot.slane %v252, %v256
      %v259 = vmul.f32 %v248, %v257
      %v260 = vmul.f32 %v249, %v257
      %v261 = vmul.f32 %v250, %v257
      %v262 = vmul.f32 %v251, %v257
      %v263 = vld [vmem:[%s2] sm:$0x1]
      %v265 = vlaneseq
      %v266 = vshrl.u32 %v265, 7
      %v267 = vsub.s32 0, %v266
      %v268 = vrot.slane %v263, %v267
      %v270 = vadd.f32 %v259, %v268
      %v271 = vadd.f32 %v260, %v268
      %v272 = vadd.f32 %v261, %v268
      %v273 = vadd.f32 %v262, %v268
      %v274 = vmax.f32 %v270, 0.0
      %v275 = vmax.f32 %v271, 0.0
      %v276 = vmax.f32 %v272, 0.0
      %v277 = vmax.f32 %v273, 0.0
      %v278 = vpack.c.bf16 %v274, %v274
      %v279 = vpack.c.bf16 %v275, %v275
      %v280 = vpack.c.bf16 %v276, %v276
      %v281 = vpack.c.bf16 %v277, %v277
      %v282 = vld [vmem:[%s3] sm:$0xf]
      %v283 = vld [vmem:[%s3 + $0x4] sm:$0xf]
      %v284 = vld [vmem:[%s3 + $0x8] sm:$0xf]
      %v285 = vld [vmem:[%s3 + $0xc] sm:$0xf]
      %v286 = vld [vmem:[%s3 + $0x10] sm:$0xf]
      %v287 = vld [vmem:[%s3 + $0x14] sm:$0xf]
      %v288 = vld [vmem:[%s3 + $0x18] sm:$0xf]
      %v289 = vld [vmem:[%s3 + $0x1c] sm:$0xf]
      %v290 = vld [vmem:[%s3 + $0x20] sm:$0xf]
      %v291 = vld [vmem:[%s3 + $0x24] sm:$0xf]
      %v292 = vld [vmem:[%s3 + $0x28] sm:$0xf]
      %v293 = vld [vmem:[%s3 + $0x2c] sm:$0xf]
      %v294 = vld [vmem:[%s3 + $0x30] sm:$0xf]
      %v295 = vld [vmem:[%s3 + $0x34] sm:$0xf]
      %v296 = vld [vmem:[%s3 + $0x38] sm:$0xf]
      %v297 = vld [vmem:[%s3 + $0x3c] sm:$0xf]
      %v302 = vcombine.low %v278, %v279
      %v303 = vcombine.low %v280, %v281
      %v305 = vunpack.c.l.s4 1983009808
      %v306 = vunpack.c.0.s8 %v305
      %v307 = vlaneseq
      %v308 = vshrl.u32 %v307, 7
      %v309 = vsub.s32 %v306, %v308
      %v310 = vrot.slane %v302, %v309
      %v312 = vunpack.c.l.s4 1983009808
      %v313 = vunpack.c.0.s8 %v312
      %v314 = vlaneseq
      %v315 = vshrl.u32 %v314, 7
      %v316 = vsub.s32 %v313, %v315
      %v317 = vrot.slane %v303, %v316
      %v318 = vcombine.low %v310, %v317
      %v336 = vunpack.c.l.b16 %v282
      %v337 = vunpack.c.l.b16 %v283
      %v338 = vunpack.c.l.b16 %v284
      %v339 = vunpack.c.l.b16 %v285
      %v340 = vunpack.c.l.b16 %v286
      %v341 = vunpack.c.l.b16 %v287
      %v342 = vunpack.c.l.b16 %v288
      %v343 = vunpack.c.l.b16 %v289
      %v344 = vunpack.c.l.b16 %v290
      %v345 = vunpack.c.l.b16 %v291
      %v346 = vunpack.c.l.b16 %v292
      %v347 = vunpack.c.l.b16 %v293
      %v348 = vunpack.c.l.b16 %v294
      %v349 = vunpack.c.l.b16 %v295
      %v350 = vunpack.c.l.b16 %v296
      %v351 = vunpack.c.l.b16 %v297
      %v352 = vpack.c.b16 %v337, %v336
      %v353 = vpack.c.b16 %v339, %v338
      %v354 = vpack.c.b16 %v341, %v340
      %v355 = vpack.c.b16 %v343, %v342
      %v356 = vpack.c.b16 %v345, %v344
      %v357 = vpack.c.b16 %v347, %v346
      %v358 = vpack.c.b16 %v349, %v348
      %v359 = vpack.c.b16 %v351, %v350
      %368 = vmatprep.subr.bf16.mxu0 0
      %369 = vmatpush1.bf16.msra.mxu0 %v352
      %370 = vmatprep.subr.bf16.mxu0 0
      %371 = vmatpush1.bf16.msra.mxu0 %v353
      %372 = vmatprep.subr.bf16.mxu0 0
      %373 = vmatpush1.bf16.msra.mxu0 %v354
      %374 = vmatprep.subr.bf16.mxu0 0
      %375 = vmatpush1.bf16.msra.mxu0 %v355
      %376 = vmatprep.subr.bf16.mxu0 0
      %377 = vmatpush1.bf16.msra.mxu0 %v356
      %378 = vmatprep.subr.bf16.mxu0 0
      %379 = vmatpush1.bf16.msra.mxu0 %v357
      %380 = vmatprep.subr.bf16.mxu0 0
      %381 = vmatpush1.bf16.msra.mxu0 %v358
      %382 = vmatprep.subr.bf16.mxu0 0
      %383 = vmatpush1.bf16.msra.mxu0 %v359
      %384 = vmatprep.subr.bf16.mxu0 0
      %385 = vmatpush1.bf16.msra.mxu0 0
      %386 = vmatprep.subr.bf16.mxu0 0
      %387 = vmatpush1.bf16.msra.mxu0 0
      %388 = vmatprep.subr.bf16.mxu0 0
      %389 = vmatpush1.bf16.msra.mxu0 0
      %390 = vmatprep.subr.bf16.mxu0 0
      %391 = vmatpush1.bf16.msra.mxu0 0
      %392 = vmatprep.subr.bf16.mxu0 0
      %393 = vmatpush1.bf16.msra.mxu0 0
      %394 = vmatprep.subr.bf16.mxu0 0
      %395 = vmatpush1.bf16.msra.mxu0 0
      %396 = vmatprep.subr.bf16.mxu0 0
      %397 = vmatpush1.bf16.msra.mxu0 0
      %398 = vmatprep.subr.bf16.mxu0 0
      %399 = vmatpush1.bf16.msra.mxu0 0
      %400 = vmatprep.mubr.bf16.mxu0 0
      %401 = vmatmul.mubr.bf16.gmra.mrb[0].mxu0 %v318
      %v402 = vpop.f32.mrb[0].mxu0
      %v403 = vadd.f32 0.0, %v402
      %v404 = vpop.f32.mrb[0].mxu0
      %v405 = vpop.f32.mrb[0].mxu0
      %v406 = vadd.f32 0.0, %v405
      %v407 = vpop.f32.mrb[0].mxu0
      %408 = vdwg.mxu0
      %p409 = scmp.eq.s32.totalorder %s18, 0
      // Predicated region
      $region37: #{bottleneck_forward.6} parent=35 // pred_check
        %p410 = pneg %p409
      $region38: #{bottleneck_forward.6} parent=35 // pred_check_branch
        %412 = sbr.rel (%p410) target = $region40
      $region39: #{bottleneck_forward.6} parent=35 // pred_region
        %413 = vst [vmem:[%s5] sm:$0x1] 0.0
        %414 = vst [vmem:[%s6] sm:$0x1] 0.0
      $region40: #{bottleneck_forward.6} parent=35 // pred_fallthru
        _
      %v415 = vld [vmem:[%s5] sm:$0x1]
      %v416 = vadd.f32 %v403, %v406
      %v417 = vrot.slane %v416, 4
      %v418 = vadd.f32 %v416, %v417
      %v419 = vrot.slane %v418, 2
      %v420 = vadd.f32 %v418, %v419
      %v421 = vrot.slane %v420, 1
      %v422 = vadd.f32 %v420, %v421
      %v423 = vadd.f32 %v415, %v422
      %424 = vst [vmem:[%s5] sm:$0x1] %v423
      %v425 = vld [vmem:[%s6] sm:$0x1]
      %v426 = vmul.f32 %v403, %v403
      %v427 = vmul.f32 %v406, %v406
      %v428 = vadd.f32 %v426, %v427
      %v429 = vrot.slane %v428, 4
      %v430 = vadd.f32 %v428, %v429
      %v431 = vrot.slane %v430, 2
      %v432 = vadd.f32 %v430, %v431
      %v433 = vrot.slane %v432, 1
      %v434 = vadd.f32 %v432, %v433
      %v435 = vadd.f32 %v425, %v434
      %436 = vst [vmem:[%s6] sm:$0x1] %v435
      %v439 = vcombine.high %v403, %v403
      %v440 = vcombine.high %v406, %v406
      %443 = vst [vmem:[%s246] sm:$0xf] %v403
      %444 = vst [vmem:[%s246 + $0x4] sm:$0xf] %v439
      %445 = vst [vmem:[%s246 + $0x8] sm:$0xf] %v406
      %446 = vst [vmem:[%s246 + $0xc] sm:$0xf] %v440
      %p447 = scmp.lt.s32.totalorder %s18, 1
      %s448 = scalar_select %p447, %s18, 1
      %s449 = smul.addr %s448, 4
      %s450 = smul.addr %s449, 4
      %s451 = scalar_lea.vmem %s4, %s450
      // Predicated region
      $region41: #{bottleneck_forward.6} parent=35 // pred_check
        %p452 = pneg %p125
      $region42: #{bottleneck_forward.6} parent=35 // pred_check_branch
        %454 = sbr.rel (%p452) target = $region44
      $region43: #{bottleneck_forward.6} parent=35 // pred_region
        _
      $region44: #{bottleneck_forward.6} parent=35 // pred_fallthru
        _
      // Predicated region
      $region45: #{bottleneck_forward.6} parent=35 // pred_check
        %p455 = pneg %p146
      $region46: #{bottleneck_forward.6} parent=35 // pred_check_branch
        %457 = sbr.rel (%p455) target = $region48
      $region47: #{bottleneck_forward.6} parent=35 // pred_region
        _
      $region48: #{bottleneck_forward.6} parent=35 // pred_fallthru
        _
      // Predicated region
      $region49: #{bottleneck_forward.6} parent=35 // pred_check
        %p458 = pneg %p167
      $region50: #{bottleneck_forward.6} parent=35 // pred_check_branch
        %460 = sbr.rel (%p458) target = $region52
      $region51: #{bottleneck_forward.6} parent=35 // pred_region
        _
      $region52: #{bottleneck_forward.6} parent=35 // pred_fallthru
        _
      // Predicated region
      $region53: #{bottleneck_forward.6} parent=35 // pred_check
        %p461 = pneg %p146
      $region54: #{bottleneck_forward.6} parent=35 // pred_check_branch
        %463 = sbr.rel (%p461) target = $region56
      $region55: #{bottleneck_forward.6} parent=35 // pred_region
        _
      $region56: #{bottleneck_forward.6} parent=35 // pred_fallthru
        _
      // Predicated region
      $region57: #{bottleneck_forward.6} parent=35 // pred_check
        %p464 = pneg %p167
      $region58: #{bottleneck_forward.6} parent=35 // pred_check_branch
        %466 = sbr.rel (%p464) target = $region60
      $region59: #{bottleneck_forward.6} parent=35 // pred_region
        _
      $region60: #{bottleneck_forward.6} parent=35 // pred_fallthru
        _
    $region36: #{bottleneck_forward.6} parent=5 // pred_fallthru
      _
    %p467 = scmp.le.s32.totalorder 2, %s13
    // Predicated region
    $region61: #{bottleneck_forward.6} parent=5 // pred_check
      %p468 = pneg %p467
    $region62: #{bottleneck_forward.6} parent=5 // pred_check_branch
      %470 = sbr.rel (%p468) target = $region64
    $region63: #{bottleneck_forward.6} parent=5 // pred_region
      %s471 = ssub.s32 %s13, 2
      // Predicated region
      $region65: #{bottleneck_forward.6} parent=63 // pred_check
        %p472 = pneg %p131
      $region66: #{bottleneck_forward.6} parent=63 // pred_check_branch
        %474 = sbr.rel (%p472) target = $region68
      $region67: #{bottleneck_forward.6} parent=63 // pred_region
        %p475 = scmp.lt.s32.totalorder %s19, 1
        %s476 = scalar_select %p475, %s19, 1
        %s477 = smul.addr %s476, 4
        %s478 = smul.addr %s477, 4
        %s479 = scalar_lea.vmem %s4, %s478
      $region68: #{bottleneck_forward.6} parent=63 // pred_fallthru
        _
    $region64: #{bottleneck_forward.6} parent=5 // pred_fallthru
      _
  $region6: #{bottleneck_forward.6} parent=0 // loop_footer
    %s17 = sadd.s32 1, %s13
  $region7: #{bottleneck_forward.6} parent=0 // loop_footer_branch
    %12 = sbr.rel target = $region3
  $region8: #{bottleneck_forward.6} parent=0 // loop_exit
    _

// kernel: bottleneck_forward.4
$region0: #{bottleneck_forward.4}
  #allocation0 [shape = 'u32[]', space=smem, size = 0x4, offset = 0x4, fixed_abs, tag = 'smem constant byte address 0x4 - core index']
  #allocation1 [shape = 'u32[144,128]{1,0:T(1,128)}', space=vmem, size = 0x12000, scoped, tag = 'internal scratch']
  %s0 = inlined_call_operand.vmem [shape: bf16[2,8,8,128], index: 0, kind: input, shape index: {}]
  %s1 = inlined_call_operand.hbm [shape: bf16[128,128], index: 1, kind: input, shape index: {}]
  %s2 = inlined_call_operand.hbm [shape: bf16[128,128], index: 2, kind: input, shape index: {}]
  %s3 = inlined_call_operand.vmem [shape: f32[2,8,8,128], index: 3, kind: output, shape index: {0}]
  %s4 = inlined_call_operand.vmem [shape: f32[1,128], index: 4, kind: output, shape index: {1}]
  %s5 = inlined_call_operand.vmem [shape: f32[1,128], index: 5, kind: output, shape index: {2}]
  %s6 = inlined_call_operand.vmem [shape: f32[2,4,4,128], index: 6, kind: output, shape index: {3}]
  %s7 = inlined_call_operand.vmem [shape: f32[1,128], index: 7, kind: output, shape index: {4}]
  %s8 = inlined_call_operand.vmem [shape: f32[1,128], index: 8, kind: output, shape index: {5}]
  %9 = xla_tuple %s3, %s4, %s5, %s6, %s7, %s8
  %s10 = sld [smem:[#allocation0]]
  $region97: #{bottleneck_forward.4} parent=0
    _
  %s12 = ssub.s32 1, %s10
  %s13 = scalar_select 0, %s12, %s10
  $region1: #{bottleneck_forward.4} parent=0
    #allocation2 [shape = 'u8[32768]{0}', space=vmem, size = 0x8000, scoped, tag = 'input window, operand 1, single buffered']
    #allocation3 [shape = 's32[2]{0}', space=sflag, size = 0x8, scoped, tag = 'scoped memory for bottleneck_forward.4']
    #allocation4 [shape = 'u8[32768]{0}', space=vmem, size = 0x8000, scoped, tag = 'input window, operand 2, single buffered']
    #allocation5 [shape = 's32[1]{0}', space=sflag, size = 0x4, scoped, tag = 'scoped memory for bottleneck_forward.4']
    %14 = vsyncpa [#allocation3], 0
    %15 = vsyncpa [#allocation5], 0
    loop: start=0, step=1, limit=4
    $region2: #{bottleneck_forward.4} parent=1 // loop_pre_header
      _
    $region3: #{bottleneck_forward.4} parent=1 // loop_header
      %s17 = sphi 0, %s21
      %p18 = scmp.ge.s32.totalorder %s17, 4
      %s27 = sphi 0, %s29
      %s30 = sphi 0, %s27
      %s31 = sphi 0, %s30
      %s47 = sphi 0, %s31
      %s51 = sphi 0, %s51
      %s53 = sphi 0, %s51
      %s54 = sphi 0, %s53
      %s68 = sphi 0, %s54
      %s72 = sphi 0, %s72
      %s74 = sphi 0, %s72
      %s75 = sphi 0, %s74
      %s89 = sphi 0, %s75
      %s95 = sphi 0, %s97
      %s98 = sphi 0, %s95
      %s99 = sphi 0, %s98
      %s115 = sphi 0, %s99
      %s119 = sphi 0, %s119
      %s121 = sphi 0, %s119
      %s122 = sphi 0, %s121
      %s136 = sphi 0, %s122
      %s140 = sphi 0, %s140
      %s142 = sphi 0, %s140
      %s143 = sphi 0, %s142
      %s157 = sphi 0, %s143
      %s163 = sphi 0, %s165
      %s166 = sphi 0, %s163
      %s167 = sphi 0, %s166
      %s183 = sphi 0, %s167
      %s187 = sphi 0, %s187
      %s189 = sphi 0, %s187
      %s190 = sphi 0, %s189
      %s204 = sphi 0, %s190
      %s208 = sphi 0, %s208
      %s210 = sphi 0, %s208
      %s211 = sphi 0, %s210
      %s225 = sphi 0, %s211
    $region4: #{bottleneck_forward.4} parent=1 // loop_header_branch
      %20 = sbr.rel (%p18) target = $region8
    $region5: #{bottleneck_forward.4} parent=1 // loop_body
      %s22 = ssub.s32 %s17, 1
      %s23 = ssub.s32 %s17, 2
      %s24 = sadd.s32 %s17, 1
      %s25 = ssub.s32 %s17, %s24
      %p26 = scmp.eq.s32.totalorder %s25, 0
      %s28 = sadd.s32 %s27, 1
      %s29 = scalar_select %p26, %s27, %s28
      %p32 = pneg %p26
      %p33 = scmp.eq.s32.totalorder %s17, 1
      %p34 = por %p32, %p33
      %p35 = scmp.ne.s32.totalorder %s27, %s30
      %p36 = scmp.eq.s32.totalorder %s17, 0
      %p37 = por %p35, %p36
      %p38 = scmp.ne.s32.totalorder %s27, %s30
      %p39 = scmp.eq.s32.totalorder %s22, 1
      %p40 = por %p38, %p39
      %p41 = scmp.ne.s32.totalorder %s30, %s31
      %p42 = scmp.eq.s32.totalorder %s22, 0
      %p43 = por %p41, %p42
      %p44 = scmp.ne.s32.totalorder %s30, %s31
      %p45 = scmp.eq.s32.totalorder %s23, 1
      %p46 = por %p44, %p45
      %p48 = scmp.ne.s32.totalorder %s31, %s47
      %p49 = scmp.eq.s32.totalorder %s23, 0
      %p50 = por %p48, %p49
      %s52 = sadd.s32 %s51, 1
      %p55 = scmp.eq.s32.totalorder %s17, 1
      %p56 = scmp.ne.s32.totalorder %s51, %s53
      %p57 = scmp.eq.s32.totalorder %s17, 0
      %p58 = por %p56, %p57
      %p59 = scmp.ne.s32.totalorder %s51, %s53
      %p60 = scmp.eq.s32.totalorder %s22, 1
      %p61 = por %p59, %p60
      %p62 = scmp.ne.s32.totalorder %s53, %s54
      %p63 = scmp.eq.s32.totalorder %s22, 0
      %p64 = por %p62, %p63
      %p65 = scmp.ne.s32.totalorder %s53, %s54
      %p66 = scmp.eq.s32.totalorder %s23, 1
      %p67 = por %p65, %p66
      %p69 = scmp.ne.s32.totalorder %s54, %s68
      %p70 = scmp.eq.s32.totalorder %s23, 0
      %p71 = por %p69, %p70
      %s73 = sadd.s32 %s72, 1
      %p76 = scmp.eq.s32.totalorder %s17, 1
      %p77 = scmp.ne.s32.totalorder %s72, %s74
      %p78 = scmp.eq.s32.totalorder %s17, 0
      %p79 = por %p77, %p78
      %p80 = scmp.ne.s32.totalorder %s72, %s74
      %p81 = scmp.eq.s32.totalorder %s22, 1
      %p82 = por %p80, %p81
      %p83 = scmp.ne.s32.totalorder %s74, %s75
      %p84 = scmp.eq.s32.totalorder %s22, 0
      %p85 = por %p83, %p84
      %p86 = scmp.ne.s32.totalorder %s74, %s75
      %p87 = scmp.eq.s32.totalorder %s23, 1
      %p88 = por %p86, %p87
      %p90 = scmp.ne.s32.totalorder %s75, %s89
      %p91 = scmp.eq.s32.totalorder %s23, 0
      %p92 = por %p90, %p91
      %s93 = ssub.s32 %s17, %s24
      %p94 = scmp.eq.s32.totalorder %s93, 0
      %s96 = sadd.s32 %s95, 1
      %s97 = scalar_select %p94, %s95, %s96
      %p100 = pneg %p94
      %p101 = scmp.eq.s32.totalorder %s17, 1
      %p102 = por %p100, %p101
      %p103 = scmp.ne.s32.totalorder %s95, %s98
      %p104 = scmp.eq.s32.totalorder %s17, 0
      %p105 = por %p103, %p104
      %p106 = scmp.ne.s32.totalorder %s95, %s98
      %p107 = scmp.eq.s32.totalorder %s22, 1
      %p108 = por %p106, %p107
      %p109 = scmp.ne.s32.totalorder %s98, %s99
      %p110 = scmp.eq.s32.totalorder %s22, 0
      %p111 = por %p109, %p110
      %p112 = scmp.ne.s32.totalorder %s98, %s99
      %p113 = scmp.eq.s32.totalorder %s23, 1
      %p114 = por %p112, %p113
      %p116 = scmp.ne.s32.totalorder %s99, %s115
      %p117 = scmp.eq.s32.totalorder %s23, 0
      %p118 = por %p116, %p117
      %s120 = sadd.s32 %s119, 1
      %p123 = scmp.eq.s32.totalorder %s17, 1
      %p124 = scmp.ne.s32.totalorder %s119, %s121
      %p125 = scmp.eq.s32.totalorder %s17, 0
      %p126 = por %p124, %p125
      %p127 = scmp.ne.s32.totalorder %s119, %s121
      %p128 = scmp.eq.s32.totalorder %s22, 1
      %p129 = por %p127, %p128
      %p130 = scmp.ne.s32.totalorder %s121, %s122
      %p131 = scmp.eq.s32.totalorder %s22, 0
      %p132 = por %p130, %p131
      %p133 = scmp.ne.s32.totalorder %s121, %s122
      %p134 = scmp.eq.s32.totalorder %s23, 1
      %p135 = por %p133, %p134
      %p137 = scmp.ne.s32.totalorder %s122, %s136
      %p138 = scmp.eq.s32.totalorder %s23, 0
      %p139 = por %p137, %p138
      %s141 = sadd.s32 %s140, 1
      %p144 = scmp.eq.s32.totalorder %s17, 1
      %p145 = scmp.ne.s32.totalorder %s140, %s142
      %p146 = scmp.eq.s32.totalorder %s17, 0
      %p147 = por %p145, %p146
      %p148 = scmp.ne.s32.totalorder %s140, %s142
      %p149 = scmp.eq.s32.totalorder %s22, 1
      %p150 = por %p148, %p149
      %p151 = scmp.ne.s32.totalorder %s142, %s143
      %p152 = scmp.eq.s32.totalorder %s22, 0
      %p153 = por %p151, %p152
      %p154 = scmp.ne.s32.totalorder %s142, %s143
      %p155 = scmp.eq.s32.totalorder %s23, 1
      %p156 = por %p154, %p155
      %p158 = scmp.ne.s32.totalorder %s143, %s157
      %p159 = scmp.eq.s32.totalorder %s23, 0
      %p160 = por %p158, %p159
      %s161 = ssub.s32 %s17, %s24
      %p162 = scmp.eq.s32.totalorder %s161, 0
      %s164 = sadd.s32 %s163, 1
      %s165 = scalar_select %p162, %s163, %s164
      %p168 = pneg %p162
      %p169 = scmp.eq.s32.totalorder %s17, 1
      %p170 = por %p168, %p169
      %p171 = scmp.ne.s32.totalorder %s163, %s166
      %p172 = scmp.eq.s32.totalorder %s17, 0
      %p173 = por %p171, %p172
      %p174 = scmp.ne.s32.totalorder %s163, %s166
      %p175 = scmp.eq.s32.totalorder %s22, 1
      %p176 = por %p174, %p175
      %p177 = scmp.ne.s32.totalorder %s166, %s167
      %p178 = scmp.eq.s32.totalorder %s22, 0
      %p179 = por %p177, %p178
      %p180 = scmp.ne.s32.totalorder %s166, %s167
      %p181 = scmp.eq.s32.totalorder %s23, 1
      %p182 = por %p180, %p181
      %p184 = scmp.ne.s32.totalorder %s167, %s183
      %p185 = scmp.eq.s32.totalorder %s23, 0
      %p186 = por %p184, %p185
      %s188 = sadd.s32 %s187, 1
      %p191 = scmp.eq.s32.totalorder %s17, 1
      %p192 = scmp.ne.s32.totalorder %s187, %s189
      %p193 = scmp.eq.s32.totalorder %s17, 0
      %p194 = por %p192, %p193
      %p195 = scmp.ne.s32.totalorder %s187, %s189
      %p196 = scmp.eq.s32.totalorder %s22, 1
      %p197 = por %p195, %p196
      %p198 = scmp.ne.s32.totalorder %s189, %s190
      %p199 = scmp.eq.s32.totalorder %s22, 0
      %p200 = por %p198, %p199
      %p201 = scmp.ne.s32.totalorder %s189, %s190
      %p202 = scmp.eq.s32.totalorder %s23, 1
      %p203 = por %p201, %p202
      %p205 = scmp.ne.s32.totalorder %s190, %s204
      %p206 = scmp.eq.s32.totalorder %s23, 0
      %p207 = por %p205, %p206
      %s209 = sadd.s32 %s208, 1
      %p212 = scmp.eq.s32.totalorder %s17, 1
      %p213 = scmp.ne.s32.totalorder %s208, %s210
      %p214 = scmp.eq.s32.totalorder %s17, 0
      %p215 = por %p213, %p214
      %p216 = scmp.ne.s32.totalorder %s208, %s210
      %p217 = scmp.eq.s32.totalorder %s22, 1
      %p218 = por %p216, %p217
      %p219 = scmp.ne.s32.totalorder %s210, %s211
      %p220 = scmp.eq.s32.totalorder %s22, 0
      %p221 = por %p219, %p220
      %p222 = scmp.ne.s32.totalorder %s210, %s211
      %p223 = scmp.eq.s32.totalorder %s23, 1
      %p224 = por %p222, %p223
      %p226 = scmp.ne.s32.totalorder %s211, %s225
      %p227 = scmp.eq.s32.totalorder %s23, 0
      %p228 = por %p226, %p227
      %p229 = scmp.le.s32.totalorder 1, %s17
      %p230 = scmp.lt.s32.totalorder %s17, 3
      %p231 = pnand %p229, %p230
      %p232 = pneg %p231
      // Predicated region
      $region9: #{bottleneck_forward.4} parent=5 // pred_check
        _
      $region10: #{bottleneck_forward.4} parent=5 // pred_check_branch
        %234 = sbr.rel (%p231) target = $region12
      $region11: #{bottleneck_forward.4} parent=5 // pred_region
        %s235 = ssub.s32 %s17, 1
        // Predicated region
        $region13: #{bottleneck_forward.4} parent=11 // pred_check
          %p236 = pneg %p64
        $region14: #{bottleneck_forward.4} parent=11 // pred_check_branch
          %238 = sbr.rel (%p236) target = $region16
        $region15: #{bottleneck_forward.4} parent=11 // pred_region
          %s240 = ssub.s32 1024, 1024
          %241 = vsyncadd [#allocation3], %s240
          %s242 = sshll.u32 [#allocation2], 4
          %s243 = int_to_ptr.vmem [resolvable:$true] %s242
          %248 = dma.hbm_to_vmem [thread:$0]  %s1, 1024, %s243, [#allocation3], 64, 64, 4
        $region16: #{bottleneck_forward.4} parent=11 // pred_fallthru
          _
        // Predicated region
        $region17: #{bottleneck_forward.4} parent=11 // pred_check
          %p249 = pneg %p85
        $region18: #{bottleneck_forward.4} parent=11 // pred_check_branch
          %251 = sbr.rel (%p249) target = $region20
        $region19: #{bottleneck_forward.4} parent=11 // pred_region
          %s253 = ssub.s32 1024, 1024
          %254 = vsyncadd [#allocation5], %s253
          %s255 = sshll.u32 [#allocation4], 4
          %s256 = int_to_ptr.vmem [resolvable:$true] %s255
          %261 = dma.hbm_to_vmem [thread:$0]  %s2, 1024, %s256, [#allocation5], 64, 64, 4
        $region20: #{bottleneck_forward.4} parent=11 // pred_fallthru
          _
      $region12: #{bottleneck_forward.4} parent=5 // pred_fallthru
        _
      %p262 = scmp.lt.s32.totalorder %s17, 2
      // Predicated region
      $region21: #{bottleneck_forward.4} parent=5 // pred_check
        %p263 = pneg %p262
      $region22: #{bottleneck_forward.4} parent=5 // pred_check_branch
        %265 = sbr.rel (%p263) target = $region24
      $region23: #{bottleneck_forward.4} parent=5 // pred_region
        // Predicated region
        $region25: #{bottleneck_forward.4} parent=23 // pred_check
          %p266 = pneg %p37
        $region26: #{bottleneck_forward.4} parent=23 // pred_check_branch
          %268 = sbr.rel (%p266) target = $region28
        $region27: #{bottleneck_forward.4} parent=23 // pred_region
          %p269 = scmp.lt.s32.totalorder %s17, 1
          %s270 = scalar_select %p269, %s17, 1
          %s271 = smul.addr %s270, 8
          %s272 = smul.addr %s271, 4
          %s273 = scalar_lea.vmem %s0, %s272
        $region28: #{bottleneck_forward.4} parent=23 // pred_fallthru
          _
      $region24: #{bottleneck_forward.4} parent=5 // pred_fallthru
        _
      %p274 = scmp.le.s32.totalorder 1, %s17
      %p275 = scmp.lt.s32.totalorder %s17, 3
      %p276 = pnand %p274, %p275
      %p277 = pneg %p276
      // Predicated region
      $region29: #{bottleneck_forward.4} parent=5 // pred_check
        _
      $region30: #{bottleneck_forward.4} parent=5 // pred_check_branch
        %279 = sbr.rel (%p276) target = $region32
      $region31: #{bottleneck_forward.4} parent=5 // pred_region
        %s280 = ssub.s32 %s17, 1
        // Predicated region
        $region33: #{bottleneck_forward.4} parent=31 // pred_check
          %p281 = pneg %p64
        $region34: #{bottleneck_forward.4} parent=31 // pred_check_branch
          %283 = sbr.rel (%p281) target = $region36
        $region35: #{bottleneck_forward.4} parent=31 // pred_region
          %284 = dma.done [#allocation3], 1024
        $region36: #{bottleneck_forward.4} parent=31 // pred_fallthru
          _
        // Predicated region
        $region37: #{bottleneck_forward.4} parent=31 // pred_check
          %p285 = pneg %p85
        $region38: #{bottleneck_forward.4} parent=31 // pred_check_branch
          %287 = sbr.rel (%p285) target = $region40
        $region39: #{bottleneck_forward.4} parent=31 // pred_region
          %288 = dma.done [#allocation5], 1024
        $region40: #{bottleneck_forward.4} parent=31 // pred_fallthru
          _
        %p289 = scmp.lt.s32.totalorder %s22, 1
        %s290 = scalar_select %p289, %s22, 1
        %s291 = smul.addr %s290, 8
        %s292 = smul.addr %s291, 4
        %s293 = scalar_lea.vmem %s0, %s292
        %p294 = pneg %p43
        %p295 = pneg %p40
        %p296 = pneg %p64
        %p297 = pneg %p61
        %p298 = pneg %p85
        %p299 = pneg %p82
        %p300 = pneg %p111
        %p301 = pneg %p108
        %p302 = scmp.lt.s32.totalorder %s22, 1
        %s303 = scalar_select %p302, %s22, 1
        %s304 = smul.addr %s303, 8
        %s305 = smul.addr %s304, 8
        %s306 = scalar_lea.vmem %s3, %s305
        %p307 = pneg %p132
        %p308 = pneg %p129
        %p309 = pneg %p153
        %p310 = pneg %p150
        %p311 = pneg %p179
        %p312 = pneg %p176
        %p313 = scmp.lt.s32.totalorder %s22, 1
        %s314 = scalar_select %p313, %s22, 1
        %s315 = smul.addr %s314, 4
        %s316 = smul.addr %s315, 4
        %s317 = scalar_lea.vmem %s6, %s316
        %p318 = pneg %p200
        %p319 = pneg %p197
        %p320 = pneg %p221
        %p321 = pneg %p218
        %p322 = scmp.lt.s32.totalorder %s22, 1
        %s323 = scalar_select %p322, %s22, 1
        %s324 = smul.addr %s323, 8
        %s325 = smul.addr %s324, 4
        %s326 = scalar_lea.vmem %s0, %s325
        %p327 = scmp.lt.s32.totalorder %s22, 1
        %s328 = scalar_select %p327, %s22, 1
        %s329 = smul.addr %s328, 8
        %s330 = smul.addr %s329, 8
        %s331 = scalar_lea.vmem %s3, %s330
        %p332 = scmp.lt.s32.totalorder %s22, 1
        %s333 = scalar_select %p332, %s22, 1
        %s334 = smul.addr %s333, 4
        %s335 = smul.addr %s334, 4
        %s336 = scalar_lea.vmem %s6, %s335
        %v338 = vld [vmem:[%s326] sm:$0xf]
        %v339 = vld [vmem:[%s326 + $0x4] sm:$0xf]
        %v340 = vld [vmem:[%s326 + $0x8] sm:$0xf]
        %v341 = vld [vmem:[%s326 + $0xc] sm:$0xf]
        %v342 = vld [vmem:[%s326 + $0x10] sm:$0xf]
        %v343 = vld [vmem:[%s326 + $0x14] sm:$0xf]
        %v344 = vld [vmem:[%s326 + $0x18] sm:$0xf]
        %v345 = vld [vmem:[%s326 + $0x1c] sm:$0xf]
        %v346 = vld [vmem:[#allocation2] sm:$0xf]
        %v347 = vld [vmem:[#allocation2 + $0x4] sm:$0xf]
        %v348 = vld [vmem:[#allocation2 + $0x8] sm:$0xf]
        %v349 = vld [vmem:[#allocation2 + $0xc] sm:$0xf]
        %v350 = vld [vmem:[#allocation2 + $0x10] sm:$0xf]
        %v351 = vld [vmem:[#allocation2 + $0x14] sm:$0xf]
        %v352 = vld [vmem:[#allocation2 + $0x18] sm:$0xf]
        %v353 = vld [vmem:[#allocation2 + $0x1c] sm:$0xf]
        %v354 = vld [vmem:[#allocation2 + $0x20] sm:$0xf]
        %v355 = vld [vmem:[#allocation2 + $0x24] sm:$0xf]
        %v356 = vld [vmem:[#allocation2 + $0x28] sm:$0xf]
        %v357 = vld [vmem:[#allocation2 + $0x2c] sm:$0xf]
        %v358 = vld [vmem:[#allocation2 + $0x30] sm:$0xf]
        %v359 = vld [vmem:[#allocation2 + $0x34] sm:$0xf]
        %v360 = vld [vmem:[#allocation2 + $0x38] sm:$0xf]
        %v361 = vld [vmem:[#allocation2 + $0x3c] sm:$0xf]
        %v370 = vunpack.c.l.b16 %v338
        %v371 = vunpack.c.l.b16 %v339
        %v372 = vunpack.c.l.b16 %v340
        %v373 = vunpack.c.l.b16 %v341
        %v374 = vunpack.c.l.b16 %v342
        %v375 = vunpack.c.l.b16 %v343
        %v376 = vunpack.c.l.b16 %v344
        %v377 = vunpack.c.l.b16 %v345
        %v378 = vpack.c.b16 %v371, %v370
        %v379 = vpack.c.b16 %v373, %v372
        %v380 = vpack.c.b16 %v375, %v374
        %v381 = vpack.c.b16 %v377, %v376
        %v402 = vunpack.c.l.b16 %v346
        %v403 = vunpack.c.l.b16 %v347
        %v404 = vunpack.c.l.b16 %v348
        %v405 = vunpack.c.l.b16 %v349
        %v406 = vunpack.c.l.b16 %v350
        %v407 = vunpack.c.l.b16 %v351
        %v408 = vunpack.c.l.b16 %v352
        %v409 = vunpack.c.l.b16 %v353
        %v410 = vunpack.c.l.b16 %v354
        %v411 = vunpack.c.l.b16 %v355
        %v412 = vunpack.c.l.b16 %v356
        %v413 = vunpack.c.l.b16 %v357
        %v414 = vunpack.c.l.b16 %v358
        %v415 = vunpack.c.l.b16 %v359
        %v416 = vunpack.c.l.b16 %v360
        %v417 = vunpack.c.l.b16 %v361
        %v418 = vpack.c.b16 %v403, %v402
        %v419 = vpack.c.b16 %v405, %v404
        %v420 = vpack.c.b16 %v407, %v406
        %v421 = vpack.c.b16 %v409, %v408
        %v422 = vpack.c.b16 %v411, %v410
        %v423 = vpack.c.b16 %v413, %v412
        %v424 = vpack.c.b16 %v415, %v414
        %v425 = vpack.c.b16 %v417, %v416
        %434 = vmatprep.subr.bf16.mxu0 0
        %435 = vmatpush1.bf16.msra.mxu0 %v418
        %436 = vmatprep.subr.bf16.mxu0 0
        %437 = vmatpush1.bf16.msra.mxu0 %v419
        %438 = vmatprep.subr.bf16.mxu0 0
        %439 = vmatpush1.bf16.msra.mxu0 %v420
        %440 = vmatprep.subr.bf16.mxu0 0
        %441 = vmatpush1.bf16.msra.mxu0 %v421
        %442 = vmatprep.subr.bf16.mxu0 0
        %443 = vmatpush1.bf16.msra.mxu0 %v422
        %444 = vmatprep.subr.bf16.mxu0 0
        %445 = vmatpush1.bf16.msra.mxu0 %v423
        %446 = vmatprep.subr.bf16.mxu0 0
        %447 = vmatpush1.bf16.msra.mxu0 %v424
        %448 = vmatprep.subr.bf16.mxu0 0
        %449 = vmatpush1.bf16.msra.mxu0 %v425
        %450 = vmatprep.subr.bf16.mxu0 0
        %451 = vmatpush1.bf16.msra.mxu0 0
        %452 = vmatprep.subr.bf16.mxu0 0
        %453 = vmatpush1.bf16.msra.mxu0 0
        %454 = vmatprep.subr.bf16.mxu0 0
        %455 = vmatpush1.bf16.msra.mxu0 0
        %456 = vmatprep.subr.bf16.mxu0 0
        %457 = vmatpush1.bf16.msra.mxu0 0
        %458 = vmatprep.subr.bf16.mxu0 0
        %459 = vmatpush1.bf16.msra.mxu0 0
        %460 = vmatprep.subr.bf16.mxu0 0
        %461 = vmatpush1.bf16.msra.mxu0 0
        %462 = vmatprep.subr.bf16.mxu0 0
        %463 = vmatpush1.bf16.msra.mxu0 0
        %464 = vmatprep.subr.bf16.mxu0 0
        %465 = vmatpush1.bf16.msra.mxu0 0
        %466 = vmatprep.mubr.bf16.mxu0 0
        %467 = vmatmul.mubr.bf16.gmra.mrb[0].mxu0 %v378
        %v468 = vpop.f32.mrb[0].mxu0
        %v469 = vadd.f32 0.0, %v468
        %v470 = vpop.f32.mrb[0].mxu0
        %v471 = vpop.f32.mrb[0].mxu0
        %v472 = vadd.f32 0.0, %v471
        %v473 = vpop.f32.mrb[0].mxu0
        %474 = vmatprep.mubr.bf16.mxu0 0
        %475 = vmatmul.mubr.bf16.gmra.mrb[0].mxu0 %v379
        %v476 = vpop.f32.mrb[0].mxu0
        %v477 = vadd.f32 0.0, %v476
        %v478 = vpop.f32.mrb[0].mxu0
        %v479 = vpop.f32.mrb[0].mxu0
        %v480 = vadd.f32 0.0, %v479
        %v481 = vpop.f32.mrb[0].mxu0
        %482 = vmatprep.mubr.bf16.mxu0 0
        %483 = vmatmul.mubr.bf16.gmra.mrb[0].mxu0 %v380
        %v484 = vpop.f32.mrb[0].mxu0
        %v485 = vadd.f32 0.0, %v484
        %v486 = vpop.f32.mrb[0].mxu0
        %v487 = vpop.f32.mrb[0].mxu0
        %v488 = vadd.f32 0.0, %v487
        %v489 = vpop.f32.mrb[0].mxu0
        %490 = vmatprep.mubr.bf16.mxu0 0
        %491 = vmatmul.mubr.bf16.gmra.mrb[0].mxu0 %v381
        %v492 = vpop.f32.mrb[0].mxu0
        %v493 = vadd.f32 0.0, %v492
        %v494 = vpop.f32.mrb[0].mxu0
        %v495 = vpop.f32.mrb[0].mxu0
        %v496 = vadd.f32 0.0, %v495
        %v497 = vpop.f32.mrb[0].mxu0
        %498 = vdwg.mxu0
        %p499 = scmp.eq.s32.totalorder %s22, 0
        // Predicated region
        $region41: #{bottleneck_forward.4} parent=31 // pred_check
          %p500 = pneg %p499
        $region42: #{bottleneck_forward.4} parent=31 // pred_check_branch
          %502 = sbr.rel (%p500) target = $region44
        $region43: #{bottleneck_forward.4} parent=31 // pred_region
          %503 = vst [vmem:[%s4] sm:$0x1] 0.0
          %504 = vst [vmem:[%s5] sm:$0x1] 0.0
          %505 = vst [vmem:[%s7] sm:$0x1] 0.0
          %506 = vst [vmem:[%s8] sm:$0x1] 0.0
        $region44: #{bottleneck_forward.4} parent=31 // pred_fallthru
          _
        %v507 = vld [vmem:[%s4] sm:$0x1]
        %v508 = vadd.f32 %v469, %v472
        %v509 = vadd.f32 %v508, %v477
        %v510 = vadd.f32 %v509, %v480
        %v511 = vadd.f32 %v510, %v485
        %v512 = vadd.f32 %v511, %v488
        %v513 = vadd.f32 %v512, %v493
        %v514 = vadd.f32 %v513, %v496
        %v515 = vrot.slane %v514, 4
        %v516 = vadd.f32 %v514, %v515
        %v517 = vrot.slane %v516, 2
        %v518 = vadd.f32 %v516, %v517
        %v519 = vrot.slane %v518, 1
        %v520 = vadd.f32 %v518, %v519
        %v521 = vadd.f32 %v507, %v520
        %522 = vst [vmem:[%s4] sm:$0x1] %v521
        %v523 = vld [vmem:[%s5] sm:$0x1]
        %v524 = vmul.f32 %v469, %v469
        %v525 = vmul.f32 %v472, %v472
        %v526 = vmul.f32 %v477, %v477
        %v527 = vmul.f32 %v480, %v480
        %v528 = vmul.f32 %v485, %v485
        %v529 = vmul.f32 %v488, %v488
        %v530 = vmul.f32 %v493, %v493
        %v531 = vmul.f32 %v496, %v496
        %v532 = vadd.f32 %v524, %v525
        %v533 = vadd.f32 %v532, %v526
        %v534 = vadd.f32 %v533, %v527
        %v535 = vadd.f32 %v534, %v528
        %v536 = vadd.f32 %v535, %v529
        %v537 = vadd.f32 %v536, %v530
        %v538 = vadd.f32 %v537, %v531
        %v539 = vrot.slane %v538, 4
        %v540 = vadd.f32 %v538, %v539
        %v541 = vrot.slane %v540, 2
        %v542 = vadd.f32 %v540, %v541
        %v543 = vrot.slane %v542, 1
        %v544 = vadd.f32 %v542, %v543
        %v545 = vadd.f32 %v523, %v544
        %546 = vst [vmem:[%s5] sm:$0x1] %v545
        %547 = vst [vmem:[%s331] sm:$0xff] %v469
        %548 = vst [vmem:[%s331 + $0x8] sm:$0xff] %v472
        %549 = vst [vmem:[%s331 + $0x10] sm:$0xff] %v477
        %550 = vst [vmem:[%s331 + $0x18] sm:$0xff] %v480
        %551 = vst [vmem:[%s331 + $0x20] sm:$0xff] %v485
        %552 = vst [vmem:[%s331 + $0x28] sm:$0xff] %v488
        %553 = vst [vmem:[%s331 + $0x30] sm:$0xff] %v493
        %554 = vst [vmem:[%s331 + $0x38] sm:$0xff] %v496
        %v556 = vunpack.c.l.s4 1966171168
        %v557 = vunpack.c.0.s8 %v556
        %v558 = vlaneseq
        %v559 = vshrl.u32 %v558, 7
        %v560 = vsub.s32 %v557, %v559
        %v561 = vrot.slane %v338, %v560
        %v562 = vcombine.high %v561, %v561
        %v564 = vunpack.c.l.s4 1966171168
        %v565 = vunpack.c.0.s8 %v564
        %v566 = vlaneseq
        %v567 = vshrl.u32 %v566, 7
        %v568 = vsub.s32 %v565, %v567
        %v569 = vrot.slane %v561, %v568
        %v571 = vunpack.c.l.s4 1966171168
        %v572 = vunpack.c.0.s8 %v571
        %v573 = vlaneseq
        %v574 = vshrl.u32 %v573, 7
        %v575 = vsub.s32 %v572, %v574
        %v576 = vrot.slane %v562, %v575
        %v577 = vcombine.high %v569, %v569
        %v578 = vcombine.high %v576, %v576
        %v580 = vunpack.c.l.s4 1966171168
        %v581 = vunpack.c.0.s8 %v580
        %v582 = vlaneseq
        %v583 = vshrl.u32 %v582, 7
        %v584 = vsub.s32 %v581, %v583
        %v585 = vrot.slane %v340, %v584
        %v586 = vcombine.high %v585, %v585
        %v588 = vunpack.c.l.s4 1966171168
        %v589 = vunpack.c.0.s8 %v588
        %v590 = vlaneseq
        %v591 = vshrl.u32 %v590, 7
        %v592 = vsub.s32 %v589, %v591
        %v593 = vrot.slane %v585, %v592
        %v595 = vunpack.c.l.s4 1966171168
        %v596 = vunpack.c.0.s8 %v595
        %v597 = vlaneseq
        %v598 = vshrl.u32 %v597, 7
        %v599 = vsub.s32 %v596, %v598
        %v600 = vrot.slane %v586, %v599
        %v601 = vcombine.high %v593, %v593
        %v602 = vcombine.high %v600, %v600
        %v604 = vunpack.c.l.s4 1966171168
        %v605 = vunpack.c.0.s8 %v604
        %v606 = vlaneseq
        %v607 = vshrl.u32 %v606, 7
        %v608 = vsub.s32 %v605, %v607
        %v609 = vrot.slane %v342, %v608
        %v610 = vcombine.high %v609, %v609
        %v612 = vunpack.c.l.s4 1966171168
        %v613 = vunpack.c.0.s8 %v612
        %v614 = vlaneseq
        %v615 = vshrl.u32 %v614, 7
        %v616 = vsub.s32 %v613, %v615
        %v617 = vrot.slane %v609, %v616
        %v619 = vunpack.c.l.s4 1966171168
        %v620 = vunpack.c.0.s8 %v619
        %v621 = vlaneseq
        %v622 = vshrl.u32 %v621, 7
        %v623 = vsub.s32 %v620, %v622
        %v624 = vrot.slane %v610, %v623
        %v625 = vcombine.high %v617, %v617
        %v626 = vcombine.high %v624, %v624
        %v628 = vunpack.c.l.s4 1966171168
        %v629 = vunpack.c.0.s8 %v628
        %v630 = vlaneseq
        %v631 = vshrl.u32 %v630, 7
        %v632 = vsub.s32 %v629, %v631
        %v633 = vrot.slane %v344, %v632
        %v634 = vcombine.high %v633, %v633
        %v636 = vunpack.c.l.s4 1966171168
        %v637 = vunpack.c.0.s8 %v636
        %v638 = vlaneseq
        %v639 = vshrl.u32 %v638, 7
        %v640 = vsub.s32 %v637, %v639
        %v641 = vrot.slane %v633, %v640
        %v643 = vunpack.c.l.s4 1966171168
        %v644 = vunpack.c.0.s8 %v643
        %v645 = vlaneseq
        %v646 = vshrl.u32 %v645, 7
        %v647 = vsub.s32 %v644, %v646
        %v648 = vrot.slane %v634, %v647
        %v649 = vcombine.high %v641, %v641
        %v650 = vcombine.high %v648, %v648
        %v651 = vld [vmem:[#allocation4] sm:$0xf]
        %v652 = vld [vmem:[#allocation4 + $0x4] sm:$0xf]
        %v653 = vld [vmem:[#allocation4 + $0x8] sm:$0xf]
        %v654 = vld [vmem:[#allocation4 + $0xc] sm:$0xf]
        %v655 = vld [vmem:[#allocation4 + $0x10] sm:$0xf]
        %v656 = vld [vmem:[#allocation4 + $0x14] sm:$0xf]
        %v657 = vld [vmem:[#allocation4 + $0x18] sm:$0xf]
        %v658 = vld [vmem:[#allocation4 + $0x1c] sm:$0xf]
        %v659 = vld [vmem:[#allocation4 + $0x20] sm:$0xf]
        %v660 = vld [vmem:[#allocation4 + $0x24] sm:$0xf]
        %v661 = vld [vmem:[#allocation4 + $0x28] sm:$0xf]
        %v662 = vld [vmem:[#allocation4 + $0x2c] sm:$0xf]
        %v663 = vld [vmem:[#allocation4 + $0x30] sm:$0xf]
        %v664 = vld [vmem:[#allocation4 + $0x34] sm:$0xf]
        %v665 = vld [vmem:[#allocation4 + $0x38] sm:$0xf]
        %v666 = vld [vmem:[#allocation4 + $0x3c] sm:$0xf]
        %v668 = vunpack.c.l.s4 1966171168
        %v669 = vunpack.c.0.s8 %v668
        %v670 = vlaneseq
        %v671 = vshrl.u32 %v670, 7
        %v672 = vsub.s32 %v669, %v671
        %v673 = vrot.slane %v569, %v672
        %v675 = vunpack.c.l.s4 1966171168
        %v676 = vunpack.c.0.s8 %v675
        %v677 = vlaneseq
        %v678 = vshrl.u32 %v677, 7
        %v679 = vsub.s32 %v676, %v678
        %v680 = vrot.slane %v673, %v679
        %v682 = vunpack.c.l.s4 1966171168
        %v683 = vunpack.c.0.s8 %v682
        %v684 = vlaneseq
        %v685 = vshrl.u32 %v684, 7
        %v686 = vsub.s32 %v683, %v685
        %v687 = vrot.slane %v576, %v686
        %v689 = vunpack.c.l.s4 1966171168
        %v690 = vunpack.c.0.s8 %v689
        %v691 = vlaneseq
        %v692 = vshrl.u32 %v691, 7
        %v693 = vsub.s32 %v690, %v692
        %v694 = vrot.slane %v687, %v693
        %v696 = vunpack.c.l.s4 1966171168
        %v697 = vunpack.c.0.s8 %v696
        %v698 = vlaneseq
        %v699 = vshrl.u32 %v698, 7
        %v700 = vsub.s32 %v697, %v699
        %v701 = vrot.slane %v577, %v700
        %v703 = vunpack.c.l.s4 1966171168
        %v704 = vunpack.c.0.s8 %v703
        %v705 = vlaneseq
        %v706 = vshrl.u32 %v705, 7
        %v707 = vsub.s32 %v704, %v706
        %v708 = vrot.slane %v701, %v707
        %v710 = vunpack.c.l.s4 1966171168
        %v711 = vunpack.c.0.s8 %v710
        %v712 = vlaneseq
        %v713 = vshrl.u32 %v712, 7
        %v714 = vsub.s32 %v711, %v713
        %v715 = vrot.slane %v578, %v714
        %v717 = vunpack.c.l.s4 1966171168
        %v718 = vunpack.c.0.s8 %v717
        %v719 = vlaneseq
        %v720 = vshrl.u32 %v719, 7
        %v721 = vsub.s32 %v718, %v720
        %v722 = vrot.slane %v715, %v721
        %v724 = vunpack.c.l.s4 1966171168
        %v725 = vunpack.c.0.s8 %v724
        %v726 = vlaneseq
        %v727 = vshrl.u32 %v726, 7
        %v728 = vsub.s32 %v725, %v727
        %v729 = vrot.slane %v593, %v728
        %v731 = vunpack.c.l.s4 1966171168
        %v732 = vunpack.c.0.s8 %v731
        %v733 = vlaneseq
        %v734 = vshrl.u32 %v733, 7
        %v735 = vsub.s32 %v732, %v734
        %v736 = vrot.slane %v729, %v735
        %v738 = vunpack.c.l.s4 1966171168
        %v739 = vunpack.c.0.s8 %v738
        %v740 = vlaneseq
        %v741 = vshrl.u32 %v740, 7
        %v742 = vsub.s32 %v739, %v741
        %v743 = vrot.slane %v600, %v742
        %v745 = vunpack.c.l.s4 1966171168
        %v746 = vunpack.c.0.s8 %v745
        %v747 = vlaneseq
        %v748 = vshrl.u32 %v747, 7
        %v749 = vsub.s32 %v746, %v748
        %v750 = vrot.slane %v743, %v749
        %v752 = vunpack.c.l.s4 1966171168
        %v753 = vunpack.c.0.s8 %v752
        %v754 = vlaneseq
        %v755 = vshrl.u32 %v754, 7
        %v756 = vsub.s32 %v753, %v755
        %v757 = vrot.slane %v601, %v756
        %v759 = vunpack.c.l.s4 1966171168
        %v760 = vunpack.c.0.s8 %v759
        %v761 = vlaneseq
        %v762 = vshrl.u32 %v761, 7
        %v763 = vsub.s32 %v760, %v762
        %v764 = vrot.slane %v757, %v763
        %v766 = vunpack.c.l.s4 1966171168
        %v767 = vunpack.c.0.s8 %v766
        %v768 = vlaneseq
        %v769 = vshrl.u32 %v768, 7
        %v770 = vsub.s32 %v767, %v769
        %v771 = vrot.slane %v602, %v770
        %v773 = vunpack.c.l.s4 1966171168
        %v774 = vunpack.c.0.s8 %v773
        %v775 = vlaneseq
        %v776 = vshrl.u32 %v775, 7
        %v777 = vsub.s32 %v774, %v776
        %v778 = vrot.slane %v771, %v777
        %v780 = vunpack.c.l.s4 1966171168
        %v781 = vunpack.c.0.s8 %v780
        %v782 = vlaneseq
        %v783 = vshrl.u32 %v782, 7
        %v784 = vsub.s32 %v781, %v783
        %v785 = vrot.slane %v617, %v784
        %v787 = vunpack.c.l.s4 1966171168
        %v788 = vunpack.c.0.s8 %v787
        %v789 = vlaneseq
        %v790 = vshrl.u32 %v789, 7
        %v791 = vsub.s32 %v788, %v790
        %v792 = vrot.slane %v785, %v791
        %v794 = vunpack.c.l.s4 1966171168
        %v795 = vunpack.c.0.s8 %v794
        %v796 = vlaneseq
        %v797 = vshrl.u32 %v796, 7
        %v798 = vsub.s32 %v795, %v797
        %v799 = vrot.slane %v624, %v798
        %v801 = vunpack.c.l.s4 1966171168
        %v802 = vunpack.c.0.s8 %v801
        %v803 = vlaneseq
        %v804 = vshrl.u32 %v803, 7
        %v805 = vsub.s32 %v802, %v804
        %v806 = vrot.slane %v799, %v805
        %v808 = vunpack.c.l.s4 1966171168
        %v809 = vunpack.c.0.s8 %v808
        %v810 = vlaneseq
        %v811 = vshrl.u32 %v810, 7
        %v812 = vsub.s32 %v809, %v811
        %v813 = vrot.slane %v625, %v812
        %v815 = vunpack.c.l.s4 1966171168
        %v816 = vunpack.c.0.s8 %v815
        %v817 = vlaneseq
        %v818 = vshrl.u32 %v817, 7
        %v819 = vsub.s32 %v816, %v818
        %v820 = vrot.slane %v813, %v819
        %v822 = vunpack.c.l.s4 1966171168
        %v823 = vunpack.c.0.s8 %v822
        %v824 = vlaneseq
        %v825 = vshrl.u32 %v824, 7
        %v826 = vsub.s32 %v823, %v825
        %v827 = vrot.slane %v626, %v826
        %v829 = vunpack.c.l.s4 1966171168
        %v830 = vunpack.c.0.s8 %v829
        %v831 = vlaneseq
        %v832 = vshrl.u32 %v831, 7
        %v833 = vsub.s32 %v830, %v832
        %v834 = vrot.slane %v827, %v833
        %v836 = vunpack.c.l.s4 1966171168
        %v837 = vunpack.c.0.s8 %v836
        %v838 = vlaneseq
        %v839 = vshrl.u32 %v838, 7
        %v840 = vsub.s32 %v837, %v839
        %v841 = vrot.slane %v641, %v840
        %v843 = vunpack.c.l.s4 1966171168
        %v844 = vunpack.c.0.s8 %v843
        %v845 = vlaneseq
        %v846 = vshrl.u32 %v845, 7
        %v847 = vsub.s32 %v844, %v846
        %v848 = vrot.slane %v841, %v847
        %v850 = vunpack.c.l.s4 1966171168
        %v851 = vunpack.c.0.s8 %v850
        %v852 = vlaneseq
        %v853 = vshrl.u32 %v852, 7
        %v854 = vsub.s32 %v851, %v853
        %v855 = vrot.slane %v648, %v854
        %v857 = vunpack.c.l.s4 1966171168
        %v858 = vunpack.c.0.s8 %v857
        %v859 = vlaneseq
        %v860 = vshrl.u32 %v859, 7
        %v861 = vsub.s32 %v858, %v860
        %v862 = vrot.slane %v855, %v861
        %v864 = vunpack.c.l.s4 1966171168
        %v865 = vunpack.c.0.s8 %v864
        %v866 = vlaneseq
        %v867 = vshrl.u32 %v866, 7
        %v868 = vsub.s32 %v865, %v867
        %v869 = vrot.slane %v649, %v868
        %v871 = vunpack.c.l.s4 1966171168
        %v872 = vunpack.c.0.s8 %v871
        %v873 = vlaneseq
        %v874 = vshrl.u32 %v873, 7
        %v875 = vsub.s32 %v872, %v874
        %v876 = vrot.slane %v869, %v875
        %v878 = vunpack.c.l.s4 1966171168
        %v879 = vunpack.c.0.s8 %v878
        %v880 = vlaneseq
        %v881 = vshrl.u32 %v880, 7
        %v882 = vsub.s32 %v879, %v881
        %v883 = vrot.slane %v650, %v882
        %v885 = vunpack.c.l.s4 1966171168
        %v886 = vunpack.c.0.s8 %v885
        %v887 = vlaneseq
        %v888 = vshrl.u32 %v887, 7
        %v889 = vsub.s32 %v886, %v888
        %v890 = vrot.slane %v883, %v889
        %v891 = vunpack.c.l.b16 %v680
        %v892 = vunpack.c.l.b16 %v694
        %v893 = vunpack.c.l.b16 %v708
        %v894 = vunpack.c.l.b16 %v722
        %v895 = vunpack.c.l.b16 %v736
        %v896 = vunpack.c.l.b16 %v750
        %v897 = vunpack.c.l.b16 %v764
        %v898 = vunpack.c.l.b16 %v778
        %v899 = vunpack.c.l.b16 %v792
        %v900 = vunpack.c.l.b16 %v806
        %v901 = vunpack.c.l.b16 %v820
        %v902 = vunpack.c.l.b16 %v834
        %v903 = vunpack.c.l.b16 %v848
        %v904 = vunpack.c.l.b16 %v862
        %v905 = vunpack.c.l.b16 %v876
        %v906 = vunpack.c.l.b16 %v890
        %v907 = vrot.slane %v892, 7
        %vm908 = vcmask 1041409
        %v909 = vsel %vm908, %v907, %v891
        %v910 = vrot.slane %v893, 6
        %vm911 = vcmask 1042434
        %v912 = vsel %vm911, %v910, %v909
        %v913 = vrot.slane %v894, 5
        %vm914 = vcmask 1043459
        %v915 = vsel %vm914, %v913, %v912
        %v916 = vrot.slane %v895, 4
        %vm917 = vcmask 1044484
        %v918 = vsel %vm917, %v916, %v915
        %v919 = vrot.slane %v896, 3
        %vm920 = vcmask 1045509
        %v921 = vsel %vm920, %v919, %v918
        %v922 = vrot.slane %v897, 2
        %vm923 = vcmask 1046534
        %v924 = vsel %vm923, %v922, %v921
        %v925 = vrot.slane %v898, 1
        %vm926 = vcmask 1047559
        %v927 = vsel %vm926, %v925, %v924
        %v928 = vrot.slane %v900, 7
        %v929 = vsel %vm908, %v928, %v899
        %v930 = vrot.slane %v901, 6
        %v931 = vsel %vm911, %v930, %v929
        %v932 = vrot.slane %v902, 5
        %v933 = vsel %vm914, %v932, %v931
        %v934 = vrot.slane %v903, 4
        %v935 = vsel %vm917, %v934, %v933
        %v936 = vrot.slane %v904, 3
        %v937 = vsel %vm920, %v936, %v935
        %v938 = vrot.slane %v905, 2
        %v939 = vsel %vm923, %v938, %v937
        %v940 = vrot.slane %v906, 1
        %v941 = vsel %vm926, %v940, %v939
        %v942 = vpack.c.b16 %v941, %v927
        %v960 = vunpack.c.l.b16 %v651
        %v961 = vunpack.c.l.b16 %v652
        %v962 = vunpack.c.l.b16 %v653
        %v963 = vunpack.c.l.b16 %v654
        %v964 = vunpack.c.l.b16 %v655
        %v965 = vunpack.c.l.b16 %v656
        %v966 = vunpack.c.l.b16 %v657
        %v967 = vunpack.c.l.b16 %v658
        %v968 = vunpack.c.l.b16 %v659
        %v969 = vunpack.c.l.b16 %v660
        %v970 = vunpack.c.l.b16 %v661
        %v971 = vunpack.c.l.b16 %v662
        %v972 = vunpack.c.l.b16 %v663
        %v973 = vunpack.c.l.b16 %v664
        %v974 = vunpack.c.l.b16 %v665
        %v975 = vunpack.c.l.b16 %v666
        %v976 = vpack.c.b16 %v961, %v960
        %v977 = vpack.c.b16 %v963, %v962
        %v978 = vpack.c.b16 %v965, %v964
        %v979 = vpack.c.b16 %v967, %v966
        %v980 = vpack.c.b16 %v969, %v968
        %v981 = vpack.c.b16 %v971, %v970
        %v982 = vpack.c.b16 %v973, %v972
        %v983 = vpack.c.b16 %v975, %v974
        %992 = vmatprep.subr.bf16.mxu0 0
        %993 = vmatpush1.bf16.msra.mxu0 %v976
        %994 = vmatprep.subr.bf16.mxu0 0
        %995 = vmatpush1.bf16.msra.mxu0 %v977
        %996 = vmatprep.subr.bf16.mxu0 0
        %997 = vmatpush1.bf16.msra.mxu0 %v978
        %998 = vmatprep.subr.bf16.mxu0 0
        %999 = vmatpush1.bf16.msra.mxu0 %v979
        %1000 = vmatprep.subr.bf16.mxu0 0
        %1001 = vmatpush1.bf16.msra.mxu0 %v980
        %1002 = vmatprep.subr.bf16.mxu0 0
        %1003 = vmatpush1.bf16.msra.mxu0 %v981
        %1004 = vmatprep.subr.bf16.mxu0 0
        %1005 = vmatpush1.bf16.msra.mxu0 %v982
        %1006 = vmatprep.subr.bf16.mxu0 0
        %1007 = vmatpush1.bf16.msra.mxu0 %v983
        %1008 = vmatprep.subr.bf16.mxu0 0
        %1009 = vmatpush1.bf16.msra.mxu0 0
        %1010 = vmatprep.subr.bf16.mxu0 0
        %1011 = vmatpush1.bf16.msra.mxu0 0
        %1012 = vmatprep.subr.bf16.mxu0 0
        %1013 = vmatpush1.bf16.msra.mxu0 0
        %1014 = vmatprep.subr.bf16.mxu0 0
        %1015 = vmatpush1.bf16.msra.mxu0 0
        %1016 = vmatprep.subr.bf16.mxu0 0
        %1017 = vmatpush1.bf16.msra.mxu0 0
        %1018 = vmatprep.subr.bf16.mxu0 0
        %1019 = vmatpush1.bf16.msra.mxu0 0
        %1020 = vmatprep.subr.bf16.mxu0 0
        %1021 = vmatpush1.bf16.msra.mxu0 0
        %1022 = vmatprep.subr.bf16.mxu0 0
        %1023 = vmatpush1.bf16.msra.mxu0 0
        %1024 = vmatprep.mubr.bf16.mxu0 0
        %1025 = vmatmul.mubr.bf16.gmra.mrb[0].mxu0 %v942
        %v1026 = vpop.f32.mrb[0].mxu0
        %v1027 = vadd.f32 0.0, %v1026
        %v1028 = vpop.f32.mrb[0].mxu0
        %v1029 = vpop.f32.mrb[0].mxu0
        %v1030 = vadd.f32 0.0, %v1029
        %v1031 = vpop.f32.mrb[0].mxu0
        %1032 = vdwg.mxu0
        %v1033 = vld [vmem:[%s7] sm:$0x1]
        %v1034 = vadd.f32 %v1027, %v1030
        %v1035 = vrot.slane %v1034, 4
        %v1036 = vadd.f32 %v1034, %v1035
        %v1037 = vrot.slane %v1036, 2
        %v1038 = vadd.f32 %v1036, %v1037
        %v1039 = vrot.slane %v1038, 1
        %v1040 = vadd.f32 %v1038, %v1039
        %v1041 = vadd.f32 %v1033, %v1040
        %1042 = vst [vmem:[%s7] sm:$0x1] %v1041
        %v1043 = vld [vmem:[%s8] sm:$0x1]
        %v1044 = vmul.f32 %v1027, %v1027
        %v1045 = vmul.f32 %v1030, %v1030
        %v1046 = vadd.f32 %v1044, %v1045
        %v1047 = vrot.slane %v1046, 4
        %v1048 = vadd.f32 %v1046, %v1047
        %v1049 = vrot.slane %v1048, 2
        %v1050 = vadd.f32 %v1048, %v1049
        %v1051 = vrot.slane %v1050, 1
        %v1052 = vadd.f32 %v1050, %v1051
        %v1053 = vadd.f32 %v1043, %v1052
        %1054 = vst [vmem:[%s8] sm:$0x1] %v1053
        %v1057 = vcombine.high %v1027, %v1027
        %v1058 = vcombine.high %v1030, %v1030
        %1061 = vst [vmem:[%s336] sm:$0xf] %v1027
        %1062 = vst [vmem:[%s336 + $0x4] sm:$0xf] %v1057
        %1063 = vst [vmem:[%s336 + $0x8] sm:$0xf] %v1030
        %1064 = vst [vmem:[%s336 + $0xc] sm:$0xf] %v1058
        %p1065 = scmp.lt.s32.totalorder %s22, 1
        %s1066 = scalar_select %p1065, %s22, 1
        %s1067 = smul.addr %s1066, 8
        %s1068 = smul.addr %s1067, 8
        %s1069 = scalar_lea.vmem %s3, %s1068
        %p1070 = scmp.lt.s32.totalorder %s22, 1
        %s1071 = scalar_select %p1070, %s22, 1
        %s1072 = smul.addr %s1071, 4
        %s1073 = smul.addr %s1072, 4
        %s1074 = scalar_lea.vmem %s6, %s1073
        // Predicated region
        $region45: #{bottleneck_forward.4} parent=31 // pred_check
          %p1075 = pneg %p108
        $region46: #{bottleneck_forward.4} parent=31 // pred_check_branch
          %1077 = sbr.rel (%p1075) target = $region48
        $region47: #{bottleneck_forward.4} parent=31 // pred_region
          _
        $region48: #{bottleneck_forward.4} parent=31 // pred_fallthru
          _
        // Predicated region
        $region49: #{bottleneck_forward.4} parent=31 // pred_check
          %p1078 = pneg %p129
        $region50: #{bottleneck_forward.4} parent=31 // pred_check_branch
          %1080 = sbr.rel (%p1078) target = $region52
        $region51: #{bottleneck_forward.4} parent=31 // pred_region
          _
        $region52: #{bottleneck_forward.4} parent=31 // pred_fallthru
          _
        // Predicated region
        $region53: #{bottleneck_forward.4} parent=31 // pred_check
          %p1081 = pneg %p150
        $region54: #{bottleneck_forward.4} parent=31 // pred_check_branch
          %1083 = sbr.rel (%p1081) target = $region56
        $region55: #{bottleneck_forward.4} parent=31 // pred_region
          _
        $region56: #{bottleneck_forward.4} parent=31 // pred_fallthru
          _
        // Predicated region
        $region57: #{bottleneck_forward.4} parent=31 // pred_check
          %p1084 = pneg %p176
        $region58: #{bottleneck_forward.4} parent=31 // pred_check_branch
          %1086 = sbr.rel (%p1084) target = $region60
        $region59: #{bottleneck_forward.4} parent=31 // pred_region
          _
        $region60: #{bottleneck_forward.4} parent=31 // pred_fallthru
          _
        // Predicated region
        $region61: #{bottleneck_forward.4} parent=31 // pred_check
          %p1087 = pneg %p197
        $region62: #{bottleneck_forward.4} parent=31 // pred_check_branch
          %1089 = sbr.rel (%p1087) target = $region64
        $region63: #{bottleneck_forward.4} parent=31 // pred_region
          _
        $region64: #{bottleneck_forward.4} parent=31 // pred_fallthru
          _
        // Predicated region
        $region65: #{bottleneck_forward.4} parent=31 // pred_check
          %p1090 = pneg %p218
        $region66: #{bottleneck_forward.4} parent=31 // pred_check_branch
          %1092 = sbr.rel (%p1090) target = $region68
        $region67: #{bottleneck_forward.4} parent=31 // pred_region
          _
        $region68: #{bottleneck_forward.4} parent=31 // pred_fallthru
          _
        // Predicated region
        $region69: #{bottleneck_forward.4} parent=31 // pred_check
          %p1093 = pneg %p129
        $region70: #{bottleneck_forward.4} parent=31 // pred_check_branch
          %1095 = sbr.rel (%p1093) target = $region72
        $region71: #{bottleneck_forward.4} parent=31 // pred_region
          _
        $region72: #{bottleneck_forward.4} parent=31 // pred_fallthru
          _
        // Predicated region
        $region73: #{bottleneck_forward.4} parent=31 // pred_check
          %p1096 = pneg %p150
        $region74: #{bottleneck_forward.4} parent=31 // pred_check_branch
          %1098 = sbr.rel (%p1096) target = $region76
        $region75: #{bottleneck_forward.4} parent=31 // pred_region
          _
        $region76: #{bottleneck_forward.4} parent=31 // pred_fallthru
          _
        // Predicated region
        $region77: #{bottleneck_forward.4} parent=31 // pred_check
          %p1099 = pneg %p197
        $region78: #{bottleneck_forward.4} parent=31 // pred_check_branch
          %1101 = sbr.rel (%p1099) target = $region80
        $region79: #{bottleneck_forward.4} parent=31 // pred_region
          _
        $region80: #{bottleneck_forward.4} parent=31 // pred_fallthru
          _
        // Predicated region
        $region81: #{bottleneck_forward.4} parent=31 // pred_check
          %p1102 = pneg %p218
        $region82: #{bottleneck_forward.4} parent=31 // pred_check_branch
          %1104 = sbr.rel (%p1102) target = $region84
        $region83: #{bottleneck_forward.4} parent=31 // pred_region
          _
        $region84: #{bottleneck_forward.4} parent=31 // pred_fallthru
          _
      $region32: #{bottleneck_forward.4} parent=5 // pred_fallthru
        _
      %p1105 = scmp.le.s32.totalorder 2, %s17
      // Predicated region
      $region85: #{bottleneck_forward.4} parent=5 // pred_check
        %p1106 = pneg %p1105
      $region86: #{bottleneck_forward.4} parent=5 // pred_check_branch
        %1108 = sbr.rel (%p1106) target = $region88
      $region87: #{bottleneck_forward.4} parent=5 // pred_region
        %s1109 = ssub.s32 %s17, 2
        // Predicated region
        $region89: #{bottleneck_forward.4} parent=87 // pred_check
          %p1110 = pneg %p114
        $region90: #{bottleneck_forward.4} parent=87 // pred_check_branch
          %1112 = sbr.rel (%p1110) target = $region92
        $region91: #{bottleneck_forward.4} parent=87 // pred_region
          %p1113 = scmp.lt.s32.totalorder %s23, 1
          %s1114 = scalar_select %p1113, %s23, 1
          %s1115 = smul.addr %s1114, 8
          %s1116 = smul.addr %s1115, 8
          %s1117 = scalar_lea.vmem %s3, %s1116
        $region92: #{bottleneck_forward.4} parent=87 // pred_fallthru
          _
        // Predicated region
        $region93: #{bottleneck_forward.4} parent=87 // pred_check
          %p1118 = pneg %p182
        $region94: #{bottleneck_forward.4} parent=87 // pred_check_branch
          %1120 = sbr.rel (%p1118) target = $region96
        $region95: #{bottleneck_forward.4} parent=87 // pred_region
          %p1121 = scmp.lt.s32.totalorder %s23, 1
          %s1122 = scalar_select %p1121, %s23, 1
          %s1123 = smul.addr %s1122, 4
          %s1124 = smul.addr %s1123, 4
          %s1125 = scalar_lea.vmem %s6, %s1124
        $region96: #{bottleneck_forward.4} parent=87 // pred_fallthru
          _
      $region88: #{bottleneck_forward.4} parent=5 // pred_fallthru
        _
    $region6: #{bottleneck_forward.4} parent=1 // loop_footer
      %s21 = sadd.s32 1, %s17
    $region7: #{bottleneck_forward.4} parent=1 // loop_footer_branch
      %16 = sbr.rel target = $region3
    $region8: #{bottleneck_forward.4} parent=1 // loop_exit
      _
    %1126 = vsyncpa [#allocation3], 1
    %s1127 = scalar_lea.sflag [#allocation3], 1
    %1128 = vsyncpa %s1127, 1
    %1129 = vsyncpa [#allocation5], 1

// kernel: bottleneck_forward.5
$region0: #{bottleneck_forward.5}
  #allocation0 [shape = 'u32[]', space=smem, size = 0x4, offset = 0x4, fixed_abs, tag = 'smem constant byte address 0x4 - core index']
  #allocation1 [shape = 'u32[144,128]{1,0:T(1,128)}', space=vmem, size = 0x12000, scoped, tag = 'internal scratch']
  #allocation2 [shape = 'f32[8,8,1152]{2,1,0:T(8,128)}', space=vmem, size = 0x48000, scoped, tag = 'scratch operand']
  %s0 = inlined_call_operand.vmem [shape: f32[2,8,8,128], index: 0, kind: input, shape index: {}]
  %s1 = inlined_call_operand.vmem [shape: f32[1,128], index: 1, kind: input, shape index: {}]
  %s2 = inlined_call_operand.vmem [shape: f32[1,128], index: 2, kind: input, shape index: {}]
  %s3 = inlined_call_operand.vmem [shape: bf16[1152,128], index: 3, kind: input, shape index: {}]
  %s4 = inlined_call_operand.vmem [shape: f32[2,4,4,128], index: 4, kind: output, shape index: {0}]
  %s5 = inlined_call_operand.vmem [shape: f32[1,128], index: 5, kind: output, shape index: {1}]
  %s6 = inlined_call_operand.vmem [shape: f32[1,128], index: 6, kind: output, shape index: {2}]
  %7 = xla_tuple %s4, %s5, %s6
  %s8 = sld [smem:[#allocation0]]
  $region69: #{bottleneck_forward.5} parent=0
    _
  %s10 = ssub.s32 1, %s8
  %s11 = scalar_select 0, %s10, %s8
  loop: start=0, step=1, limit=4
  $region2: #{bottleneck_forward.5} parent=0 // loop_pre_header
    _
  $region3: #{bottleneck_forward.5} parent=0 // loop_header
    %s13 = sphi 0, %s17
    %p14 = scmp.ge.s32.totalorder %s13, 4
    %s23 = sphi 0, %s25
    %s26 = sphi 0, %s23
    %s27 = sphi 0, %s26
    %s43 = sphi 0, %s27
    %s47 = sphi 0, %s47
    %s49 = sphi 0, %s47
    %s50 = sphi 0, %s49
    %s64 = sphi 0, %s50
    %s68 = sphi 0, %s68
    %s70 = sphi 0, %s68
    %s71 = sphi 0, %s70
    %s85 = sphi 0, %s71
    %s89 = sphi 0, %s89
    %s91 = sphi 0, %s89
    %s92 = sphi 0, %s91
    %s106 = sphi 0, %s92
    %s112 = sphi 0, %s114
    %s115 = sphi 0, %s112
    %s116 = sphi 0, %s115
    %s132 = sphi 0, %s116
    %s136 = sphi 0, %s136
    %s138 = sphi 0, %s136
    %s139 = sphi 0, %s138
    %s153 = sphi 0, %s139
    %s157 = sphi 0, %s157
    %s159 = sphi 0, %s157
    %s160 = sphi 0, %s159
    %s174 = sphi 0, %s160
  $region4: #{bottleneck_forward.5} parent=0 // loop_header_branch
    %16 = sbr.rel (%p14) target = $region8
  $region5: #{bottleneck_forward.5} parent=0 // loop_body
    %s18 = ssub.s32 %s13, 1
    %s19 = ssub.s32 %s13, 2
    %s20 = sadd.s32 %s13, 1
    %s21 = ssub.s32 %s13, %s20
    %p22 = scmp.eq.s32.totalorder %s21, 0
    %s24 = sadd.s32 %s23, 1
    %s25 = scalar_select %p22, %s23, %s24
    %p28 = pneg %p22
    %p29 = scmp.eq.s32.totalorder %s13, 1
    %p30 = por %p28, %p29
    %p31 = scmp.ne.s32.totalorder %s23, %s26
    %p32 = scmp.eq.s32.totalorder %s13, 0
    %p33 = por %p31, %p32
    %p34 = scmp.ne.s32.totalorder %s23, %s26
    %p35 = scmp.eq.s32.totalorder %s18, 1
    %p36 = por %p34, %p35
    %p37 = scmp.ne.s32.totalorder %s26, %s27
    %p38 = scmp.eq.s32.totalorder %s18, 0
    %p39 = por %p37, %p38
    %p40 = scmp.ne.s32.totalorder %s26, %s27
    %p41 = scmp.eq.s32.totalorder %s19, 1
    %p42 = por %p40, %p41
    %p44 = scmp.ne.s32.totalorder %s27, %s43
    %p45 = scmp.eq.s32.totalorder %s19, 0
    %p46 = por %p44, %p45
    %s48 = sadd.s32 %s47, 1
    %p51 = scmp.eq.s32.totalorder %s13, 1
    %p52 = scmp.ne.s32.totalorder %s47, %s49
    %p53 = scmp.eq.s32.totalorder %s13, 0
    %p54 = por %p52, %p53
    %p55 = scmp.ne.s32.totalorder %s47, %s49
    %p56 = scmp.eq.s32.totalorder %s18, 1
    %p57 = por %p55, %p56
    %p58 = scmp.ne.s32.totalorder %s49, %s50
    %p59 = scmp.eq.s32.totalorder %s18, 0
    %p60 = por %p58, %p59
    %p61 = scmp.ne.s32.totalorder %s49, %s50
    %p62 = scmp.eq.s32.totalorder %s19, 1
    %p63 = por %p61, %p62
    %p65 = scmp.ne.s32.totalorder %s50, %s64
    %p66 = scmp.eq.s32.totalorder %s19, 0
    %p67 = por %p65, %p66
    %s69 = sadd.s32 %s68, 1
    %p72 = scmp.eq.s32.totalorder %s13, 1
    %p73 = scmp.ne.s32.totalorder %s68, %s70
    %p74 = scmp.eq.s32.totalorder %s13, 0
    %p75 = por %p73, %p74
    %p76 = scmp.ne.s32.totalorder %s68, %s70
    %p77 = scmp.eq.s32.totalorder %s18, 1
    %p78 = por %p76, %p77
    %p79 = scmp.ne.s32.totalorder %s70, %s71
    %p80 = scmp.eq.s32.totalorder %s18, 0
    %p81 = por %p79, %p80
    %p82 = scmp.ne.s32.totalorder %s70, %s71
    %p83 = scmp.eq.s32.totalorder %s19, 1
    %p84 = por %p82, %p83
    %p86 = scmp.ne.s32.totalorder %s71, %s85
    %p87 = scmp.eq.s32.totalorder %s19, 0
    %p88 = por %p86, %p87
    %s90 = sadd.s32 %s89, 1
    %p93 = scmp.eq.s32.totalorder %s13, 1
    %p94 = scmp.ne.s32.totalorder %s89, %s91
    %p95 = scmp.eq.s32.totalorder %s13, 0
    %p96 = por %p94, %p95
    %p97 = scmp.ne.s32.totalorder %s89, %s91
    %p98 = scmp.eq.s32.totalorder %s18, 1
    %p99 = por %p97, %p98
    %p100 = scmp.ne.s32.totalorder %s91, %s92
    %p101 = scmp.eq.s32.totalorder %s18, 0
    %p102 = por %p100, %p101
    %p103 = scmp.ne.s32.totalorder %s91, %s92
    %p104 = scmp.eq.s32.totalorder %s19, 1
    %p105 = por %p103, %p104
    %p107 = scmp.ne.s32.totalorder %s92, %s106
    %p108 = scmp.eq.s32.totalorder %s19, 0
    %p109 = por %p107, %p108
    %s110 = ssub.s32 %s13, %s20
    %p111 = scmp.eq.s32.totalorder %s110, 0
    %s113 = sadd.s32 %s112, 1
    %s114 = scalar_select %p111, %s112, %s113
    %p117 = pneg %p111
    %p118 = scmp.eq.s32.totalorder %s13, 1
    %p119 = por %p117, %p118
    %p120 = scmp.ne.s32.totalorder %s112, %s115
    %p121 = scmp.eq.s32.totalorder %s13, 0
    %p122 = por %p120, %p121
    %p123 = scmp.ne.s32.totalorder %s112, %s115
    %p124 = scmp.eq.s32.totalorder %s18, 1
    %p125 = por %p123, %p124
    %p126 = scmp.ne.s32.totalorder %s115, %s116
    %p127 = scmp.eq.s32.totalorder %s18, 0
    %p128 = por %p126, %p127
    %p129 = scmp.ne.s32.totalorder %s115, %s116
    %p130 = scmp.eq.s32.totalorder %s19, 1
    %p131 = por %p129, %p130
    %p133 = scmp.ne.s32.totalorder %s116, %s132
    %p134 = scmp.eq.s32.totalorder %s19, 0
    %p135 = por %p133, %p134
    %s137 = sadd.s32 %s136, 1
    %p140 = scmp.eq.s32.totalorder %s13, 1
    %p141 = scmp.ne.s32.totalorder %s136, %s138
    %p142 = scmp.eq.s32.totalorder %s13, 0
    %p143 = por %p141, %p142
    %p144 = scmp.ne.s32.totalorder %s136, %s138
    %p145 = scmp.eq.s32.totalorder %s18, 1
    %p146 = por %p144, %p145
    %p147 = scmp.ne.s32.totalorder %s138, %s139
    %p148 = scmp.eq.s32.totalorder %s18, 0
    %p149 = por %p147, %p148
    %p150 = scmp.ne.s32.totalorder %s138, %s139
    %p151 = scmp.eq.s32.totalorder %s19, 1
    %p152 = por %p150, %p151
    %p154 = scmp.ne.s32.totalorder %s139, %s153
    %p155 = scmp.eq.s32.totalorder %s19, 0
    %p156 = por %p154, %p155
    %s158 = sadd.s32 %s157, 1
    %p161 = scmp.eq.s32.totalorder %s13, 1
    %p162 = scmp.ne.s32.totalorder %s157, %s159
    %p163 = scmp.eq.s32.totalorder %s13, 0
    %p164 = por %p162, %p163
    %p165 = scmp.ne.s32.totalorder %s157, %s159
    %p166 = scmp.eq.s32.totalorder %s18, 1
    %p167 = por %p165, %p166
    %p168 = scmp.ne.s32.totalorder %s159, %s160
    %p169 = scmp.eq.s32.totalorder %s18, 0
    %p170 = por %p168, %p169
    %p171 = scmp.ne.s32.totalorder %s159, %s160
    %p172 = scmp.eq.s32.totalorder %s19, 1
    %p173 = por %p171, %p172
    %p175 = scmp.ne.s32.totalorder %s160, %s174
    %p176 = scmp.eq.s32.totalorder %s19, 0
    %p177 = por %p175, %p176
    %p178 = scmp.le.s32.totalorder 1, %s13
    %p179 = scmp.lt.s32.totalorder %s13, 3
    %p180 = pnand %p178, %p179
    %p181 = pneg %p180
    // Predicated region
    $region9: #{bottleneck_forward.5} parent=5 // pred_check
      _
    $region10: #{bottleneck_forward.5} parent=5 // pred_check_branch
      %183 = sbr.rel (%p180) target = $region12
    $region11: #{bottleneck_forward.5} parent=5 // pred_region
      %s184 = ssub.s32 %s13, 1
      // Predicated region
      $region13: #{bottleneck_forward.5} parent=11 // pred_check
        %p185 = pneg %p60
      $region14: #{bottleneck_forward.5} parent=11 // pred_check_branch
        %187 = sbr.rel (%p185) target = $region16
      $region15: #{bottleneck_forward.5} parent=11 // pred_region
        _
      $region16: #{bottleneck_forward.5} parent=11 // pred_fallthru
        _
      // Predicated region
      $region17: #{bottleneck_forward.5} parent=11 // pred_check
        %p188 = pneg %p81
      $region18: #{bottleneck_forward.5} parent=11 // pred_check_branch
        %190 = sbr.rel (%p188) target = $region20
      $region19: #{bottleneck_forward.5} parent=11 // pred_region
        _
      $region20: #{bottleneck_forward.5} parent=11 // pred_fallthru
        _
      // Predicated region
      $region21: #{bottleneck_forward.5} parent=11 // pred_check
        %p191 = pneg %p102
      $region22: #{bottleneck_forward.5} parent=11 // pred_check_branch
        %193 = sbr.rel (%p191) target = $region24
      $region23: #{bottleneck_forward.5} parent=11 // pred_region
        _
      $region24: #{bottleneck_forward.5} parent=11 // pred_fallthru
        _
    $region12: #{bottleneck_forward.5} parent=5 // pred_fallthru
      _
    %p194 = scmp.lt.s32.totalorder %s13, 2
    // Predicated region
    $region25: #{bottleneck_forward.5} parent=5 // pred_check
      %p195 = pneg %p194
    $region26: #{bottleneck_forward.5} parent=5 // pred_check_branch
      %197 = sbr.rel (%p195) target = $region28
    $region27: #{bottleneck_forward.5} parent=5 // pred_region
      // Predicated region
      $region29: #{bottleneck_forward.5} parent=27 // pred_check
        %p198 = pneg %p33
      $region30: #{bottleneck_forward.5} parent=27 // pred_check_branch
        %200 = sbr.rel (%p198) target = $region32
      $region31: #{bottleneck_forward.5} parent=27 // pred_region
        %p201 = scmp.lt.s32.totalorder %s13, 1
        %s202 = scalar_select %p201, %s13, 1
        %s203 = smul.addr %s202, 8
        %s204 = smul.addr %s203, 8
        %s205 = scalar_lea.vmem %s0, %s204
      $region32: #{bottleneck_forward.5} parent=27 // pred_fallthru
        _
    $region28: #{bottleneck_forward.5} parent=5 // pred_fallthru
      _
    %p206 = scmp.le.s32.totalorder 1, %s13
    %p207 = scmp.lt.s32.totalorder %s13, 3
    %p208 = pnand %p206, %p207
    %p209 = pneg %p208
    // Predicated region
    $region33: #{bottleneck_forward.5} parent=5 // pred_check
      _
    $region34: #{bottleneck_forward.5} parent=5 // pred_check_branch
      %211 = sbr.rel (%p208) target = $region36
    $region35: #{bottleneck_forward.5} parent=5 // pred_region
      %s212 = ssub.s32 %s13, 1
      %p213 = scmp.lt.s32.totalorder %s18, 1
      %s214 = scalar_select %p213, %s18, 1
      %s215 = smul.addr %s214, 8
      %s216 = smul.addr %s215, 8
      %s217 = scalar_lea.vmem %s0, %s216
      %p218 = pneg %p39
      %p219 = pneg %p36
      %p220 = pneg %p60
      %p221 = pneg %p57
      %p222 = pneg %p81
      %p223 = pneg %p78
      %p224 = pneg %p102
      %p225 = pneg %p99
      %p226 = pneg %p128
      %p227 = pneg %p125
      %p228 = scmp.lt.s32.totalorder %s18, 1
      %s229 = scalar_select %p228, %s18, 1
      %s230 = smul.addr %s229, 4
      %s231 = smul.addr %s230, 4
      %s232 = scalar_lea.vmem %s4, %s231
      %p233 = pneg %p149
      %p234 = pneg %p146
      %p235 = pneg %p170
      %p236 = pneg %p167
      %p237 = scmp.lt.s32.totalorder %s18, 1
      %s238 = scalar_select %p237, %s18, 1
      %s239 = smul.addr %s238, 8
      %s240 = smul.addr %s239, 8
      %s241 = scalar_lea.vmem %s0, %s240
      %p242 = scmp.lt.s32.totalorder %s18, 1
      %s243 = scalar_select %p242, %s18, 1
      %s244 = smul.addr %s243, 4
      %s245 = smul.addr %s244, 4
      %s246 = scalar_lea.vmem %s4, %s245
      %v248 = vld [vmem:[%s241] sm:$0xff]
      %v249 = vld [vmem:[%s241 + $0x8] sm:$0xff]
      %v250 = vld [vmem:[%s241 + $0x10] sm:$0xff]
      %v251 = vld [vmem:[%s241 + $0x18] sm:$0xff]
      %v252 = vld [vmem:[%s241 + $0x20] sm:$0xff]
      %v253 = vld [vmem:[%s241 + $0x28] sm:$0xff]
      %v254 = vld [vmem:[%s241 + $0x30] sm:$0xff]
      %v255 = vld [vmem:[%s241 + $0x38] sm:$0xff]
      %v256 = vld [vmem:[%s1] sm:$0x1]
      %v258 = vlaneseq
      %v259 = vshrl.u32 %v258, 7
      %v260 = vsub.s32 0, %v259
      %v261 = vrot.slane %v256, %v260
      %v263 = vmul.f32 %v248, %v261
      %v264 = vmul.f32 %v249, %v261
      %v265 = vmul.f32 %v250, %v261
      %v266 = vmul.f32 %v251, %v261
      %v267 = vmul.f32 %v252, %v261
      %v268 = vmul.f32 %v253, %v261
      %v269 = vmul.f32 %v254, %v261
      %v270 = vmul.f32 %v255, %v261
      %v271 = vld [vmem:[%s2] sm:$0x1]
      %v273 = vlaneseq
      %v274 = vshrl.u32 %v273, 7
      %v275 = vsub.s32 0, %v274
      %v276 = vrot.slane %v271, %v275
      %v278 = vadd.f32 %v263, %v276
      %v279 = vadd.f32 %v264, %v276
      %v280 = vadd.f32 %v265, %v276
      %v281 = vadd.f32 %v266, %v276
      %v282 = vadd.f32 %v267, %v276
      %v283 = vadd.f32 %v268, %v276
      %v284 = vadd.f32 %v269, %v276
      %v285 = vadd.f32 %v270, %v276
      %v286 = vmax.f32 %v278, 0.0
      %v287 = vmax.f32 %v279, 0.0
      %v288 = vmax.f32 %v280, 0.0
      %v289 = vmax.f32 %v281, 0.0
      %v290 = vmax.f32 %v282, 0.0
      %v291 = vmax.f32 %v283, 0.0
      %v292 = vmax.f32 %v284, 0.0
      %v293 = vmax.f32 %v285, 0.0
      %294 = vst [vmem:[#allocation2] sm:$0xff] 0.0
      %295 = vst [vmem:[#allocation2 + $0x8] sm:$0xff] 0.0
      %296 = vst [vmem:[#allocation2 + $0x10] sm:$0xff] 0.0
      %297 = vst [vmem:[#allocation2 + $0x18] sm:$0xff] 0.0
      %298 = vst [vmem:[#allocation2 + $0x20] sm:$0xff] 0.0
      %299 = vst [vmem:[#allocation2 + $0x28] sm:$0xff] 0.0
      %300 = vst [vmem:[#allocation2 + $0x30] sm:$0xff] 0.0
      %301 = vst [vmem:[#allocation2 + $0x38] sm:$0xff] 0.0
      %302 = vst [vmem:[#allocation2 + $0x40] sm:$0xff] 0.0
      %303 = vst [vmem:[#allocation2 + $0x48] sm:$0xff] 0.0
      %304 = vst [vmem:[#allocation2 + $0x50] sm:$0xff] 0.0
      %305 = vst [vmem:[#allocation2 + $0x58] sm:$0xff] 0.0
      %306 = vst [vmem:[#allocation2 + $0x60] sm:$0xff] 0.0
      %307 = vst [vmem:[#allocation2 + $0x68] sm:$0xff] 0.0
      %308 = vst [vmem:[#allocation2 + $0x70] sm:$0xff] 0.0
      %309 = vst [vmem:[#allocation2 + $0x78] sm:$0xff] 0.0
      %310 = vst [vmem:[#allocation2 + $0x80] sm:$0xff] 0.0
      %311 = vst [vmem:[#allocation2 + $0x88] sm:$0xff] 0.0
      %312 = vst [vmem:[#allocation2 + $0x90] sm:$0xff] 0.0
      %313 = vst [vmem:[#allocation2 + $0x98] sm:$0xff] 0.0
      %314 = vst [vmem:[#allocation2 + $0xa0] sm:$0xff] 0.0
      %315 = vst [vmem:[#allocation2 + $0xa8] sm:$0xff] 0.0
      %316 = vst [vmem:[#allocation2 + $0xb0] sm:$0xff] 0.0
      %317 = vst [vmem:[#allocation2 + $0xb8] sm:$0xff] 0.0
      %318 = vst [vmem:[#allocation2 + $0xc0] sm:$0xff] 0.0
      %319 = vst [vmem:[#allocation2 + $0xc8] sm:$0xff] 0.0
      %320 = vst [vmem:[#allocation2 + $0xd0] sm:$0xff] 0.0
      %321 = vst [vmem:[#allocation2 + $0xd8] sm:$0xff] 0.0
      %322 = vst [vmem:[#allocation2 + $0xe0] sm:$0xff] 0.0
      %323 = vst [vmem:[#allocation2 + $0xe8] sm:$0xff] 0.0
      %324 = vst [vmem:[#allocation2 + $0xf0] sm:$0xff] 0.0
      %325 = vst [vmem:[#allocation2 + $0xf8] sm:$0xff] 0.0
      %326 = vst [vmem:[#allocation2 + $0x100] sm:$0xff] 0.0
      %327 = vst [vmem:[#allocation2 + $0x108] sm:$0xff] 0.0
      %328 = vst [vmem:[#allocation2 + $0x110] sm:$0xff] 0.0
      %329 = vst [vmem:[#allocation2 + $0x118] sm:$0xff] 0.0
      %330 = vst [vmem:[#allocation2 + $0x120] sm:$0xff] 0.0
      %331 = vst [vmem:[#allocation2 + $0x128] sm:$0xff] 0.0
      %332 = vst [vmem:[#allocation2 + $0x130] sm:$0xff] 0.0
      %333 = vst [vmem:[#allocation2 + $0x138] sm:$0xff] 0.0
      %334 = vst [vmem:[#allocation2 + $0x140] sm:$0xff] 0.0
      %335 = vst [vmem:[#allocation2 + $0x148] sm:$0xff] 0.0
      %336 = vst [vmem:[#allocation2 + $0x150] sm:$0xff] 0.0
      %337 = vst [vmem:[#allocation2 + $0x158] sm:$0xff] 0.0
      %338 = vst [vmem:[#allocation2 + $0x160] sm:$0xff] 0.0
      %339 = vst [vmem:[#allocation2 + $0x168] sm:$0xff] 0.0
      %340 = vst [vmem:[#allocation2 + $0x170] sm:$0xff] 0.0
      %341 = vst [vmem:[#allocation2 + $0x178] sm:$0xff] 0.0
      %342 = vst [vmem:[#allocation2 + $0x180] sm:$0xff] 0.0
      %343 = vst [vmem:[#allocation2 + $0x188] sm:$0xff] 0.0
      %344 = vst [vmem:[#allocation2 + $0x190] sm:$0xff] 0.0
      %345 = vst [vmem:[#allocation2 + $0x198] sm:$0xff] 0.0
      %346 = vst [vmem:[#allocation2 + $0x1a0] sm:$0xff] 0.0
      %347 = vst [vmem:[#allocation2 + $0x1a8] sm:$0xff] 0.0
      %348 = vst [vmem:[#allocation2 + $0x1b0] sm:$0xff] 0.0
      %349 = vst [vmem:[#allocation2 + $0x1b8] sm:$0xff] 0.0
      %350 = vst [vmem:[#allocation2 + $0x1c0] sm:$0xff] 0.0
      %351 = vst [vmem:[#allocation2 + $0x1c8] sm:$0xff] 0.0
      %352 = vst [vmem:[#allocation2 + $0x1d0] sm:$0xff] 0.0
      %353 = vst [vmem:[#allocation2 + $0x1d8] sm:$0xff] 0.0
      %354 = vst [vmem:[#allocation2 + $0x1e0] sm:$0xff] 0.0
      %355 = vst [vmem:[#allocation2 + $0x1e8] sm:$0xff] 0.0
      %356 = vst [vmem:[#allocation2 + $0x1f0] sm:$0xff] 0.0
      %357 = vst [vmem:[#allocation2 + $0x1f8] sm:$0xff] 0.0
      %358 = vst [vmem:[#allocation2 + $0x200] sm:$0xff] 0.0
      %359 = vst [vmem:[#allocation2 + $0x208] sm:$0xff] 0.0
      %360 = vst [vmem:[#allocation2 + $0x210] sm:$0xff] 0.0
      %361 = vst [vmem:[#allocation2 + $0x218] sm:$0xff] 0.0
      %362 = vst [vmem:[#allocation2 + $0x220] sm:$0xff] 0.0
      %363 = vst [vmem:[#allocation2 + $0x228] sm:$0xff] 0.0
      %364 = vst [vmem:[#allocation2 + $0x230] sm:$0xff] 0.0
      %365 = vst [vmem:[#allocation2 + $0x238] sm:$0xff] 0.0
      %v373 = vrot.slane %v286, 7
      %v374 = vrot.slane %v287, 7
      %v375 = vrot.slane %v288, 7
      %v376 = vrot.slane %v289, 7
      %v377 = vrot.slane %v290, 7
      %v378 = vrot.slane %v291, 7
      %v379 = vrot.slane %v292, 7
      %s387 = scalar_lea.vmem [#allocation2], 72
      %388 = vst [vmem:[%s387] sm:$0xfe] %v373
      %389 = vst [vmem:[%s387 + $0x48] sm:$0xfe] %v374
      %390 = vst [vmem:[%s387 + $0x90] sm:$0xfe] %v375
      %391 = vst [vmem:[%s387 + $0xd8] sm:$0xfe] %v376
      %392 = vst [vmem:[%s387 + $0x120] sm:$0xfe] %v377
      %393 = vst [vmem:[%s387 + $0x168] sm:$0xfe] %v378
      %394 = vst [vmem:[%s387 + $0x1b0] sm:$0xfe] %v379
      %395 = vst [vmem:[%s387 + $0x8] sm:$0xff] %v286
      %396 = vst [vmem:[%s387 + $0x50] sm:$0xff] %v287
      %397 = vst [vmem:[%s387 + $0x98] sm:$0xff] %v288
      %398 = vst [vmem:[%s387 + $0xe0] sm:$0xff] %v289
      %399 = vst [vmem:[%s387 + $0x128] sm:$0xff] %v290
      %400 = vst [vmem:[%s387 + $0x170] sm:$0xff] %v291
      %401 = vst [vmem:[%s387 + $0x1b8] sm:$0xff] %v292
      %v402 = vrot.slane %v286, 1
      %v403 = vrot.slane %v287, 1
      %v404 = vrot.slane %v288, 1
      %v405 = vrot.slane %v289, 1
      %v406 = vrot.slane %v290, 1
      %v407 = vrot.slane %v291, 1
      %v408 = vrot.slane %v292, 1
      %416 = vst [vmem:[%s387 + $0x10] sm:$0x7f] %v402
      %417 = vst [vmem:[%s387 + $0x58] sm:$0x7f] %v403
      %418 = vst [vmem:[%s387 + $0xa0] sm:$0x7f] %v404
      %419 = vst [vmem:[%s387 + $0xe8] sm:$0x7f] %v405
      %420 = vst [vmem:[%s387 + $0x130] sm:$0x7f] %v406
      %421 = vst [vmem:[%s387 + $0x178] sm:$0x7f] %v407
      %422 = vst [vmem:[%s387 + $0x1c0] sm:$0x7f] %v408
      %v424 = vrot.slane %v293, 7
      %426 = vst [vmem:[#allocation2 + $0x18] sm:$0xfe] %v373
      %427 = vst [vmem:[#allocation2 + $0x60] sm:$0xfe] %v374
      %428 = vst [vmem:[#allocation2 + $0xa8] sm:$0xfe] %v375
      %429 = vst [vmem:[#allocation2 + $0xf0] sm:$0xfe] %v376
      %430 = vst [vmem:[#allocation2 + $0x138] sm:$0xfe] %v377
      %431 = vst [vmem:[#allocation2 + $0x180] sm:$0xfe] %v378
      %432 = vst [vmem:[#allocation2 + $0x1c8] sm:$0xfe] %v379
      %433 = vst [vmem:[#allocation2 + $0x210] sm:$0xfe] %v424
      %434 = vst [vmem:[#allocation2 + $0x20] sm:$0xff] %v286
      %435 = vst [vmem:[#allocation2 + $0x68] sm:$0xff] %v287
      %436 = vst [vmem:[#allocation2 + $0xb0] sm:$0xff] %v288
      %437 = vst [vmem:[#allocation2 + $0xf8] sm:$0xff] %v289
      %438 = vst [vmem:[#allocation2 + $0x140] sm:$0xff] %v290
      %439 = vst [vmem:[#allocation2 + $0x188] sm:$0xff] %v291
      %440 = vst [vmem:[#allocation2 + $0x1d0] sm:$0xff] %v292
      %441 = vst [vmem:[#allocation2 + $0x218] sm:$0xff] %v293
      %v442 = vrot.slane %v293, 1
      %444 = vst [vmem:[#allocation2 + $0x28] sm:$0x7f] %v402
      %445 = vst [vmem:[#allocation2 + $0x70] sm:$0x7f] %v403
      %446 = vst [vmem:[#allocation2 + $0xb8] sm:$0x7f] %v404
      %447 = vst [vmem:[#allocation2 + $0x100] sm:$0x7f] %v405
      %448 = vst [vmem:[#allocation2 + $0x148] sm:$0x7f] %v406
      %449 = vst [vmem:[#allocation2 + $0x190] sm:$0x7f] %v407
      %450 = vst [vmem:[#allocation2 + $0x1d8] sm:$0x7f] %v408
      %451 = vst [vmem:[#allocation2 + $0x220] sm:$0x7f] %v442
      %452 = vst [vmem:[#allocation2 + $0x30] sm:$0xfe] %v374
      %453 = vst [vmem:[#allocation2 + $0x78] sm:$0xfe] %v375
      %454 = vst [vmem:[#allocation2 + $0xc0] sm:$0xfe] %v376
      %455 = vst [vmem:[#allocation2 + $0x108] sm:$0xfe] %v377
      %456 = vst [vmem:[#allocation2 + $0x150] sm:$0xfe] %v378
      %457 = vst [vmem:[#allocation2 + $0x198] sm:$0xfe] %v379
      %458 = vst [vmem:[#allocation2 + $0x1e0] sm:$0xfe] %v424
      %459 = vst [vmem:[#allocation2 + $0x38] sm:$0xff] %v287
      %460 = vst [vmem:[#allocation2 + $0x80] sm:$0xff] %v288
      %461 = vst [vmem:[#allocation2 + $0xc8] sm:$0xff] %v289
      %462 = vst [vmem:[#allocation2 + $0x110] sm:$0xff] %v290
      %463 = vst [vmem:[#allocation2 + $0x158] sm:$0xff] %v291
      %464 = vst [vmem:[#allocation2 + $0x1a0] sm:$0xff] %v292
      %465 = vst [vmem:[#allocation2 + $0x1e8] sm:$0xff] %v293
      %466 = vst [vmem:[#allocation2 + $0x40] sm:$0x7f] %v403
      %467 = vst [vmem:[#allocation2 + $0x88] sm:$0x7f] %v404
      %468 = vst [vmem:[#allocation2 + $0xd0] sm:$0x7f] %v405
      %469 = vst [vmem:[#allocation2 + $0x118] sm:$0x7f] %v406
      %470 = vst [vmem:[#allocation2 + $0x160] sm:$0x7f] %v407
      %471 = vst [vmem:[#allocation2 + $0x1a8] sm:$0x7f] %v408
      %472 = vst [vmem:[#allocation2 + $0x1f0] sm:$0x7f] %v442
      %v473 = vld [vmem:[#allocation2] sm:$0xff]
      %v474 = vld [vmem:[#allocation2 + $0x8] sm:$0xff]
      %v475 = vld [vmem:[#allocation2 + $0x10] sm:$0xff]
      %v476 = vld [vmem:[#allocation2 + $0x18] sm:$0xff]
      %v477 = vld [vmem:[#allocation2 + $0x20] sm:$0xff]
      %v478 = vld [vmem:[#allocation2 + $0x28] sm:$0xff]
      %v479 = vld [vmem:[#allocation2 + $0x30] sm:$0xff]
      %v480 = vld [vmem:[#allocation2 + $0x38] sm:$0xff]
      %v481 = vld [vmem:[#allocation2 + $0x40] sm:$0xff]
      %v482 = vld [vmem:[#allocation2 + $0x48] sm:$0xff]
      %v483 = vld [vmem:[#allocation2 + $0x50] sm:$0xff]
      %v484 = vld [vmem:[#allocation2 + $0x58] sm:$0xff]
      %v485 = vld [vmem:[#allocation2 + $0x60] sm:$0xff]
      %v486 = vld [vmem:[#allocation2 + $0x68] sm:$0xff]
      %v487 = vld [vmem:[#allocation2 + $0x70] sm:$0xff]
      %v488 = vld [vmem:[#allocation2 + $0x78] sm:$0xff]
      %v489 = vld [vmem:[#allocation2 + $0x80] sm:$0xff]
      %v490 = vld [vmem:[#allocation2 + $0x88] sm:$0xff]
      %v491 = vld [vmem:[#allocation2 + $0x90] sm:$0xff]
      %v492 = vld [vmem:[#allocation2 + $0x98] sm:$0xff]
      %v493 = vld [vmem:[#allocation2 + $0xa0] sm:$0xff]
      %v494 = vld [vmem:[#allocation2 + $0xa8] sm:$0xff]
      %v495 = vld [vmem:[#allocation2 + $0xb0] sm:$0xff]
      %v496 = vld [vmem:[#allocation2 + $0xb8] sm:$0xff]
      %v497 = vld [vmem:[#allocation2 + $0xc0] sm:$0xff]
      %v498 = vld [vmem:[#allocation2 + $0xc8] sm:$0xff]
      %v499 = vld [vmem:[#allocation2 + $0xd0] sm:$0xff]
      %v500 = vld [vmem:[#allocation2 + $0xd8] sm:$0xff]
      %v501 = vld [vmem:[#allocation2 + $0xe0] sm:$0xff]
      %v502 = vld [vmem:[#allocation2 + $0xe8] sm:$0xff]
      %v503 = vld [vmem:[#allocation2 + $0xf0] sm:$0xff]
      %v504 = vld [vmem:[#allocation2 + $0xf8] sm:$0xff]
      %v505 = vld [vmem:[#allocation2 + $0x100] sm:$0xff]
      %v506 = vld [vmem:[#allocation2 + $0x108] sm:$0xff]
      %v507 = vld [vmem:[#allocation2 + $0x110] sm:$0xff]
      %v508 = vld [vmem:[#allocation2 + $0x118] sm:$0xff]
      %v509 = vld [vmem:[#allocation2 + $0x120] sm:$0xff]
      %v510 = vld [vmem:[#allocation2 + $0x128] sm:$0xff]
      %v511 = vld [vmem:[#allocation2 + $0x130] sm:$0xff]
      %v512 = vld [vmem:[#allocation2 + $0x138] sm:$0xff]
      %v513 = vld [vmem:[#allocation2 + $0x140] sm:$0xff]
      %v514 = vld [vmem:[#allocation2 + $0x148] sm:$0xff]
      %v515 = vld [vmem:[#allocation2 + $0x150] sm:$0xff]
      %v516 = vld [vmem:[#allocation2 + $0x158] sm:$0xff]
      %v517 = vld [vmem:[#allocation2 + $0x160] sm:$0xff]
      %v518 = vld [vmem:[#allocation2 + $0x168] sm:$0xff]
      %v519 = vld [vmem:[#allocation2 + $0x170] sm:$0xff]
      %v520 = vld [vmem:[#allocation2 + $0x178] sm:$0xff]
      %v521 = vld [vmem:[#allocation2 + $0x180] sm:$0xff]
      %v522 = vld [vmem:[#allocation2 + $0x188] sm:$0xff]
      %v523 = vld [vmem:[#allocation2 + $0x190] sm:$0xff]
      %v524 = vld [vmem:[#allocation2 + $0x198] sm:$0xff]
      %v525 = vld [vmem:[#allocation2 + $0x1a0] sm:$0xff]
      %v526 = vld [vmem:[#allocation2 + $0x1a8] sm:$0xff]
      %v527 = vld [vmem:[#allocation2 + $0x1b0] sm:$0xff]
      %v528 = vld [vmem:[#allocation2 + $0x1b8] sm:$0xff]
      %v529 = vld [vmem:[#allocation2 + $0x1c0] sm:$0xff]
      %v530 = vld [vmem:[#allocation2 + $0x1c8] sm:$0xff]
      %v531 = vld [vmem:[#allocation2 + $0x1d0] sm:$0xff]
      %v532 = vld [vmem:[#allocation2 + $0x1d8] sm:$0xff]
      %v533 = vld [vmem:[#allocation2 + $0x1e0] sm:$0xff]
      %v534 = vld [vmem:[#allocation2 + $0x1e8] sm:$0xff]
      %v535 = vld [vmem:[#allocation2 + $0x1f0] sm:$0xff]
      %v536 = vld [vmem:[#allocation2 + $0x1f8] sm:$0xff]
      %v537 = vld [vmem:[#allocation2 + $0x200] sm:$0xff]
      %v538 = vld [vmem:[#allocation2 + $0x208] sm:$0xff]
      %v539 = vld [vmem:[#allocation2 + $0x210] sm:$0xff]
      %v540 = vld [vmem:[#allocation2 + $0x218] sm:$0xff]
      %v541 = vld [vmem:[#allocation2 + $0x220] sm:$0xff]
      %v542 = vld [vmem:[#allocation2 + $0x228] sm:$0xff]
      %v543 = vld [vmem:[#allocation2 + $0x230] sm:$0xff]
      %v544 = vld [vmem:[#allocation2 + $0x238] sm:$0xff]
      %v545 = vpack.c.bf16 %v482, %v473
      %v546 = vpack.c.bf16 %v483, %v474
      %v547 = vpack.c.bf16 %v484, %v475
      %v548 = vpack.c.bf16 %v485, %v476
      %v549 = vpack.c.bf16 %v486, %v477
      %v550 = vpack.c.bf16 %v487, %v478
      %v551 = vpack.c.bf16 %v488, %v479
      %v552 = vpack.c.bf16 %v489, %v480
      %v553 = vpack.c.bf16 %v490, %v481
      %v554 = vpack.c.bf16 %v500, %v491
      %v555 = vpack.c.bf16 %v501, %v492
      %v556 = vpack.c.bf16 %v502, %v493
      %v557 = vpack.c.bf16 %v503, %v494
      %v558 = vpack.c.bf16 %v504, %v495
      %v559 = vpack.c.bf16 %v505, %v496
      %v560 = vpack.c.bf16 %v506, %v497
      %v561 = vpack.c.bf16 %v507, %v498
      %v562 = vpack.c.bf16 %v508, %v499
      %v563 = vpack.c.bf16 %v518, %v509
      %v564 = vpack.c.bf16 %v519, %v510
      %v565 = vpack.c.bf16 %v520, %v511
      %v566 = vpack.c.bf16 %v521, %v512
      %v567 = vpack.c.bf16 %v522, %v513
      %v568 = vpack.c.bf16 %v523, %v514
      %v569 = vpack.c.bf16 %v524, %v515
      %v570 = vpack.c.bf16 %v525, %v516
      %v571 = vpack.c.bf16 %v526, %v517
      %v572 = vpack.c.bf16 %v536, %v527
      %v573 = vpack.c.bf16 %v537, %v528
      %v574 = vpack.c.bf16 %v538, %v529
      %v575 = vpack.c.bf16 %v539, %v530
      %v576 = vpack.c.bf16 %v540, %v531
      %v577 = vpack.c.bf16 %v541, %v532
      %v578 = vpack.c.bf16 %v542, %v533
      %v579 = vpack.c.bf16 %v543, %v534
      %v580 = vpack.c.bf16 %v544, %v535
      %v581 = vld [vmem:[%s3] sm:$0xf]
      %v582 = vld [vmem:[%s3 + $0x4] sm:$0xf]
      %v583 = vld [vmem:[%s3 + $0x8] sm:$0xf]
      %v584 = vld [vmem:[%s3 + $0xc] sm:$0xf]
      %v585 = vld [vmem:[%s3 + $0x10] sm:$0xf]
      %v586 = vld [vmem:[%s3 + $0x14] sm:$0xf]
      %v587 = vld [vmem:[%s3 + $0x18] sm:$0xf]
      %v588 = vld [vmem:[%s3 + $0x1c] sm:$0xf]
      %v589 = vld [vmem:[%s3 + $0x20] sm:$0xf]
      %v590 = vld [vmem:[%s3 + $0x24] sm:$0xf]
      %v591 = vld [vmem:[%s3 + $0x28] sm:$0xf]
      %v592 = vld [vmem:[%s3 + $0x2c] sm:$0xf]
      %v593 = vld [vmem:[%s3 + $0x30] sm:$0xf]
      %v594 = vld [vmem:[%s3 + $0x34] sm:$0xf]
      %v595 = vld [vmem:[%s3 + $0x38] sm:$0xf]
      %v596 = vld [vmem:[%s3 + $0x3c] sm:$0xf]
      %v597 = vld [vmem:[%s3 + $0x40] sm:$0xf]
      %v598 = vld [vmem:[%s3 + $0x44] sm:$0xf]
      %v599 = vld [vmem:[%s3 + $0x48] sm:$0xf]
      %v600 = vld [vmem:[%s3 + $0x4c] sm:$0xf]
      %v601 = vld [vmem:[%s3 + $0x50] sm:$0xf]
      %v602 = vld [vmem:[%s3 + $0x54] sm:$0xf]
      %v603 = vld [vmem:[%s3 + $0x58] sm:$0xf]
      %v604 = vld [vmem:[%s3 + $0x5c] sm:$0xf]
      %v605 = vld [vmem:[%s3 + $0x60] sm:$0xf]
      %v606 = vld [vmem:[%s3 + $0x64] sm:$0xf]
      %v607 = vld [vmem:[%s3 + $0x68] sm:$0xf]
      %v608 = vld [vmem:[%s3 + $0x6c] sm:$0xf]
      %v609 = vld [vmem:[%s3 + $0x70] sm:$0xf]
      %v610 = vld [vmem:[%s3 + $0x74] sm:$0xf]
      %v611 = vld [vmem:[%s3 + $0x78] sm:$0xf]
      %v612 = vld [vmem:[%s3 + $0x7c] sm:$0xf]
      %v613 = vld [vmem:[%s3 + $0x80] sm:$0xf]
      %v614 = vld [vmem:[%s3 + $0x84] sm:$0xf]
      %v615 = vld [vmem:[%s3 + $0x88] sm:$0xf]
      %v616 = vld [vmem:[%s3 + $0x8c] sm:$0xf]
      %v617 = vld [vmem:[%s3 + $0x90] sm:$0xf]
      %v618 = vld [vmem:[%s3 + $0x94] sm:$0xf]
      %v619 = vld [vmem:[%s3 + $0x98] sm:$0xf]
      %v620 = vld [vmem:[%s3 + $0x9c] sm:$0xf]
      %v621 = vld [vmem:[%s3 + $0xa0] sm:$0xf]
      %v622 = vld [vmem:[%s3 + $0xa4] sm:$0xf]
      %v623 = vld [vmem:[%s3 + $0xa8] sm:$0xf]
      %v624 = vld [vmem:[%s3 + $0xac] sm:$0xf]
      %v625 = vld [vmem:[%s3 + $0xb0] sm:$0xf]
      %v626 = vld [vmem:[%s3 + $0xb4] sm:$0xf]
      %v627 = vld [vmem:[%s3 + $0xb8] sm:$0xf]
      %v628 = vld [vmem:[%s3 + $0xbc] sm:$0xf]
      %v629 = vld [vmem:[%s3 + $0xc0] sm:$0xf]
      %v630 = vld [vmem:[%s3 + $0xc4] sm:$0xf]
      %v631 = vld [vmem:[%s3 + $0xc8] sm:$0xf]
      %v632 = vld [vmem:[%s3 + $0xcc] sm:$0xf]
      %v633 = vld [vmem:[%s3 + $0xd0] sm:$0xf]
      %v634 = vld [vmem:[%s3 + $0xd4] sm:$0xf]
      %v635 = vld [vmem:[%s3 + $0xd8] sm:$0xf]
      %v636 = vld [vmem:[%s3 + $0xdc] sm:$0xf]
      %v637 = vld [vmem:[%s3 + $0xe0] sm:$0xf]
      %v638 = vld [vmem:[%s3 + $0xe4] sm:$0xf]
      %v639 = vld [vmem:[%s3 + $0xe8] sm:$0xf]
      %v640 = vld [vmem:[%s3 + $0xec] sm:$0xf]
      %v641 = vld [vmem:[%s3 + $0xf0] sm:$0xf]
      %v642 = vld [vmem:[%s3 + $0xf4] sm:$0xf]
      %v643 = vld [vmem:[%s3 + $0xf8] sm:$0xf]
      %v644 = vld [vmem:[%s3 + $0xfc] sm:$0xf]
      %v645 = vld [vmem:[%s3 + $0x100] sm:$0xf]
      %v646 = vld [vmem:[%s3 + $0x104] sm:$0xf]
      %v647 = vld [vmem:[%s3 + $0x108] sm:$0xf]
      %v648 = vld [vmem:[%s3 + $0x10c] sm:$0xf]
      %v649 = vld [vmem:[%s3 + $0x110] sm:$0xf]
      %v650 = vld [vmem:[%s3 + $0x114] sm:$0xf]
      %v651 = vld [vmem:[%s3 + $0x118] sm:$0xf]
      %v652 = vld [vmem:[%s3 + $0x11c] sm:$0xf]
      %v653 = vld [vmem:[%s3 + $0x120] sm:$0xf]
      %v654 = vld [vmem:[%s3 + $0x124] sm:$0xf]
      %v655 = vld [vmem:[%s3 + $0x128] sm:$0xf]
      %v656 = vld [vmem:[%s3 + $0x12c] sm:$0xf]
      %v657 = vld [vmem:[%s3 + $0x130] sm:$0xf]
      %v658 = vld [vmem:[%s3 + $0x134] sm:$0xf]
      %v659 = vld [vmem:[%s3 + $0x138] sm:$0xf]
      %v660 = vld [vmem:[%s3 + $0x13c] sm:$0xf]
      %v661 = vld [vmem:[%s3 + $0x140] sm:$0xf]
      %v662 = vld [vmem:[%s3 + $0x144] sm:$0xf]
      %v663 = vld [vmem:[%s3 + $0x148] sm:$0xf]
      %v664 = vld [vmem:[%s3 + $0x14c] sm:$0xf]
      %v665 = vld [vmem:[%s3 + $0x150] sm:$0xf]
      %v666 = vld [vmem:[%s3 + $0x154] sm:$0xf]
      %v667 = vld [vmem:[%s3 + $0x158] sm:$0xf]
      %v668 = vld [vmem:[%s3 + $0x15c] sm:$0xf]
      %v669 = vld [vmem:[%s3 + $0x160] sm:$0xf]
      %v670 = vld [vmem:[%s3 + $0x164] sm:$0xf]
      %v671 = vld [vmem:[%s3 + $0x168] sm:$0xf]
      %v672 = vld [vmem:[%s3 + $0x16c] sm:$0xf]
      %v673 = vld [vmem:[%s3 + $0x170] sm:$0xf]
      %v674 = vld [vmem:[%s3 + $0x174] sm:$0xf]
      %v675 = vld [vmem:[%s3 + $0x178] sm:$0xf]
      %v676 = vld [vmem:[%s3 + $0x17c] sm:$0xf]
      %v677 = vld [vmem:[%s3 + $0x180] sm:$0xf]
      %v678 = vld [vmem:[%s3 + $0x184] sm:$0xf]
      %v679 = vld [vmem:[%s3 + $0x188] sm:$0xf]
      %v680 = vld [vmem:[%s3 + $0x18c] sm:$0xf]
      %v681 = vld [vmem:[%s3 + $0x190] sm:$0xf]
      %v682 = vld [vmem:[%s3 + $0x194] sm:$0xf]
      %v683 = vld [vmem:[%s3 + $0x198] sm:$0xf]
      %v684 = vld [vmem:[%s3 + $0x19c] sm:$0xf]
      %v685 = vld [vmem:[%s3 + $0x1a0] sm:$0xf]
      %v686 = vld [vmem:[%s3 + $0x1a4] sm:$0xf]
      %v687 = vld [vmem:[%s3 + $0x1a8] sm:$0xf]
      %v688 = vld [vmem:[%s3 + $0x1ac] sm:$0xf]
      %v689 = vld [vmem:[%s3 + $0x1b0] sm:$0xf]
      %v690 = vld [vmem:[%s3 + $0x1b4] sm:$0xf]
      %v691 = vld [vmem:[%s3 + $0x1b8] sm:$0xf]
      %v692 = vld [vmem:[%s3 + $0x1bc] sm:$0xf]
      %v693 = vld [vmem:[%s3 + $0x1c0] sm:$0xf]
      %v694 = vld [vmem:[%s3 + $0x1c4] sm:$0xf]
      %v695 = vld [vmem:[%s3 + $0x1c8] sm:$0xf]
      %v696 = vld [vmem:[%s3 + $0x1cc] sm:$0xf]
      %v697 = vld [vmem:[%s3 + $0x1d0] sm:$0xf]
      %v698 = vld [vmem:[%s3 + $0x1d4] sm:$0xf]
      %v699 = vld [vmem:[%s3 + $0x1d8] sm:$0xf]
      %v700 = vld [vmem:[%s3 + $0x1dc] sm:$0xf]
      %v701 = vld [vmem:[%s3 + $0x1e0] sm:$0xf]
      %v702 = vld [vmem:[%s3 + $0x1e4] sm:$0xf]
      %v703 = vld [vmem:[%s3 + $0x1e8] sm:$0xf]
      %v704 = vld [vmem:[%s3 + $0x1ec] sm:$0xf]
      %v705 = vld [vmem:[%s3 + $0x1f0] sm:$0xf]
      %v706 = vld [vmem:[%s3 + $0x1f4] sm:$0xf]
      %v707 = vld [vmem:[%s3 + $0x1f8] sm:$0xf]
      %v708 = vld [vmem:[%s3 + $0x1fc] sm:$0xf]
      %v709 = vld [vmem:[%s3 + $0x200] sm:$0xf]
      %v710 = vld [vmem:[%s3 + $0x204] sm:$0xf]
      %v711 = vld [vmem:[%s3 + $0x208] sm:$0xf]
      %v712 = vld [vmem:[%s3 + $0x20c] sm:$0xf]
      %v713 = vld [vmem:[%s3 + $0x210] sm:$0xf]
      %v714 = vld [vmem:[%s3 + $0x214] sm:$0xf]
      %v715 = vld [vmem:[%s3 + $0x218] sm:$0xf]
      %v716 = vld [vmem:[%s3 + $0x21c] sm:$0xf]
      %v717 = vld [vmem:[%s3 + $0x220] sm:$0xf]
      %v718 = vld [vmem:[%s3 + $0x224] sm:$0xf]
      %v719 = vld [vmem:[%s3 + $0x228] sm:$0xf]
      %v720 = vld [vmem:[%s3 + $0x22c] sm:$0xf]
      %v721 = vld [vmem:[%s3 + $0x230] sm:$0xf]
      %v722 = vld [vmem:[%s3 + $0x234] sm:$0xf]
      %v723 = vld [vmem:[%s3 + $0x238] sm:$0xf]
      %v724 = vld [vmem:[%s3 + $0x23c] sm:$0xf]
      %v869 = vunpack.c.l.b16 %v581
      %v870 = vunpack.c.l.b16 %v582
      %v871 = vunpack.c.l.b16 %v583
      %v872 = vunpack.c.l.b16 %v584
      %v873 = vunpack.c.l.b16 %v585
      %v874 = vunpack.c.l.b16 %v586
      %v875 = vunpack.c.l.b16 %v587
      %v876 = vunpack.c.l.b16 %v588
      %v877 = vunpack.c.l.b16 %v589
      %v878 = vunpack.c.l.b16 %v590
      %v879 = vunpack.c.l.b16 %v591
      %v880 = vunpack.c.l.b16 %v592
      %v881 = vunpack.c.l.b16 %v593
      %v882 = vunpack.c.l.b16 %v594
      %v883 = vunpack.c.l.b16 %v595
      %v884 = vunpack.c.l.b16 %v596
      %v885 = vunpack.c.l.b16 %v597
      %v886 = vunpack.c.l.b16 %v598
      %v887 = vunpack.c.l.b16 %v599
      %v888 = vunpack.c.l.b16 %v600
      %v889 = vunpack.c.l.b16 %v601
      %v890 = vunpack.c.l.b16 %v602
      %v891 = vunpack.c.l.b16 %v603
      %v892 = vunpack.c.l.b16 %v604
      %v893 = vunpack.c.l.b16 %v605
      %v894 = vunpack.c.l.b16 %v606
      %v895 = vunpack.c.l.b16 %v607
      %v896 = vunpack.c.l.b16 %v608
      %v897 = vunpack.c.l.b16 %v609
      %v898 = vunpack.c.l.b16 %v610
      %v899 = vunpack.c.l.b16 %v611
      %v900 = vunpack.c.l.b16 %v612
      %v901 = vunpack.c.l.b16 %v613
      %v902 = vunpack.c.l.b16 %v614
      %v903 = vunpack.c.l.b16 %v615
      %v904 = vunpack.c.l.b16 %v616
      %v905 = vunpack.c.l.b16 %v617
      %v906 = vunpack.c.l.b16 %v618
      %v907 = vunpack.c.l.b16 %v619
      %v908 = vunpack.c.l.b16 %v620
      %v909 = vunpack.c.l.b16 %v621
      %v910 = vunpack.c.l.b16 %v622
      %v911 = vunpack.c.l.b16 %v623
      %v912 = vunpack.c.l.b16 %v624
      %v913 = vunpack.c.l.b16 %v625
      %v914 = vunpack.c.l.b16 %v626
      %v915 = vunpack.c.l.b16 %v627
      %v916 = vunpack.c.l.b16 %v628
      %v917 = vunpack.c.l.b16 %v629
      %v918 = vunpack.c.l.b16 %v630
      %v919 = vunpack.c.l.b16 %v631
      %v920 = vunpack.c.l.b16 %v632
      %v921 = vunpack.c.l.b16 %v633
      %v922 = vunpack.c.l.b16 %v634
      %v923 = vunpack.c.l.b16 %v635
      %v924 = vunpack.c.l.b16 %v636
      %v925 = vunpack.c.l.b16 %v637
      %v926 = vunpack.c.l.b16 %v638
      %v927 = vunpack.c.l.b16 %v639
      %v928 = vunpack.c.l.b16 %v640
      %v929 = vunpack.c.l.b16 %v641
      %v930 = vunpack.c.l.b16 %v642
      %v931 = vunpack.c.l.b16 %v643
      %v932 = vunpack.c.l.b16 %v644
      %v933 = vunpack.c.l.b16 %v645
      %v934 = vunpack.c.l.b16 %v646
      %v935 = vunpack.c.l.b16 %v647
      %v936 = vunpack.c.l.b16 %v648
      %v937 = vunpack.c.l.b16 %v649
      %v938 = vunpack.c.l.b16 %v650
      %v939 = vunpack.c.l.b16 %v651
      %v940 = vunpack.c.l.b16 %v652
      %v941 = vunpack.c.l.b16 %v653
      %v942 = vunpack.c.l.b16 %v654
      %v943 = vunpack.c.l.b16 %v655
      %v944 = vunpack.c.l.b16 %v656
      %v945 = vunpack.c.l.b16 %v657
      %v946 = vunpack.c.l.b16 %v658
      %v947 = vunpack.c.l.b16 %v659
      %v948 = vunpack.c.l.b16 %v660
      %v949 = vunpack.c.l.b16 %v661
      %v950 = vunpack.c.l.b16 %v662
      %v951 = vunpack.c.l.b16 %v663
      %v952 = vunpack.c.l.b16 %v664
      %v953 = vunpack.c.l.b16 %v665
      %v954 = vunpack.c.l.b16 %v666
      %v955 = vunpack.c.l.b16 %v667
      %v956 = vunpack.c.l.b16 %v668
      %v957 = vunpack.c.l.b16 %v669
      %v958 = vunpack.c.l.b16 %v670
      %v959 = vunpack.c.l.b16 %v671
      %v960 = vunpack.c.l.b16 %v672
      %v961 = vunpack.c.l.b16 %v673
      %v962 = vunpack.c.l.b16 %v674
      %v963 = vunpack.c.l.b16 %v675
      %v964 = vunpack.c.l.b16 %v676
      %v965 = vunpack.c.l.b16 %v677
      %v966 = vunpack.c.l.b16 %v678
      %v967 = vunpack.c.l.b16 %v679
      %v968 = vunpack.c.l.b16 %v680
      %v969 = vunpack.c.l.b16 %v681
      %v970 = vunpack.c.l.b16 %v682
      %v971 = vunpack.c.l.b16 %v683
      %v972 = vunpack.c.l.b16 %v684
      %v973 = vunpack.c.l.b16 %v685
      %v974 = vunpack.c.l.b16 %v686
      %v975 = vunpack.c.l.b16 %v687
      %v976 = vunpack.c.l.b16 %v688
      %v977 = vunpack.c.l.b16 %v689
      %v978 = vunpack.c.l.b16 %v690
      %v979 = vunpack.c.l.b16 %v691
      %v980 = vunpack.c.l.b16 %v692
      %v981 = vunpack.c.l.b16 %v693
      %v982 = vunpack.c.l.b16 %v694
      %v983 = vunpack.c.l.b16 %v695
      %v984 = vunpack.c.l.b16 %v696
      %v985 = vunpack.c.l.b16 %v697
      %v986 = vunpack.c.l.b16 %v698
      %v987 = vunpack.c.l.b16 %v699
      %v988 = vunpack.c.l.b16 %v700
      %v989 = vunpack.c.l.b16 %v701
      %v990 = vunpack.c.l.b16 %v702
      %v991 = vunpack.c.l.b16 %v703
      %v992 = vunpack.c.l.b16 %v704
      %v993 = vunpack.c.l.b16 %v705
      %v994 = vunpack.c.l.b16 %v706
      %v995 = vunpack.c.l.b16 %v707
      %v996 = vunpack.c.l.b16 %v708
      %v997 = vunpack.c.l.b16 %v709
      %v998 = vunpack.c.l.b16 %v710
      %v999 = vunpack.c.l.b16 %v711
      %v1000 = vunpack.c.l.b16 %v712
      %v1001 = vunpack.c.l.b16 %v713
      %v1002 = vunpack.c.l.b16 %v714
      %v1003 = vunpack.c.l.b16 %v715
      %v1004 = vunpack.c.l.b16 %v716
      %v1005 = vunpack.c.l.b16 %v717
      %v1006 = vunpack.c.l.b16 %v718
      %v1007 = vunpack.c.l.b16 %v719
      %v1008 = vunpack.c.l.b16 %v720
      %v1009 = vunpack.c.l.b16 %v721
      %v1010 = vunpack.c.l.b16 %v722
      %v1011 = vunpack.c.l.b16 %v723
      %v1012 = vunpack.c.l.b16 %v724
      %v1013 = vpack.c.b16 %v870, %v869
      %v1014 = vpack.c.b16 %v872, %v871
      %v1015 = vpack.c.b16 %v874, %v873
      %v1016 = vpack.c.b16 %v876, %v875
      %v1017 = vpack.c.b16 %v878, %v877
      %v1018 = vpack.c.b16 %v880, %v879
      %v1019 = vpack.c.b16 %v882, %v881
      %v1020 = vpack.c.b16 %v884, %v883
      %v1021 = vpack.c.b16 %v886, %v885
      %v1022 = vpack.c.b16 %v888, %v887
      %v1023 = vpack.c.b16 %v890, %v889
      %v1024 = vpack.c.b16 %v892, %v891
      %v1025 = vpack.c.b16 %v894, %v893
      %v1026 = vpack.c.b16 %v896, %v895
      %v1027 = vpack.c.b16 %v898, %v897
      %v1028 = vpack.c.b16 %v900, %v899
      %v1029 = vpack.c.b16 %v902, %v901
      %v1030 = vpack.c.b16 %v904, %v903
      %v1031 = vpack.c.b16 %v906, %v905
      %v1032 = vpack.c.b16 %v908, %v907
      %v1033 = vpack.c.b16 %v910, %v909
      %v1034 = vpack.c.b16 %v912, %v911
      %v1035 = vpack.c.b16 %v914, %v913
      %v1036 = vpack.c.b16 %v916, %v915
      %v1037 = vpack.c.b16 %v918, %v917
      %v1038 = vpack.c.b16 %v920, %v919
      %v1039 = vpack.c.b16 %v922, %v921
      %v1040 = vpack.c.b16 %v924, %v923
      %v1041 = vpack.c.b16 %v926, %v925
      %v1042 = vpack.c.b16 %v928, %v927
      %v1043 = vpack.c.b16 %v930, %v929
      %v1044 = vpack.c.b16 %v932, %v931
      %v1045 = vpack.c.b16 %v934, %v933
      %v1046 = vpack.c.b16 %v936, %v935
      %v1047 = vpack.c.b16 %v938, %v937
      %v1048 = vpack.c.b16 %v940, %v939
      %v1049 = vpack.c.b16 %v942, %v941
      %v1050 = vpack.c.b16 %v944, %v943
      %v1051 = vpack.c.b16 %v946, %v945
      %v1052 = vpack.c.b16 %v948, %v947
      %v1053 = vpack.c.b16 %v950, %v949
      %v1054 = vpack.c.b16 %v952, %v951
      %v1055 = vpack.c.b16 %v954, %v953
      %v1056 = vpack.c.b16 %v956, %v955
      %v1057 = vpack.c.b16 %v958, %v957
      %v1058 = vpack.c.b16 %v960, %v959
      %v1059 = vpack.c.b16 %v962, %v961
      %v1060 = vpack.c.b16 %v964, %v963
      %v1061 = vpack.c.b16 %v966, %v965
      %v1062 = vpack.c.b16 %v968, %v967
      %v1063 = vpack.c.b16 %v970, %v969
      %v1064 = vpack.c.b16 %v972, %v971
      %v1065 = vpack.c.b16 %v974, %v973
      %v1066 = vpack.c.b16 %v976, %v975
      %v1067 = vpack.c.b16 %v978, %v977
      %v1068 = vpack.c.b16 %v980, %v979
      %v1069 = vpack.c.b16 %v982, %v981
      %v1070 = vpack.c.b16 %v984, %v983
      %v1071 = vpack.c.b16 %v986, %v985
      %v1072 = vpack.c.b16 %v988, %v987
      %v1073 = vpack.c.b16 %v990, %v989
      %v1074 = vpack.c.b16 %v992, %v991
      %v1075 = vpack.c.b16 %v994, %v993
      %v1076 = vpack.c.b16 %v996, %v995
      %v1077 = vpack.c.b16 %v998, %v997
      %v1078 = vpack.c.b16 %v1000, %v999
      %v1079 = vpack.c.b16 %v1002, %v1001
      %v1080 = vpack.c.b16 %v1004, %v1003
      %v1081 = vpack.c.b16 %v1006, %v1005
      %v1082 = vpack.c.b16 %v1008, %v1007
      %v1083 = vpack.c.b16 %v1010, %v1009
      %v1084 = vpack.c.b16 %v1012, %v1011
      %1157 = vmatprep.subr.bf16.mxu0 0
      %1158 = vmatpush1.bf16.msra.mxu0 %v1013
      %1159 = vmatprep.subr.bf16.mxu0 0
      %1160 = vmatpush1.bf16.msra.mxu0 %v1014
      %1161 = vmatprep.subr.bf16.mxu0 0
      %1162 = vmatpush1.bf16.msra.mxu0 %v1015
      %1163 = vmatprep.subr.bf16.mxu0 0
      %1164 = vmatpush1.bf16.msra.mxu0 %v1016
      %1165 = vmatprep.subr.bf16.mxu0 0
      %1166 = vmatpush1.bf16.msra.mxu0 %v1017
      %1167 = vmatprep.subr.bf16.mxu0 0
      %1168 = vmatpush1.bf16.msra.mxu0 %v1018
      %1169 = vmatprep.subr.bf16.mxu0 0
      %1170 = vmatpush1.bf16.msra.mxu0 %v1019
      %1171 = vmatprep.subr.bf16.mxu0 0
      %1172 = vmatpush1.bf16.msra.mxu0 %v1020
      %1173 = vmatprep.subr.bf16.mxu0 0
      %1174 = vmatpush1.bf16.msra.mxu0 %v1021
      %1175 = vmatprep.subr.bf16.mxu0 0
      %1176 = vmatpush1.bf16.msra.mxu0 %v1022
      %1177 = vmatprep.subr.bf16.mxu0 0
      %1178 = vmatpush1.bf16.msra.mxu0 %v1023
      %1179 = vmatprep.subr.bf16.mxu0 0
      %1180 = vmatpush1.bf16.msra.mxu0 %v1024
      %1181 = vmatprep.subr.bf16.mxu0 0
      %1182 = vmatpush1.bf16.msra.mxu0 %v1025
      %1183 = vmatprep.subr.bf16.mxu0 0
      %1184 = vmatpush1.bf16.msra.mxu0 %v1026
      %1185 = vmatprep.subr.bf16.mxu0 0
      %1186 = vmatpush1.bf16.msra.mxu0 %v1027
      %1187 = vmatprep.subr.bf16.mxu0 0
      %1188 = vmatpush1.bf16.msra.mxu0 %v1028
      %1189 = vmatprep.mubr.bf16.mxu0 %v546
      %1190 = vmatmul.mubr.bf16.gmra.mrb[0].mxu0 %v545
      %v1191 = vpop.f32.mrb[0].mxu0
      %v1192 = vadd.f32 0.0, %v1191
      %v1193 = vpop.f32.mrb[0].mxu0
      %v1194 = vpop.f32.mrb[0].mxu0
      %v1195 = vpop.f32.mrb[0].mxu0
      %1196 = vmatprep.mubr.bf16.mxu0 %v555
      %1197 = vmatmul.mubr.bf16.gmra.mrb[0].mxu0 %v554
      %v1198 = vpop.f32.mrb[0].mxu0
      %v1199 = vadd.f32 0.0, %v1198
      %v1200 = vpop.f32.mrb[0].mxu0
      %v1201 = vpop.f32.mrb[0].mxu0
      %v1202 = vpop.f32.mrb[0].mxu0
      %1203 = vmatprep.mubr.bf16.mxu0 %v564
      %1204 = vmatmul.mubr.bf16.gmra.mrb[0].mxu0 %v563
      %v1205 = vpop.f32.mrb[0].mxu0
      %v1206 = vadd.f32 0.0, %v1205
      %v1207 = vpop.f32.mrb[0].mxu0
      %v1208 = vpop.f32.mrb[0].mxu0
      %v1209 = vpop.f32.mrb[0].mxu0
      %1210 = vmatprep.mubr.bf16.mxu0 %v573
      %1211 = vmatmul.mubr.bf16.gmra.mrb[0].mxu0 %v572
      %v1212 = vpop.f32.mrb[0].mxu0
      %v1213 = vadd.f32 0.0, %v1212
      %v1214 = vpop.f32.mrb[0].mxu0
      %v1215 = vpop.f32.mrb[0].mxu0
      %v1216 = vpop.f32.mrb[0].mxu0
      %1217 = vdwg.mxu0
      %1218 = vmatprep.subr.bf16.mxu0 0
      %1219 = vmatpush1.bf16.msra.mxu0 %v1029
      %1220 = vmatprep.subr.bf16.mxu0 0
      %1221 = vmatpush1.bf16.msra.mxu0 %v1030
      %1222 = vmatprep.subr.bf16.mxu0 0
      %1223 = vmatpush1.bf16.msra.mxu0 %v1031
      %1224 = vmatprep.subr.bf16.mxu0 0
      %1225 = vmatpush1.bf16.msra.mxu0 %v1032
      %1226 = vmatprep.subr.bf16.mxu0 0
      %1227 = vmatpush1.bf16.msra.mxu0 %v1033
      %1228 = vmatprep.subr.bf16.mxu0 0
      %1229 = vmatpush1.bf16.msra.mxu0 %v1034
      %1230 = vmatprep.subr.bf16.mxu0 0
      %1231 = vmatpush1.bf16.msra.mxu0 %v1035
      %1232 = vmatprep.subr.bf16.mxu0 0
      %1233 = vmatpush1.bf16.msra.mxu0 %v1036
      %1234 = vmatprep.subr.bf16.mxu0 0
      %1235 = vmatpush1.bf16.msra.mxu0 %v1037
      %1236 = vmatprep.subr.bf16.mxu0 0
      %1237 = vmatpush1.bf16.msra.mxu0 %v1038
      %1238 = vmatprep.subr.bf16.mxu0 0
      %1239 = vmatpush1.bf16.msra.mxu0 %v1039
      %1240 = vmatprep.subr.bf16.mxu0 0
      %1241 = vmatpush1.bf16.msra.mxu0 %v1040
      %1242 = vmatprep.subr.bf16.mxu0 0
      %1243 = vmatpush1.bf16.msra.mxu0 %v1041
      %1244 = vmatprep.subr.bf16.mxu0 0
      %1245 = vmatpush1.bf16.msra.mxu0 %v1042
      %1246 = vmatprep.subr.bf16.mxu0 0
      %1247 = vmatpush1.bf16.msra.mxu0 %v1043
      %1248 = vmatprep.subr.bf16.mxu0 0
      %1249 = vmatpush1.bf16.msra.mxu0 %v1044
      %1250 = vmatprep.mubr.bf16.mxu0 %v548
      %1251 = vmatmul.mubr.bf16.gmra.mrb[0].mxu0 %v547
      %v1252 = vpop.f32.mrb[0].mxu0
      %v1253 = vadd.f32 %v1192, %v1252
      %v1254 = vpop.f32.mrb[0].mxu0
      %v1255 = vpop.f32.mrb[0].mxu0
      %v1256 = vpop.f32.mrb[0].mxu0
      %1257 = vmatprep.mubr.bf16.mxu0 %v557
      %1258 = vmatmul.mubr.bf16.gmra.mrb[0].mxu0 %v556
      %v1259 = vpop.f32.mrb[0].mxu0
      %v1260 = vadd.f32 %v1199, %v1259
      %v1261 = vpop.f32.mrb[0].mxu0
      %v1262 = vpop.f32.mrb[0].mxu0
      %v1263 = vpop.f32.mrb[0].mxu0
      %1264 = vmatprep.mubr.bf16.mxu0 %v566
      %1265 = vmatmul.mubr.bf16.gmra.mrb[0].mxu0 %v565
      %v1266 = vpop.f32.mrb[0].mxu0
      %v1267 = vadd.f32 %v1206, %v1266
      %v1268 = vpop.f32.mrb[0].mxu0
      %v1269 = vpop.f32.mrb[0].mxu0
      %v1270 = vpop.f32.mrb[0].mxu0
      %1271 = vmatprep.mubr.bf16.mxu0 %v575
      %1272 = vmatmul.mubr.bf16.gmra.mrb[0].mxu0 %v574
      %v1273 = vpop.f32.mrb[0].mxu0
      %v1274 = vadd.f32 %v1213, %v1273
      %v1275 = vpop.f32.mrb[0].mxu0
      %v1276 = vpop.f32.mrb[0].mxu0
      %v1277 = vpop.f32.mrb[0].mxu0
      %1278 = vdwg.mxu0
      %1279 = vmatprep.subr.bf16.mxu0 0
      %1280 = vmatpush1.bf16.msra.mxu0 %v1045
      %1281 = vmatprep.subr.bf16.mxu0 0
      %1282 = vmatpush1.bf16.msra.mxu0 %v1046
      %1283 = vmatprep.subr.bf16.mxu0 0
      %1284 = vmatpush1.bf16.msra.mxu0 %v1047
      %1285 = vmatprep.subr.bf16.mxu0 0
      %1286 = vmatpush1.bf16.msra.mxu0 %v1048
      %1287 = vmatprep.subr.bf16.mxu0 0
      %1288 = vmatpush1.bf16.msra.mxu0 %v1049
      %1289 = vmatprep.subr.bf16.mxu0 0
      %1290 = vmatpush1.bf16.msra.mxu0 %v1050
      %1291 = vmatprep.subr.bf16.mxu0 0
      %1292 = vmatpush1.bf16.msra.mxu0 %v1051
      %1293 = vmatprep.subr.bf16.mxu0 0
      %1294 = vmatpush1.bf16.msra.mxu0 %v1052
      %1295 = vmatprep.subr.bf16.mxu0 0
      %1296 = vmatpush1.bf16.msra.mxu0 %v1053
      %1297 = vmatprep.subr.bf16.mxu0 0
      %1298 = vmatpush1.bf16.msra.mxu0 %v1054
      %1299 = vmatprep.subr.bf16.mxu0 0
      %1300 = vmatpush1.bf16.msra.mxu0 %v1055
      %1301 = vmatprep.subr.bf16.mxu0 0
      %1302 = vmatpush1.bf16.msra.mxu0 %v1056
      %1303 = vmatprep.subr.bf16.mxu0 0
      %1304 = vmatpush1.bf16.msra.mxu0 %v1057
      %1305 = vmatprep.subr.bf16.mxu0 0
      %1306 = vmatpush1.bf16.msra.mxu0 %v1058
      %1307 = vmatprep.subr.bf16.mxu0 0
      %1308 = vmatpush1.bf16.msra.mxu0 %v1059
      %1309 = vmatprep.subr.bf16.mxu0 0
      %1310 = vmatpush1.bf16.msra.mxu0 %v1060
      %1311 = vmatprep.mubr.bf16.mxu0 %v550
      %1312 = vmatmul.mubr.bf16.gmra.mrb[0].mxu0 %v549
      %v1313 = vpop.f32.mrb[0].mxu0
      %v1314 = vadd.f32 %v1253, %v1313
      %v1315 = vpop.f32.mrb[0].mxu0
      %v1316 = vpop.f32.mrb[0].mxu0
      %v1317 = vpop.f32.mrb[0].mxu0
      %1318 = vmatprep.mubr.bf16.mxu0 %v559
      %1319 = vmatmul.mubr.bf16.gmra.mrb[0].mxu0 %v558
      %v1320 = vpop.f32.mrb[0].mxu0
      %v1321 = vadd.f32 %v1260, %v1320
      %v1322 = vpop.f32.mrb[0].mxu0
      %v1323 = vpop.f32.mrb[0].mxu0
      %v1324 = vpop.f32.mrb[0].mxu0
      %1325 = vmatprep.mubr.bf16.mxu0 %v568
      %1326 = vmatmul.mubr.bf16.gmra.mrb[0].mxu0 %v567
      %v1327 = vpop.f32.mrb[0].mxu0
      %v1328 = vadd.f32 %v1267, %v1327
      %v1329 = vpop.f32.mrb[0].mxu0
      %v1330 = vpop.f32.mrb[0].mxu0
      %v1331 = vpop.f32.mrb[0].mxu0
      %1332 = vmatprep.mubr.bf16.mxu0 %v577
      %1333 = vmatmul.mubr.bf16.gmra.mrb[0].mxu0 %v576
      %v1334 = vpop.f32.mrb[0].mxu0
      %v1335 = vadd.f32 %v1274, %v1334
      %v1336 = vpop.f32.mrb[0].mxu0
      %v1337 = vpop.f32.mrb[0].mxu0
      %v1338 = vpop.f32.mrb[0].mxu0
      %1339 = vdwg.mxu0
      %1340 = vmatprep.subr.bf16.mxu0 0
      %1341 = vmatpush1.bf16.msra.mxu0 %v1061
      %1342 = vmatprep.subr.bf16.mxu0 0
      %1343 = vmatpush1.bf16.msra.mxu0 %v1062
      %1344 = vmatprep.subr.bf16.mxu0 0
      %1345 = vmatpush1.bf16.msra.mxu0 %v1063
      %1346 = vmatprep.subr.bf16.mxu0 0
      %1347 = vmatpush1.bf16.msra.mxu0 %v1064
      %1348 = vmatprep.subr.bf16.mxu0 0
      %1349 = vmatpush1.bf16.msra.mxu0 %v1065
      %1350 = vmatprep.subr.bf16.mxu0 0
      %1351 = vmatpush1.bf16.msra.mxu0 %v1066
      %1352 = vmatprep.subr.bf16.mxu0 0
      %1353 = vmatpush1.bf16.msra.mxu0 %v1067
      %1354 = vmatprep.subr.bf16.mxu0 0
      %1355 = vmatpush1.bf16.msra.mxu0 %v1068
      %1356 = vmatprep.subr.bf16.mxu0 0
      %1357 = vmatpush1.bf16.msra.mxu0 %v1069
      %1358 = vmatprep.subr.bf16.mxu0 0
      %1359 = vmatpush1.bf16.msra.mxu0 %v1070
      %1360 = vmatprep.subr.bf16.mxu0 0
      %1361 = vmatpush1.bf16.msra.mxu0 %v1071
      %1362 = vmatprep.subr.bf16.mxu0 0
      %1363 = vmatpush1.bf16.msra.mxu0 %v1072
      %1364 = vmatprep.subr.bf16.mxu0 0
      %1365 = vmatpush1.bf16.msra.mxu0 %v1073
      %1366 = vmatprep.subr.bf16.mxu0 0
      %1367 = vmatpush1.bf16.msra.mxu0 %v1074
      %1368 = vmatprep.subr.bf16.mxu0 0
      %1369 = vmatpush1.bf16.msra.mxu0 %v1075
      %1370 = vmatprep.subr.bf16.mxu0 0
      %1371 = vmatpush1.bf16.msra.mxu0 %v1076
      %1372 = vmatprep.mubr.bf16.mxu0 %v552
      %1373 = vmatmul.mubr.bf16.gmra.mrb[0].mxu0 %v551
      %v1374 = vpop.f32.mrb[0].mxu0
      %v1375 = vadd.f32 %v1314, %v1374
      %v1376 = vpop.f32.mrb[0].mxu0
      %v1377 = vpop.f32.mrb[0].mxu0
      %v1378 = vpop.f32.mrb[0].mxu0
      %1379 = vmatprep.mubr.bf16.mxu0 %v561
      %1380 = vmatmul.mubr.bf16.gmra.mrb[0].mxu0 %v560
      %v1381 = vpop.f32.mrb[0].mxu0
      %v1382 = vadd.f32 %v1321, %v1381
      %v1383 = vpop.f32.mrb[0].mxu0
      %v1384 = vpop.f32.mrb[0].mxu0
      %v1385 = vpop.f32.mrb[0].mxu0
      %1386 = vmatprep.mubr.bf16.mxu0 %v570
      %1387 = vmatmul.mubr.bf16.gmra.mrb[0].mxu0 %v569
      %v1388 = vpop.f32.mrb[0].mxu0
      %v1389 = vadd.f32 %v1328, %v1388
      %v1390 = vpop.f32.mrb[0].mxu0
      %v1391 = vpop.f32.mrb[0].mxu0
      %v1392 = vpop.f32.mrb[0].mxu0
      %1393 = vmatprep.mubr.bf16.mxu0 %v579
      %1394 = vmatmul.mubr.bf16.gmra.mrb[0].mxu0 %v578
      %v1395 = vpop.f32.mrb[0].mxu0
      %v1396 = vadd.f32 %v1335, %v1395
      %v1397 = vpop.f32.mrb[0].mxu0
      %v1398 = vpop.f32.mrb[0].mxu0
      %v1399 = vpop.f32.mrb[0].mxu0
      %1400 = vdwg.mxu0
      %1401 = vmatprep.subr.bf16.mxu0 0
      %1402 = vmatpush1.bf16.msra.mxu0 %v1077
      %1403 = vmatprep.subr.bf16.mxu0 0
      %1404 = vmatpush1.bf16.msra.mxu0 %v1078
      %1405 = vmatprep.subr.bf16.mxu0 0
      %1406 = vmatpush1.bf16.msra.mxu0 %v1079
      %1407 = vmatprep.subr.bf16.mxu0 0
      %1408 = vmatpush1.bf16.msra.mxu0 %v1080
      %1409 = vmatprep.subr.bf16.mxu0 0
      %1410 = vmatpush1.bf16.msra.mxu0 %v1081
      %1411 = vmatprep.subr.bf16.mxu0 0
      %1412 = vmatpush1.bf16.msra.mxu0 %v1082
      %1413 = vmatprep.subr.bf16.mxu0 0
      %1414 = vmatpush1.bf16.msra.mxu0 %v1083
      %1415 = vmatprep.subr.bf16.mxu0 0
      %1416 = vmatpush1.bf16.msra.mxu0 %v1084
      %1417 = vmatprep.subr.bf16.mxu0 0
      %1418 = vmatpush1.bf16.msra.mxu0 0
      %1419 = vmatprep.subr.bf16.mxu0 0
      %1420 = vmatpush1.bf16.msra.mxu0 0
      %1421 = vmatprep.subr.bf16.mxu0 0
      %1422 = vmatpush1.bf16.msra.mxu0 0
      %1423 = vmatprep.subr.bf16.mxu0 0
      %1424 = vmatpush1.bf16.msra.mxu0 0
      %1425 = vmatprep.subr.bf16.mxu0 0
      %1426 = vmatpush1.bf16.msra.mxu0 0
      %1427 = vmatprep.subr.bf16.mxu0 0
      %1428 = vmatpush1.bf16.msra.mxu0 0
      %1429 = vmatprep.subr.bf16.mxu0 0
      %1430 = vmatpush1.bf16.msra.mxu0 0
      %1431 = vmatprep.subr.bf16.mxu0 0
      %1432 = vmatpush1.bf16.msra.mxu0 0
      %1433 = vmatprep.mubr.bf16.mxu0 0
      %1434 = vmatmul.mubr.bf16.gmra.mrb[0].mxu0 %v553
      %v1435 = vpop.f32.mrb[0].mxu0
      %v1436 = vadd.f32 %v1375, %v1435
      %v1437 = vpop.f32.mrb[0].mxu0
      %v1438 = vpop.f32.mrb[0].mxu0
      %v1439 = vpop.f32.mrb[0].mxu0
      %1440 = vmatprep.mubr.bf16.mxu0 0
      %1441 = vmatmul.mubr.bf16.gmra.mrb[0].mxu0 %v562
      %v1442 = vpop.f32.mrb[0].mxu0
      %v1443 = vadd.f32 %v1382, %v1442
      %v1444 = vpop.f32.mrb[0].mxu0
      %v1445 = vpop.f32.mrb[0].mxu0
      %v1446 = vpop.f32.mrb[0].mxu0
      %1447 = vmatprep.mubr.bf16.mxu0 0
      %1448 = vmatmul.mubr.bf16.gmra.mrb[0].mxu0 %v571
      %v1449 = vpop.f32.mrb[0].mxu0
      %v1450 = vadd.f32 %v1389, %v1449
      %v1451 = vpop.f32.mrb[0].mxu0
      %v1452 = vpop.f32.mrb[0].mxu0
      %v1453 = vpop.f32.mrb[0].mxu0
      %1454 = vmatprep.mubr.bf16.mxu0 0
      %1455 = vmatmul.mubr.bf16.gmra.mrb[0].mxu0 %v580
      %v1456 = vpop.f32.mrb[0].mxu0
      %v1457 = vadd.f32 %v1396, %v1456
      %v1458 = vpop.f32.mrb[0].mxu0
      %v1459 = vpop.f32.mrb[0].mxu0
      %v1460 = vpop.f32.mrb[0].mxu0
      %1461 = vdwg.mxu0
      %v1466 = vcombine.high %v1436, %v1436
      %v1468 = vunpack.c.l.s4 1983009808
      %v1469 = vunpack.c.0.s8 %v1468
      %v1470 = vlaneseq
      %v1471 = vshrl.u32 %v1470, 7
      %v1472 = vsub.s32 %v1469, %v1471
      %v1473 = vrot.slane %v1436, %v1472
      %v1475 = vunpack.c.l.s4 1983009808
      %v1476 = vunpack.c.0.s8 %v1475
      %v1477 = vlaneseq
      %v1478 = vshrl.u32 %v1477, 7
      %v1479 = vsub.s32 %v1476, %v1478
      %v1480 = vrot.slane %v1466, %v1479
      %v1481 = vcombine.high %v1473, %v1473
      %v1482 = vcombine.high %v1480, %v1480
      %v1483 = vcombine.high %v1443, %v1443
      %v1485 = vunpack.c.l.s4 1983009808
      %v1486 = vunpack.c.0.s8 %v1485
      %v1487 = vlaneseq
      %v1488 = vshrl.u32 %v1487, 7
      %v1489 = vsub.s32 %v1486, %v1488
      %v1490 = vrot.slane %v1443, %v1489
      %v1492 = vunpack.c.l.s4 1983009808
      %v1493 = vunpack.c.0.s8 %v1492
      %v1494 = vlaneseq
      %v1495 = vshrl.u32 %v1494, 7
      %v1496 = vsub.s32 %v1493, %v1495
      %v1497 = vrot.slane %v1483, %v1496
      %v1498 = vcombine.high %v1490, %v1490
      %v1499 = vcombine.high %v1497, %v1497
      %v1500 = vcombine.high %v1450, %v1450
      %v1502 = vunpack.c.l.s4 1983009808
      %v1503 = vunpack.c.0.s8 %v1502
      %v1504 = vlaneseq
      %v1505 = vshrl.u32 %v1504, 7
      %v1506 = vsub.s32 %v1503, %v1505
      %v1507 = vrot.slane %v1450, %v1506
      %v1509 = vunpack.c.l.s4 1983009808
      %v1510 = vunpack.c.0.s8 %v1509
      %v1511 = vlaneseq
      %v1512 = vshrl.u32 %v1511, 7
      %v1513 = vsub.s32 %v1510, %v1512
      %v1514 = vrot.slane %v1500, %v1513
      %v1515 = vcombine.high %v1507, %v1507
      %v1516 = vcombine.high %v1514, %v1514
      %v1517 = vcombine.high %v1457, %v1457
      %v1519 = vunpack.c.l.s4 1983009808
      %v1520 = vunpack.c.0.s8 %v1519
      %v1521 = vlaneseq
      %v1522 = vshrl.u32 %v1521, 7
      %v1523 = vsub.s32 %v1520, %v1522
      %v1524 = vrot.slane %v1457, %v1523
      %v1526 = vunpack.c.l.s4 1983009808
      %v1527 = vunpack.c.0.s8 %v1526
      %v1528 = vlaneseq
      %v1529 = vshrl.u32 %v1528, 7
      %v1530 = vsub.s32 %v1527, %v1529
      %v1531 = vrot.slane %v1517, %v1530
      %v1532 = vcombine.high %v1524, %v1524
      %v1533 = vcombine.high %v1531, %v1531
      %p1550 = scmp.eq.s32.totalorder %s18, 0
      // Predicated region
      $region37: #{bottleneck_forward.5} parent=35 // pred_check
        %p1551 = pneg %p1550
      $region38: #{bottleneck_forward.5} parent=35 // pred_check_branch
        %1553 = sbr.rel (%p1551) target = $region40
      $region39: #{bottleneck_forward.5} parent=35 // pred_region
        %1554 = vst [vmem:[%s5] sm:$0x1] 0.0
        %1555 = vst [vmem:[%s6] sm:$0x1] 0.0
      $region40: #{bottleneck_forward.5} parent=35 // pred_fallthru
        _
      %v1556 = vld [vmem:[%s5] sm:$0x1]
      %v1557 = vlaneseq
      %v1558 = vshrl.u32 %v1557, 7
      %v1559 = vsub.s32 0, %v1558
      %v1560 = vrot.slane %v1473, %v1559
      %v1561 = vlaneseq
      %v1562 = vshrl.u32 %v1561, 7
      %v1563 = vsub.s32 0, %v1562
      %v1564 = vrot.slane %v1481, %v1563
      %v1565 = vlaneseq
      %v1566 = vshrl.u32 %v1565, 7
      %v1567 = vsub.s32 0, %v1566
      %v1568 = vrot.slane %v1480, %v1567
      %v1569 = vlaneseq
      %v1570 = vshrl.u32 %v1569, 7
      %v1571 = vsub.s32 0, %v1570
      %v1572 = vrot.slane %v1482, %v1571
      %v1573 = vlaneseq
      %v1574 = vshrl.u32 %v1573, 7
      %v1575 = vsub.s32 0, %v1574
      %v1576 = vrot.slane %v1490, %v1575
      %v1577 = vlaneseq
      %v1578 = vshrl.u32 %v1577, 7
      %v1579 = vsub.s32 0, %v1578
      %v1580 = vrot.slane %v1498, %v1579
      %v1581 = vlaneseq
      %v1582 = vshrl.u32 %v1581, 7
      %v1583 = vsub.s32 0, %v1582
      %v1584 = vrot.slane %v1497, %v1583
      %v1585 = vlaneseq
      %v1586 = vshrl.u32 %v1585, 7
      %v1587 = vsub.s32 0, %v1586
      %v1588 = vrot.slane %v1499, %v1587
      %v1589 = vlaneseq
      %v1590 = vshrl.u32 %v1589, 7
      %v1591 = vsub.s32 0, %v1590
      %v1592 = vrot.slane %v1507, %v1591
      %v1593 = vlaneseq
      %v1594 = vshrl.u32 %v1593, 7
      %v1595 = vsub.s32 0, %v1594
      %v1596 = vrot.slane %v1515, %v1595
      %v1597 = vlaneseq
      %v1598 = vshrl.u32 %v1597, 7
      %v1599 = vsub.s32 0, %v1598
      %v1600 = vrot.slane %v1514, %v1599
      %v1601 = vlaneseq
      %v1602 = vshrl.u32 %v1601, 7
      %v1603 = vsub.s32 0, %v1602
      %v1604 = vrot.slane %v1516, %v1603
      %v1605 = vlaneseq
      %v1606 = vshrl.u32 %v1605, 7
      %v1607 = vsub.s32 0, %v1606
      %v1608 = vrot.slane %v1524, %v1607
      %v1609 = vlaneseq
      %v1610 = vshrl.u32 %v1609, 7
      %v1611 = vsub.s32 0, %v1610
      %v1612 = vrot.slane %v1532, %v1611
      %v1613 = vlaneseq
      %v1614 = vshrl.u32 %v1613, 7
      %v1615 = vsub.s32 0, %v1614
      %v1616 = vrot.slane %v1531, %v1615
      %v1617 = vlaneseq
      %v1618 = vshrl.u32 %v1617, 7
      %v1619 = vsub.s32 0, %v1618
      %v1620 = vrot.slane %v1533, %v1619
      %vm1621 = vcmask 1041409
      %v1622 = vsel %vm1621, %v1564, %v1560
      %vm1623 = vcmask 1042434
      %v1624 = vsel %vm1623, %v1568, %v1622
      %vm1625 = vcmask 1043459
      %v1626 = vsel %vm1625, %v1572, %v1624
      %vm1627 = vcmask 1044484
      %v1628 = vsel %vm1627, %v1576, %v1626
      %vm1629 = vcmask 1045509
      %v1630 = vsel %vm1629, %v1580, %v1628
      %vm1631 = vcmask 1046534
      %v1632 = vsel %vm1631, %v1584, %v1630
      %vm1633 = vcmask 1047559
      %v1634 = vsel %vm1633, %v1588, %v1632
      %v1635 = vsel %vm1621, %v1596, %v1592
      %v1636 = vsel %vm1623, %v1600, %v1635
      %v1637 = vsel %vm1625, %v1604, %v1636
      %v1638 = vsel %vm1627, %v1608, %v1637
      %v1639 = vsel %vm1629, %v1612, %v1638
      %v1640 = vsel %vm1631, %v1616, %v1639
      %v1641 = vsel %vm1633, %v1620, %v1640
      %v1644 = vadd.f32 %v1634, %v1641
      %v1645 = vrot.slane %v1644, 4
      %v1646 = vadd.f32 %v1644, %v1645
      %v1647 = vrot.slane %v1646, 2
      %v1648 = vadd.f32 %v1646, %v1647
      %v1649 = vrot.slane %v1648, 1
      %v1650 = vadd.f32 %v1648, %v1649
      %v1651 = vadd.f32 %v1556, %v1650
      %1652 = vst [vmem:[%s5] sm:$0x1] %v1651
      %v1653 = vld [vmem:[%s6] sm:$0x1]
      %v1654 = vmul.f32 %v1473, %v1473
      %v1655 = vmul.f32 %v1481, %v1481
      %v1656 = vmul.f32 %v1480, %v1480
      %v1657 = vmul.f32 %v1482, %v1482
      %v1658 = vmul.f32 %v1490, %v1490
      %v1659 = vmul.f32 %v1498, %v1498
      %v1660 = vmul.f32 %v1497, %v1497
      %v1661 = vmul.f32 %v1499, %v1499
      %v1662 = vmul.f32 %v1507, %v1507
      %v1663 = vmul.f32 %v1515, %v1515
      %v1664 = vmul.f32 %v1514, %v1514
      %v1665 = vmul.f32 %v1516, %v1516
      %v1666 = vmul.f32 %v1524, %v1524
      %v1667 = vmul.f32 %v1532, %v1532
      %v1668 = vmul.f32 %v1531, %v1531
      %v1669 = vmul.f32 %v1533, %v1533
      %v1686 = vlaneseq
      %v1687 = vshrl.u32 %v1686, 7
      %v1688 = vsub.s32 0, %v1687
      %v1689 = vrot.slane %v1654, %v1688
      %v1690 = vlaneseq
      %v1691 = vshrl.u32 %v1690, 7
      %v1692 = vsub.s32 0, %v1691
      %v1693 = vrot.slane %v1655, %v1692
      %v1694 = vlaneseq
      %v1695 = vshrl.u32 %v1694, 7
      %v1696 = vsub.s32 0, %v1695
      %v1697 = vrot.slane %v1656, %v1696
      %v1698 = vlaneseq
      %v1699 = vshrl.u32 %v1698, 7
      %v1700 = vsub.s32 0, %v1699
      %v1701 = vrot.slane %v1657, %v1700
      %v1702 = vlaneseq
      %v1703 = vshrl.u32 %v1702, 7
      %v1704 = vsub.s32 0, %v1703
      %v1705 = vrot.slane %v1658, %v1704
      %v1706 = vlaneseq
      %v1707 = vshrl.u32 %v1706, 7
      %v1708 = vsub.s32 0, %v1707
      %v1709 = vrot.slane %v1659, %v1708
      %v1710 = vlaneseq
      %v1711 = vshrl.u32 %v1710, 7
      %v1712 = vsub.s32 0, %v1711
      %v1713 = vrot.slane %v1660, %v1712
      %v1714 = vlaneseq
      %v1715 = vshrl.u32 %v1714, 7
      %v1716 = vsub.s32 0, %v1715
      %v1717 = vrot.slane %v1661, %v1716
      %v1718 = vlaneseq
      %v1719 = vshrl.u32 %v1718, 7
      %v1720 = vsub.s32 0, %v1719
      %v1721 = vrot.slane %v1662, %v1720
      %v1722 = vlaneseq
      %v1723 = vshrl.u32 %v1722, 7
      %v1724 = vsub.s32 0, %v1723
      %v1725 = vrot.slane %v1663, %v1724
      %v1726 = vlaneseq
      %v1727 = vshrl.u32 %v1726, 7
      %v1728 = vsub.s32 0, %v1727
      %v1729 = vrot.slane %v1664, %v1728
      %v1730 = vlaneseq
      %v1731 = vshrl.u32 %v1730, 7
      %v1732 = vsub.s32 0, %v1731
      %v1733 = vrot.slane %v1665, %v1732
      %v1734 = vlaneseq
      %v1735 = vshrl.u32 %v1734, 7
      %v1736 = vsub.s32 0, %v1735
      %v1737 = vrot.slane %v1666, %v1736
      %v1738 = vlaneseq
      %v1739 = vshrl.u32 %v1738, 7
      %v1740 = vsub.s32 0, %v1739
      %v1741 = vrot.slane %v1667, %v1740
      %v1742 = vlaneseq
      %v1743 = vshrl.u32 %v1742, 7
      %v1744 = vsub.s32 0, %v1743
      %v1745 = vrot.slane %v1668, %v1744
      %v1746 = vlaneseq
      %v1747 = vshrl.u32 %v1746, 7
      %v1748 = vsub.s32 0, %v1747
      %v1749 = vrot.slane %v1669, %v1748
      %v1750 = vsel %vm1621, %v1693, %v1689
      %v1751 = vsel %vm1623, %v1697, %v1750
      %v1752 = vsel %vm1625, %v1701, %v1751
      %v1753 = vsel %vm1627, %v1705, %v1752
      %v1754 = vsel %vm1629, %v1709, %v1753
      %v1755 = vsel %vm1631, %v1713, %v1754
      %v1756 = vsel %vm1633, %v1717, %v1755
      %v1757 = vsel %vm1621, %v1725, %v1721
      %v1758 = vsel %vm1623, %v1729, %v1757
      %v1759 = vsel %vm1625, %v1733, %v1758
      %v1760 = vsel %vm1627, %v1737, %v1759
      %v1761 = vsel %vm1629, %v1741, %v1760
      %v1762 = vsel %vm1631, %v1745, %v1761
      %v1763 = vsel %vm1633, %v1749, %v1762
      %v1766 = vadd.f32 %v1756, %v1763
      %v1767 = vrot.slane %v1766, 4
      %v1768 = vadd.f32 %v1766, %v1767
      %v1769 = vrot.slane %v1768, 2
      %v1770 = vadd.f32 %v1768, %v1769
      %v1771 = vrot.slane %v1770, 1
      %v1772 = vadd.f32 %v1770, %v1771
      %v1773 = vadd.f32 %v1653, %v1772
      %1774 = vst [vmem:[%s6] sm:$0x1] %v1773
      %v1775 = vsel %vm1621, %v1580, %v1576
      %v1776 = vsel %vm1623, %v1584, %v1775
      %v1777 = vsel %vm1625, %v1588, %v1776
      %v1778 = vsel %vm1621, %v1612, %v1608
      %v1779 = vsel %vm1623, %v1616, %v1778
      %v1780 = vsel %vm1625, %v1620, %v1779
      %1785 = vst [vmem:[%s246] sm:$0xf] %v1626
      %1786 = vst [vmem:[%s246 + $0x4] sm:$0xf] %v1777
      %1787 = vst [vmem:[%s246 + $0x8] sm:$0xf] %v1637
      %1788 = vst [vmem:[%s246 + $0xc] sm:$0xf] %v1780
      %p1789 = scmp.lt.s32.totalorder %s18, 1
      %s1790 = scalar_select %p1789, %s18, 1
      %s1791 = smul.addr %s1790, 4
      %s1792 = smul.addr %s1791, 4
      %s1793 = scalar_lea.vmem %s4, %s1792
      // Predicated region
      $region41: #{bottleneck_forward.5} parent=35 // pred_check
        %p1794 = pneg %p125
      $region42: #{bottleneck_forward.5} parent=35 // pred_check_branch
        %1796 = sbr.rel (%p1794) target = $region44
      $region43: #{bottleneck_forward.5} parent=35 // pred_region
        _
      $region44: #{bottleneck_forward.5} parent=35 // pred_fallthru
        _
      // Predicated region
      $region45: #{bottleneck_forward.5} parent=35 // pred_check
        %p1797 = pneg %p146
      $region46: #{bottleneck_forward.5} parent=35 // pred_check_branch
        %1799 = sbr.rel (%p1797) target = $region48
      $region47: #{bottleneck_forward.5} parent=35 // pred_region
        _
      $region48: #{bottleneck_forward.5} parent=35 // pred_fallthru
        _
      // Predicated region
      $region49: #{bottleneck_forward.5} parent=35 // pred_check
        %p1800 = pneg %p167
      $region50: #{bottleneck_forward.5} parent=35 // pred_check_branch
        %1802 = sbr.rel (%p1800) target = $region52
      $region51: #{bottleneck_forward.5} parent=35 // pred_region
        _
      $region52: #{bottleneck_forward.5} parent=35 // pred_fallthru
        _
      // Predicated region
      $region53: #{bottleneck_forward.5} parent=35 // pred_check
        %p1803 = pneg %p146
      $region54: #{bottleneck_forward.5} parent=35 // pred_check_branch
        %1805 = sbr.rel (%p1803) target = $region56
      $region55: #{bottleneck_forward.5} parent=35 // pred_region
        _
      $region56: #{bottleneck_forward.5} parent=35 // pred_fallthru
        _
      // Predicated region
      $region57: #{bottleneck_forward.5} parent=35 // pred_check
        %p1806 = pneg %p167
      $region58: #{bottleneck_forward.5} parent=35 // pred_check_branch
        %1808 = sbr.rel (%p1806) target = $region60
      $region59: #{bottleneck_forward.5} parent=35 // pred_region
        _
      $region60: #{bottleneck_forward.5} parent=35 // pred_fallthru
        _
    $region36: #{bottleneck_forward.5} parent=5 // pred_fallthru
      _
    %p1809 = scmp.le.s32.totalorder 2, %s13
    // Predicated region
    $region61: #{bottleneck_forward.5} parent=5 // pred_check
      %p1810 = pneg %p1809
    $region62: #{bottleneck_forward.5} parent=5 // pred_check_branch
      %1812 = sbr.rel (%p1810) target = $region64
    $region63: #{bottleneck_forward.5} parent=5 // pred_region
      %s1813 = ssub.s32 %s13, 2
      // Predicated region
      $region65: #{bottleneck_forward.5} parent=63 // pred_check
        %p1814 = pneg %p131
      $region66: #{bottleneck_forward.5} parent=63 // pred_check_branch
        %1816 = sbr.rel (%p1814) target = $region68
      $region67: #{bottleneck_forward.5} parent=63 // pred_region
        %p1817 = scmp.lt.s32.totalorder %s19, 1
        %s1818 = scalar_select %p1817, %s19, 1
        %s1819 = smul.addr %s1818, 4
        %s1820 = smul.addr %s1819, 4
        %s1821 = scalar_lea.vmem %s4, %s1820
      $region68: #{bottleneck_forward.5} parent=63 // pred_fallthru
        _
    $region64: #{bottleneck_forward.5} parent=5 // pred_fallthru
      _
  $region6: #{bottleneck_forward.5} parent=0 // loop_footer
    %s17 = sadd.s32 1, %s13
  $region7: #{bottleneck_forward.5} parent=0 // loop_footer_branch
    %12 = sbr.rel target = $region3
  $region8: #{bottleneck_forward.5} parent=0 // loop_exit
    _

</llo_original>
